<compile_context>
chip_gen: v7x
topology: tpu7x:2x2x1
jax: 0.10.0
libtpu: 0.0.40
codegen_flags: <defaults>
</compile_context>

<pallas_src>
import functools

import jax
import jax.numpy as jnp
from jax import lax
from jax.experimental import pallas as pl
from jax.experimental.pallas import tpu as pltpu


def _resblock_kernel(x_ref, w1_ref, b1_ref, w2_ref, b2_ref,
                     o_ref, xext_ref, midext_ref, *, H, W, pad):
    """One image per grid step, channels-first flattened-spatial layout.

    x_ref     : (1, Cin, H*W)      input image (also the residual), f32
    w1_ref    : (3, 3, Cout, Cin)  conv1 weights (BN1 scale folded in), compute dtype
    b1_ref    : (Cout, 1)          folded BN1 bias, f32
    w2_ref    : (3, 3, Cout, Cout) conv2 weights (BN2 scale folded in)
    b2_ref    : (Cout, 1)          folded BN2 bias, f32
    o_ref     : (1, Cout, H*W)
    xext_ref  : (Cin,  pad + H*W + pad) VMEM scratch, zero-halo'd input
    midext_ref: (Cout, pad + H*W + pad) VMEM scratch, zero-halo'd relu(bn1(conv1))
    """
    HW = H * W
    Cin = x_ref.shape[1]
    Cout = o_ref.shape[1]
    cdt = xext_ref.dtype  # compute dtype for the MXU path (bf16 or f32)

    # Zero only the halo strips (`pad` is a multiple of 128 -> lane-aligned
    # stores).  The interiors are fully overwritten below.  Re-zeroed every
    # grid step on purpose: with "parallel" megacore sharding each core owns
    # its own scratch and may never see program_id == 0.
    xext_ref[:, :pad] = jnp.zeros((Cin, pad), cdt)
    xext_ref[:, pad + HW:] = jnp.zeros((Cin, pad), cdt)
    midext_ref[:, :pad] = jnp.zeros((Cout, pad), cdt)
    midext_ref[:, pad + HW:] = jnp.zeros((Cout, pad), cdt)

    x = x_ref[0]                                  # (Cin, HW), f32
    xext_ref[:, pad:pad + HW] = x.astype(cdt)     # lane-aligned interior store

    # Column masks for the horizontal taps: a flat lane shift of +/-1 must not
    # pull pixels across a row boundary.  (Vertical out-of-range taps land in
    # the zero halo and need no mask.)
    col = lax.broadcasted_iota(jnp.int32, (1, HW), 1) % W
    not_left = col != 0          # valid output lanes for the dw = -1 taps
    not_right = col != W - 1     # valid output lanes for the dw = +1 taps

    def conv3x3(src_ref, w_ref):
        # out[co, f] = sum_{kh,kw,ci} w[kh,kw,co,ci] * src[ci, f + (kh-1)*W + (kw-1)]
        acc = jnp.zeros((Cout, HW), jnp.float32)
        for kh in range(3):
            for kw in range(3):
                off = pad + (kh - 1) * W + (kw - 1)
                patch = src_ref[:, off:off + HW]   # lane-shifted view, no reshape
                if kw == 0:
                    patch = jnp.where(not_left, patch, 0)
                elif kw == 2:
                    patch = jnp.where(not_right, patch, 0)
                acc = acc + jnp.dot(w_ref[kh, kw], patch,
                                    preferred_element_type=jnp.float32)
        return acc

    # conv1 (BN1 scale folded into w1) -> + bn1 bias -> relu  (f32 elementwise)
    out1 = jnp.maximum(conv3x3(xext_ref, w1_ref) + b1_ref[...], 0.0)
    midext_ref[:, pad:pad + HW] = out1.astype(cdt)

    # conv2 (BN2 scale folded into w2) -> + bn2 bias -> + identity residual -> relu
    out2 = conv3x3(midext_ref, w2_ref) + b2_ref[...]
    o_ref[0] = jnp.maximum(out2 + x.astype(jnp.float32), 0.0).astype(o_ref.dtype)


def _fold_bn(gamma, beta, mean, var, eps):
    """Eval-mode BN -> per-channel (scale, bias)."""
    s = gamma / jnp.sqrt(var + eps)
    b = beta - mean * s
    return s.astype(jnp.float32), b.astype(jnp.float32)


def _build_resblock_call(N, H, W, Cin, Cout, out_dtype, compute_dtype, pad,
                         buffered_weights):
    HW = H * W
    const4 = lambda n: (0, 0, 0, 0)
    const2 = lambda n: (0, 0)
    # Constant-index blocks don't need double buffering.
    wkw = dict(pipeline_mode=pl.Buffered(1)) if buffered_weights else {}

    in_specs = [
        pl.BlockSpec((1, Cin, HW), lambda n: (n, 0, 0)),
        pl.BlockSpec((3, 3, Cout, Cin), const4, **wkw),
        pl.BlockSpec((Cout, 1), const2, **wkw),
        pl.BlockSpec((3, 3, Cout, Cout), const4, **wkw),
        pl.BlockSpec((Cout, 1), const2, **wkw),
    ]
    out_specs = pl.BlockSpec((1, Cout, HW), lambda n: (n, 0, 0))
    scratch_shapes = [
        pltpu.VMEM((Cin, HW + 2 * pad), compute_dtype),
        pltpu.VMEM((Cout, HW + 2 * pad), compute_dtype),
    ]
    kernel = functools.partial(_resblock_kernel, H=H, W=W, pad=pad)
    return pl.pallas_call(
        kernel,
        out_shape=jax.ShapeDtypeStruct((N, Cout, HW), out_dtype),
        grid=(N,),
        in_specs=in_specs,
        out_specs=out_specs,
        scratch_shapes=scratch_shapes,
        compiler_params=pltpu.CompilerParams(
            dimension_semantics=("parallel",),
            vmem_limit_bytes=32 * 1024 * 1024),
    )


def resblock_forward(x_nchw, w1_oihw, bn1, w2_oihw, bn2, *,
                     eps=1e-5, compute_dtype=jnp.bfloat16):
    """ResBlock forward (stride=1, downsample=None branch), PyTorch layouts.

    x_nchw : (N, Cin, H, W)
    w*_oihw: (Cout, Cin, 3, 3)
    bn*    : (gamma, beta, running_mean, running_var), each (C,)
    """
    N, Cin, H, W = x_nchw.shape
    Cout = w1_oihw.shape[0]
    if Cin != Cout:
        raise ValueError("identity residual requires inplanes == planes")
    HW = H * W
    pad = ((W + 1 + 127) // 128) * 128   # lane halo, multiple of 128, >= W+1

    s1, b1 = _fold_bn(*bn1, eps)
    s2, b2 = _fold_bn(*bn2, eps)

    # Fold the per-output-channel BN scale into the conv weights (conv is
    # linear), then (Cout, Cin, kh, kw) -> (kh, kw, Cout, Cin) and cast the MXU
    # operands once here.
    w1s = w1_oihw.astype(jnp.float32) * s1[:, None, None, None]
    w2s = w2_oihw.astype(jnp.float32) * s2[:, None, None, None]
    w1 = jnp.transpose(w1s, (2, 3, 0, 1)).astype(compute_dtype)
    w2 = jnp.transpose(w2s, (2, 3, 0, 1)).astype(compute_dtype)
    b1 = b1.reshape(Cout, 1)
    b2 = b2.reshape(Cout, 1)

    x_flat = x_nchw.reshape(N, Cin, HW)  # free: NCHW is already contiguous

    args = (x_flat, w1, b1, w2, b2)
    try:
        out = _build_resblock_call(N, H, W, Cin, Cout, x_nchw.dtype,
                                   compute_dtype, pad, True)(*args)
    except Exception:
        # Fallback if pl.Buffered(1) pipeline hints are unsupported.
        out = _build_resblock_call(N, H, W, Cin, Cout, x_nchw.dtype,
                                   compute_dtype, pad, False)(*args)
    return out.reshape(N, Cout, H, W)


# ----------------------------- pure-JAX reference ---------------------------

def _resblock_ref(x, w1, bn1, w2, bn2, eps=1e-5):
    def conv(v, w):
        return lax.conv_general_dilated(
            v, w, window_strides=(1, 1), padding=((1, 1), (1, 1)),
            dimension_numbers=("NCHW", "OIHW", "NCHW"))

    def bn(o, p):
        g, b, m, v = (t.reshape(1, -1, 1, 1) for t in p)
        return (o - m) / jnp.sqrt(v + eps) * g + b

    out = jnp.maximum(bn(conv(x, w1), bn1), 0.0)
    out = bn(conv(out, w2), bn2)
    return jnp.maximum(out + x, 0.0)


if __name__ == "__main__":
    N, C, H, W = 2, 4, 16, 16     # inplanes == planes, stride=1, no downsample
    key = jax.random.PRNGKey(0)
    ks = jax.random.split(key, 11)

    x = jax.random.normal(ks[0], (N, C, H, W), jnp.float32)
    w1 = jax.random.normal(ks[1], (C, C, 3, 3), jnp.float32) * 0.1   # OIHW
    w2 = jax.random.normal(ks[2], (C, C, 3, 3), jnp.float32) * 0.1
    bn1 = (jax.random.uniform(ks[3], (C,), jnp.float32, 0.5, 1.5),
           jax.random.normal(ks[4], (C,), jnp.float32) * 0.1,
           jax.random.normal(ks[5], (C,), jnp.float32) * 0.1,
           jax.random.uniform(ks[6], (C,), jnp.float32, 0.5, 1.5))
    bn2 = (jax.random.uniform(ks[7], (C,), jnp.float32, 0.5, 1.5),
           jax.random.normal(ks[8], (C,), jnp.float32) * 0.1,
           jax.random.normal(ks[9], (C,), jnp.float32) * 0.1,
           jax.random.uniform(ks[10], (C,), jnp.float32, 0.5, 1.5))

    ref = _resblock_ref(x, w1, bn1, w2, bn2)

    # f32 MXU path: tight check against the f32 XLA reference.
    out_f32 = jax.block_until_ready(
        resblock_forward(x, w1, bn1, w2, bn2, compute_dtype=jnp.float32))
    assert out_f32.shape == (N, C, H, W)
    assert jnp.max(jnp.abs(out_f32 - ref)) < 1e-4, "f32 kernel mismatch"

    # bf16 MXU path (default perf configuration for v6e/v7x).
    out_bf16 = jax.block_until_ready(resblock_forward(x, w1, bn1, w2, bn2))
    assert out_bf16.shape == (N, C, H, W)
    assert jnp.max(jnp.abs(out_bf16 - ref)) < 1e-1, "bf16 kernel mismatch"

    print("KERNEL_OK")
</pallas_src>

<mosaic_0001>
module attributes {stable_mosaic.version = 11 : i64} {
  func.func @_resblock_kernel(%arg0: i32, %arg1: memref<1x4x256xf32, #tpu.memory_space<vmem>>, %arg2: memref<3x3x4x4xf32, #tpu.memory_space<vmem>>, %arg3: memref<4x1xf32, #tpu.memory_space<vmem>>, %arg4: memref<3x3x4x4xf32, #tpu.memory_space<vmem>>, %arg5: memref<4x1xf32, #tpu.memory_space<vmem>>, %arg6: memref<1x4x256xf32, #tpu.memory_space<vmem>>, %arg7: memref<4x512xf32, #tpu.memory_space<vmem>>, %arg8: memref<4x512xf32, #tpu.memory_space<vmem>>) attributes {dimension_semantics = [#tpu.dimension_semantics<parallel>], iteration_bounds = array<i64: 2>, scalar_prefetch = 0 : i64, scratch_operands = 2 : i64, tpu.core_type = #tpu.core_type<tc>, window_params = [{transform_indices = @transform_0, window_bounds = array<i64: 1, 4, 256>}, {pipeline_mode = #tpu.pipeline_mode<synchronous>, transform_indices = @transform_1, window_bounds = array<i64: 3, 3, 4, 4>}, {pipeline_mode = #tpu.pipeline_mode<synchronous>, transform_indices = @transform_2, window_bounds = array<i64: 4, 1>}, {pipeline_mode = #tpu.pipeline_mode<synchronous>, transform_indices = @transform_3, window_bounds = array<i64: 3, 3, 4, 4>}, {pipeline_mode = #tpu.pipeline_mode<synchronous>, transform_indices = @transform_4, window_bounds = array<i64: 4, 1>}, {transform_indices = @transform_5, window_bounds = array<i64: 1, 4, 256>}]} {
    %cst = arith.constant 0.000000e+00 : f32
    %0 = vector.broadcast %cst : f32 to vector<4x128xf32>
    %c0 = arith.constant 0 : index
    %c0_0 = arith.constant 0 : index
    %1 = vector.load %arg7[%c0, %c0_0] : memref<4x512xf32, #tpu.memory_space<vmem>>, vector<4x128xf32>
    tpu.vector_store %arg7[%c0, %c0_0], %0 {strides = array<i32>} : memref<4x512xf32, #tpu.memory_space<vmem>>, vector<4x128xf32>,
    %cst_1 = arith.constant 0.000000e+00 : f32
    %2 = vector.broadcast %cst_1 : f32 to vector<4x128xf32>
    %c0_2 = arith.constant 0 : index
    %c384 = arith.constant 384 : index
    %3 = vector.load %arg7[%c0_2, %c384] : memref<4x512xf32, #tpu.memory_space<vmem>>, vector<4x128xf32>
    tpu.vector_store %arg7[%c0_2, %c384], %2 {strides = array<i32>} : memref<4x512xf32, #tpu.memory_space<vmem>>, vector<4x128xf32>,
    %cst_3 = arith.constant 0.000000e+00 : f32
    %4 = vector.broadcast %cst_3 : f32 to vector<4x128xf32>
    %c0_4 = arith.constant 0 : index
    %c0_5 = arith.constant 0 : index
    %5 = vector.load %arg8[%c0_4, %c0_5] : memref<4x512xf32, #tpu.memory_space<vmem>>, vector<4x128xf32>
    tpu.vector_store %arg8[%c0_4, %c0_5], %4 {strides = array<i32>} : memref<4x512xf32, #tpu.memory_space<vmem>>, vector<4x128xf32>,
    %cst_6 = arith.constant 0.000000e+00 : f32
    %6 = vector.broadcast %cst_6 : f32 to vector<4x128xf32>
    %c0_7 = arith.constant 0 : index
    %c384_8 = arith.constant 384 : index
    %7 = vector.load %arg8[%c0_7, %c384_8] : memref<4x512xf32, #tpu.memory_space<vmem>>, vector<4x128xf32>
    tpu.vector_store %arg8[%c0_7, %c384_8], %6 {strides = array<i32>} : memref<4x512xf32, #tpu.memory_space<vmem>>, vector<4x128xf32>,
    %c0_9 = arith.constant 0 : index
    %c0_10 = arith.constant 0 : index
    %c0_11 = arith.constant 0 : index
    %8 = vector.load %arg1[%c0_9, %c0_10, %c0_11] : memref<1x4x256xf32, #tpu.memory_space<vmem>>, vector<1x4x256xf32>
    %9 = vector.shape_cast %8 : vector<1x4x256xf32> to vector<4x256xf32>
    %c0_12 = arith.constant 0 : index
    %c128 = arith.constant 128 : index
    %10 = vector.load %arg7[%c0_12, %c128] : memref<4x512xf32, #tpu.memory_space<vmem>>, vector<4x256xf32>
    tpu.vector_store %arg7[%c0_12, %c128], %9 {strides = array<i32>} : memref<4x512xf32, #tpu.memory_space<vmem>>, vector<4x256xf32>,
    %11 = tpu.iota {dimensions = array<i32: 1>} : vector<1x256xi32>
    %c16_i32 = arith.constant 16 : i32
    %c0_i32 = arith.constant 0 : i32
    %12 = arith.cmpi eq, %c16_i32, %c0_i32 : i32
    %c1_i32 = arith.constant 1 : i32
    %13 = arith.select %12, %c1_i32, %c16_i32 : i32
    %14 = vector.broadcast %13 : i32 to vector<1x256xi32>
    %15 = arith.remsi %11, %14 : vector<1x256xi32>
    %c0_i32_13 = arith.constant 0 : i32
    %16 = vector.broadcast %c0_i32_13 : i32 to vector<1x256xi32>
    %17 = arith.cmpi ne, %15, %16 : vector<1x256xi32>
    %c0_i32_14 = arith.constant 0 : i32
    %18 = vector.broadcast %c0_i32_14 : i32 to vector<1x256xi32>
    %19 = arith.cmpi slt, %15, %18 : vector<1x256xi32>
    %c0_i32_15 = arith.constant 0 : i32
    %20 = arith.cmpi slt, %13, %c0_i32_15 : i32
    %21 = vector.broadcast %20 : i1 to vector<1x256xi1>
    %22 = vector.broadcast %21 : vector<1x256xi1> to vector<1x256xi1>
    %23 = arith.xori %19, %22 : vector<1x256xi1>
    %24 = arith.andi %23, %17 : vector<1x256xi1>
    %25 = vector.broadcast %13 : i32 to vector<1x256xi32>
    %26 = arith.addi %15, %25 : vector<1x256xi32>
    %27 = arith.select %24, %26, %15 : vector<1x256xi1>, vector<1x256xi32>
    %c0_i32_16 = arith.constant 0 : i32
    %28 = vector.broadcast %c0_i32_16 : i32 to vector<1x256xi32>
    %29 = arith.cmpi ne, %27, %28 : vector<1x256xi32>
    %c15_i32 = arith.constant 15 : i32
    %30 = vector.broadcast %c15_i32 : i32 to vector<1x256xi32>
    %31 = arith.cmpi ne, %27, %30 : vector<1x256xi32>
    %cst_17 = arith.constant 0.000000e+00 : f32
    %32 = vector.broadcast %cst_17 : f32 to vector<4x256xf32>
    %c0_18 = arith.constant 0 : index
    %c111 = arith.constant 111 : index
    %33 = vector.load %arg7[%c0_18, %c111] : memref<4x512xf32, #tpu.memory_space<vmem>>, vector<4x256xf32>
    %c0_i32_19 = arith.constant 0 : i32
    %34 = arith.sitofp %c0_i32_19 : i32 to f32
    %35 = vector.shape_cast %29 : vector<1x256xi1> to vector<1x256xi1>
    %36 = vector.broadcast %35 : vector<1x256xi1> to vector<4x256xi1>
    %37 = vector.broadcast %34 : f32 to vector<4x256xf32>
    %38 = arith.select %36, %33, %37 : vector<4x256xi1>, vector<4x256xf32>
    %c0_20 = arith.constant 0 : index
    %c0_21 = arith.constant 0 : index
    %c0_22 = arith.constant 0 : index
    %c0_23 = arith.constant 0 : index
    %39 = vector.load %arg2[%c0_20, %c0_21, %c0_22, %c0_23] : memref<3x3x4x4xf32, #tpu.memory_space<vmem>>, vector<1x1x4x4xf32>
    %40 = vector.shape_cast %39 : vector<1x1x4x4xf32> to vector<4x4xf32>
    %cst_24 = arith.constant dense<0.000000e+00> : vector<4x256xf32>
    %41 = tpu.matmul %40, %38, %cst_24 {dimension_numbers = #tpu.dot_dimension_numbers<[1], [0], [0], [1], [0, 0, 1, 1], [], []>} : vector<4x4xf32>, vector<4x256xf32>, vector<4x256xf32> -> vector<4x256xf32>
    %42 = arith.addf %32, %41 : vector<4x256xf32>
    %c0_25 = arith.constant 0 : index
    %c112 = arith.constant 112 : index
    %43 = vector.load %arg7[%c0_25, %c112] : memref<4x512xf32, #tpu.memory_space<vmem>>, vector<4x256xf32>
    %c0_26 = arith.constant 0 : index
    %c1 = arith.constant 1 : index
    %c0_27 = arith.constant 0 : index
    %c0_28 = arith.constant 0 : index
    %44 = vector.load %arg2[%c0_26, %c1, %c0_27, %c0_28] : memref<3x3x4x4xf32, #tpu.memory_space<vmem>>, vector<1x1x4x4xf32>
    %45 = vector.shape_cast %44 : vector<1x1x4x4xf32> to vector<4x4xf32>
    %cst_29 = arith.constant dense<0.000000e+00> : vector<4x256xf32>
    %46 = tpu.matmul %45, %43, %cst_29 {dimension_numbers = #tpu.dot_dimension_numbers<[1], [0], [0], [1], [0, 0, 1, 1], [], []>} : vector<4x4xf32>, vector<4x256xf32>, vector<4x256xf32> -> vector<4x256xf32>
    %47 = arith.addf %42, %46 : vector<4x256xf32>
    %c0_30 = arith.constant 0 : index
    %c113 = arith.constant 113 : index
    %48 = vector.load %arg7[%c0_30, %c113] : memref<4x512xf32, #tpu.memory_space<vmem>>, vector<4x256xf32>
    %c0_i32_31 = arith.constant 0 : i32
    %49 = arith.sitofp %c0_i32_31 : i32 to f32
    %50 = vector.shape_cast %31 : vector<1x256xi1> to vector<1x256xi1>
    %51 = vector.broadcast %50 : vector<1x256xi1> to vector<4x256xi1>
    %52 = vector.broadcast %49 : f32 to vector<4x256xf32>
    %53 = arith.select %51, %48, %52 : vector<4x256xi1>, vector<4x256xf32>
    %c0_32 = arith.constant 0 : index
    %c2 = arith.constant 2 : index
    %c0_33 = arith.constant 0 : index
    %c0_34 = arith.constant 0 : index
    %54 = vector.load %arg2[%c0_32, %c2, %c0_33, %c0_34] : memref<3x3x4x4xf32, #tpu.memory_space<vmem>>, vector<1x1x4x4xf32>
    %55 = vector.shape_cast %54 : vector<1x1x4x4xf32> to vector<4x4xf32>
    %cst_35 = arith.constant dense<0.000000e+00> : vector<4x256xf32>
    %56 = tpu.matmul %55, %53, %cst_35 {dimension_numbers = #tpu.dot_dimension_numbers<[1], [0], [0], [1], [0, 0, 1, 1], [], []>} : vector<4x4xf32>, vector<4x256xf32>, vector<4x256xf32> -> vector<4x256xf32>
    %57 = arith.addf %47, %56 : vector<4x256xf32>
    %c0_36 = arith.constant 0 : index
    %c127 = arith.constant 127 : index
    %58 = vector.load %arg7[%c0_36, %c127] : memref<4x512xf32, #tpu.memory_space<vmem>>, vector<4x256xf32>
    %c0_i32_37 = arith.constant 0 : i32
    %59 = arith.sitofp %c0_i32_37 : i32 to f32
    %60 = vector.shape_cast %29 : vector<1x256xi1> to vector<1x256xi1>
    %61 = vector.broadcast %60 : vector<1x256xi1> to vector<4x256xi1>
    %62 = vector.broadcast %59 : f32 to vector<4x256xf32>
    %63 = arith.select %61, %58, %62 : vector<4x256xi1>, vector<4x256xf32>
    %c1_38 = arith.constant 1 : index
    %c0_39 = arith.constant 0 : index
    %c0_40 = arith.constant 0 : index
    %c0_41 = arith.constant 0 : index
    %64 = vector.load %arg2[%c1_38, %c0_39, %c0_40, %c0_41] : memref<3x3x4x4xf32, #tpu.memory_space<vmem>>, vector<1x1x4x4xf32>
    %65 = vector.shape_cast %64 : vector<1x1x4x4xf32> to vector<4x4xf32>
    %cst_42 = arith.constant dense<0.000000e+00> : vector<4x256xf32>
    %66 = tpu.matmul %65, %63, %cst_42 {dimension_numbers = #tpu.dot_dimension_numbers<[1], [0], [0], [1], [0, 0, 1, 1], [], []>} : vector<4x4xf32>, vector<4x256xf32>, vector<4x256xf32> -> vector<4x256xf32>
    %67 = arith.addf %57, %66 : vector<4x256xf32>
    %c0_43 = arith.constant 0 : index
    %c128_44 = arith.constant 128 : index
    %68 = vector.load %arg7[%c0_43, %c128_44] : memref<4x512xf32, #tpu.memory_space<vmem>>, vector<4x256xf32>
    %c1_45 = arith.constant 1 : index
    %c1_46 = arith.constant 1 : index
    %c0_47 = arith.constant 0 : index
    %c0_48 = arith.constant 0 : index
    %69 = vector.load %arg2[%c1_45, %c1_46, %c0_47, %c0_48] : memref<3x3x4x4xf32, #tpu.memory_space<vmem>>, vector<1x1x4x4xf32>
    %70 = vector.shape_cast %69 : vector<1x1x4x4xf32> to vector<4x4xf32>
    %cst_49 = arith.constant dense<0.000000e+00> : vector<4x256xf32>
    %71 = tpu.matmul %70, %68, %cst_49 {dimension_numbers = #tpu.dot_dimension_numbers<[1], [0], [0], [1], [0, 0, 1, 1], [], []>} : vector<4x4xf32>, vector<4x256xf32>, vector<4x256xf32> -> vector<4x256xf32>
    %72 = arith.addf %67, %71 : vector<4x256xf32>
    %c0_50 = arith.constant 0 : index
    %c129 = arith.constant 129 : index
    %73 = vector.load %arg7[%c0_50, %c129] : memref<4x512xf32, #tpu.memory_space<vmem>>, vector<4x256xf32>
    %c0_i32_51 = arith.constant 0 : i32
    %74 = arith.sitofp %c0_i32_51 : i32 to f32
    %75 = vector.shape_cast %31 : vector<1x256xi1> to vector<1x256xi1>
    %76 = vector.broadcast %75 : vector<1x256xi1> to vector<4x256xi1>
    %77 = vector.broadcast %74 : f32 to vector<4x256xf32>
    %78 = arith.select %76, %73, %77 : vector<4x256xi1>, vector<4x256xf32>
    %c1_52 = arith.constant 1 : index
    %c2_53 = arith.constant 2 : index
    %c0_54 = arith.constant 0 : index
    %c0_55 = arith.constant 0 : index
    %79 = vector.load %arg2[%c1_52, %c2_53, %c0_54, %c0_55] : memref<3x3x4x4xf32, #tpu.memory_space<vmem>>, vector<1x1x4x4xf32>
    %80 = vector.shape_cast %79 : vector<1x1x4x4xf32> to vector<4x4xf32>
    %cst_56 = arith.constant dense<0.000000e+00> : vector<4x256xf32>
    %81 = tpu.matmul %80, %78, %cst_56 {dimension_numbers = #tpu.dot_dimension_numbers<[1], [0], [0], [1], [0, 0, 1, 1], [], []>} : vector<4x4xf32>, vector<4x256xf32>, vector<4x256xf32> -> vector<4x256xf32>
    %82 = arith.addf %72, %81 : vector<4x256xf32>
    %c0_57 = arith.constant 0 : index
    %c143 = arith.constant 143 : index
    %83 = vector.load %arg7[%c0_57, %c143] : memref<4x512xf32, #tpu.memory_space<vmem>>, vector<4x256xf32>
    %c0_i32_58 = arith.constant 0 : i32
    %84 = arith.sitofp %c0_i32_58 : i32 to f32
    %85 = vector.shape_cast %29 : vector<1x256xi1> to vector<1x256xi1>
    %86 = vector.broadcast %85 : vector<1x256xi1> to vector<4x256xi1>
    %87 = vector.broadcast %84 : f32 to vector<4x256xf32>
    %88 = arith.select %86, %83, %87 : vector<4x256xi1>, vector<4x256xf32>
    %c2_59 = arith.constant 2 : index
    %c0_60 = arith.constant 0 : index
    %c0_61 = arith.constant 0 : index
    %c0_62 = arith.constant 0 : index
    %89 = vector.load %arg2[%c2_59, %c0_60, %c0_61, %c0_62] : memref<3x3x4x4xf32, #tpu.memory_space<vmem>>, vector<1x1x4x4xf32>
    %90 = vector.shape_cast %89 : vector<1x1x4x4xf32> to vector<4x4xf32>
    %cst_63 = arith.constant dense<0.000000e+00> : vector<4x256xf32>
    %91 = tpu.matmul %90, %88, %cst_63 {dimension_numbers = #tpu.dot_dimension_numbers<[1], [0], [0], [1], [0, 0, 1, 1], [], []>} : vector<4x4xf32>, vector<4x256xf32>, vector<4x256xf32> -> vector<4x256xf32>
    %92 = arith.addf %82, %91 : vector<4x256xf32>
    %c0_64 = arith.constant 0 : index
    %c144 = arith.constant 144 : index
    %93 = vector.load %arg7[%c0_64, %c144] : memref<4x512xf32, #tpu.memory_space<vmem>>, vector<4x256xf32>
    %c2_65 = arith.constant 2 : index
    %c1_66 = arith.constant 1 : index
    %c0_67 = arith.constant 0 : index
    %c0_68 = arith.constant 0 : index
    %94 = vector.load %arg2[%c2_65, %c1_66, %c0_67, %c0_68] : memref<3x3x4x4xf32, #tpu.memory_space<vmem>>, vector<1x1x4x4xf32>
    %95 = vector.shape_cast %94 : vector<1x1x4x4xf32> to vector<4x4xf32>
    %cst_69 = arith.constant dense<0.000000e+00> : vector<4x256xf32>
    %96 = tpu.matmul %95, %93, %cst_69 {dimension_numbers = #tpu.dot_dimension_numbers<[1], [0], [0], [1], [0, 0, 1, 1], [], []>} : vector<4x4xf32>, vector<4x256xf32>, vector<4x256xf32> -> vector<4x256xf32>
    %97 = arith.addf %92, %96 : vector<4x256xf32>
    %c0_70 = arith.constant 0 : index
    %c145 = arith.constant 145 : index
    %98 = vector.load %arg7[%c0_70, %c145] : memref<4x512xf32, #tpu.memory_space<vmem>>, vector<4x256xf32>
    %c0_i32_71 = arith.constant 0 : i32
    %99 = arith.sitofp %c0_i32_71 : i32 to f32
    %100 = vector.shape_cast %31 : vector<1x256xi1> to vector<1x256xi1>
    %101 = vector.broadcast %100 : vector<1x256xi1> to vector<4x256xi1>
    %102 = vector.broadcast %99 : f32 to vector<4x256xf32>
    %103 = arith.select %101, %98, %102 : vector<4x256xi1>, vector<4x256xf32>
    %c2_72 = arith.constant 2 : index
    %c2_73 = arith.constant 2 : index
    %c0_74 = arith.constant 0 : index
    %c0_75 = arith.constant 0 : index
    %104 = vector.load %arg2[%c2_72, %c2_73, %c0_74, %c0_75] : memref<3x3x4x4xf32, #tpu.memory_space<vmem>>, vector<1x1x4x4xf32>
    %105 = vector.shape_cast %104 : vector<1x1x4x4xf32> to vector<4x4xf32>
    %cst_76 = arith.constant dense<0.000000e+00> : vector<4x256xf32>
    %106 = tpu.matmul %105, %103, %cst_76 {dimension_numbers = #tpu.dot_dimension_numbers<[1], [0], [0], [1], [0, 0, 1, 1], [], []>} : vector<4x4xf32>, vector<4x256xf32>, vector<4x256xf32> -> vector<4x256xf32>
    %107 = arith.addf %97, %106 : vector<4x256xf32>
    %c0_77 = arith.constant 0 : index
    %c0_78 = arith.constant 0 : index
    %108 = vector.load %arg3[%c0_77, %c0_78] : memref<4x1xf32, #tpu.memory_space<vmem>>, vector<4x1xf32>
    %109 = vector.broadcast %108 : vector<4x1xf32> to vector<4x256xf32>
    %110 = arith.addf %107, %109 : vector<4x256xf32>
    %cst_79 = arith.constant 0.000000e+00 : f32
    %111 = vector.broadcast %cst_79 : f32 to vector<4x256xf32>
    %112 = arith.maximumf %110, %111 : vector<4x256xf32>
    %c0_80 = arith.constant 0 : index
    %c128_81 = arith.constant 128 : index
    %113 = vector.load %arg8[%c0_80, %c128_81] : memref<4x512xf32, #tpu.memory_space<vmem>>, vector<4x256xf32>
    tpu.vector_store %arg8[%c0_80, %c128_81], %112 {strides = array<i32>} : memref<4x512xf32, #tpu.memory_space<vmem>>, vector<4x256xf32>,
    %cst_82 = arith.constant 0.000000e+00 : f32
    %114 = vector.broadcast %cst_82 : f32 to vector<4x256xf32>
    %c0_83 = arith.constant 0 : index
    %c111_84 = arith.constant 111 : index
    %115 = vector.load %arg8[%c0_83, %c111_84] : memref<4x512xf32, #tpu.memory_space<vmem>>, vector<4x256xf32>
    %c0_i32_85 = arith.constant 0 : i32
    %116 = arith.sitofp %c0_i32_85 : i32 to f32
    %117 = vector.shape_cast %29 : vector<1x256xi1> to vector<1x256xi1>
    %118 = vector.broadcast %117 : vector<1x256xi1> to vector<4x256xi1>
    %119 = vector.broadcast %116 : f32 to vector<4x256xf32>
    %120 = arith.select %118, %115, %119 : vector<4x256xi1>, vector<4x256xf32>
    %c0_86 = arith.constant 0 : index
    %c0_87 = arith.constant 0 : index
    %c0_88 = arith.constant 0 : index
    %c0_89 = arith.constant 0 : index
    %121 = vector.load %arg4[%c0_86, %c0_87, %c0_88, %c0_89] : memref<3x3x4x4xf32, #tpu.memory_space<vmem>>, vector<1x1x4x4xf32>
    %122 = vector.shape_cast %121 : vector<1x1x4x4xf32> to vector<4x4xf32>
    %cst_90 = arith.constant dense<0.000000e+00> : vector<4x256xf32>
    %123 = tpu.matmul %122, %120, %cst_90 {dimension_numbers = #tpu.dot_dimension_numbers<[1], [0], [0], [1], [0, 0, 1, 1], [], []>} : vector<4x4xf32>, vector<4x256xf32>, vector<4x256xf32> -> vector<4x256xf32>
    %124 = arith.addf %114, %123 : vector<4x256xf32>
    %c0_91 = arith.constant 0 : index
    %c112_92 = arith.constant 112 : index
    %125 = vector.load %arg8[%c0_91, %c112_92] : memref<4x512xf32, #tpu.memory_space<vmem>>, vector<4x256xf32>
    %c0_93 = arith.constant 0 : index
    %c1_94 = arith.constant 1 : index
    %c0_95 = arith.constant 0 : index
    %c0_96 = arith.constant 0 : index
    %126 = vector.load %arg4[%c0_93, %c1_94, %c0_95, %c0_96] : memref<3x3x4x4xf32, #tpu.memory_space<vmem>>, vector<1x1x4x4xf32>
    %127 = vector.shape_cast %126 : vector<1x1x4x4xf32> to vector<4x4xf32>
    %cst_97 = arith.constant dense<0.000000e+00> : vector<4x256xf32>
    %128 = tpu.matmul %127, %125, %cst_97 {dimension_numbers = #tpu.dot_dimension_numbers<[1], [0], [0], [1], [0, 0, 1, 1], [], []>} : vector<4x4xf32>, vector<4x256xf32>, vector<4x256xf32> -> vector<4x256xf32>
    %129 = arith.addf %124, %128 : vector<4x256xf32>
    %c0_98 = arith.constant 0 : index
    %c113_99 = arith.constant 113 : index
    %130 = vector.load %arg8[%c0_98, %c113_99] : memref<4x512xf32, #tpu.memory_space<vmem>>, vector<4x256xf32>
    %c0_i32_100 = arith.constant 0 : i32
    %131 = arith.sitofp %c0_i32_100 : i32 to f32
    %132 = vector.shape_cast %31 : vector<1x256xi1> to vector<1x256xi1>
    %133 = vector.broadcast %132 : vector<1x256xi1> to vector<4x256xi1>
    %134 = vector.broadcast %131 : f32 to vector<4x256xf32>
    %135 = arith.select %133, %130, %134 : vector<4x256xi1>, vector<4x256xf32>
    %c0_101 = arith.constant 0 : index
    %c2_102 = arith.constant 2 : index
    %c0_103 = arith.constant 0 : index
    %c0_104 = arith.constant 0 : index
    %136 = vector.load %arg4[%c0_101, %c2_102, %c0_103, %c0_104] : memref<3x3x4x4xf32, #tpu.memory_space<vmem>>, vector<1x1x4x4xf32>
    %137 = vector.shape_cast %136 : vector<1x1x4x4xf32> to vector<4x4xf32>
    %cst_105 = arith.constant dense<0.000000e+00> : vector<4x256xf32>
    %138 = tpu.matmul %137, %135, %cst_105 {dimension_numbers = #tpu.dot_dimension_numbers<[1], [0], [0], [1], [0, 0, 1, 1], [], []>} : vector<4x4xf32>, vector<4x256xf32>, vector<4x256xf32> -> vector<4x256xf32>
    %139 = arith.addf %129, %138 : vector<4x256xf32>
    %c0_106 = arith.constant 0 : index
    %c127_107 = arith.constant 127 : index
    %140 = vector.load %arg8[%c0_106, %c127_107] : memref<4x512xf32, #tpu.memory_space<vmem>>, vector<4x256xf32>
    %c0_i32_108 = arith.constant 0 : i32
    %141 = arith.sitofp %c0_i32_108 : i32 to f32
    %142 = vector.shape_cast %29 : vector<1x256xi1> to vector<1x256xi1>
    %143 = vector.broadcast %142 : vector<1x256xi1> to vector<4x256xi1>
    %144 = vector.broadcast %141 : f32 to vector<4x256xf32>
    %145 = arith.select %143, %140, %144 : vector<4x256xi1>, vector<4x256xf32>
    %c1_109 = arith.constant 1 : index
    %c0_110 = arith.constant 0 : index
    %c0_111 = arith.constant 0 : index
    %c0_112 = arith.constant 0 : index
    %146 = vector.load %arg4[%c1_109, %c0_110, %c0_111, %c0_112] : memref<3x3x4x4xf32, #tpu.memory_space<vmem>>, vector<1x1x4x4xf32>
    %147 = vector.shape_cast %146 : vector<1x1x4x4xf32> to vector<4x4xf32>
    %cst_113 = arith.constant dense<0.000000e+00> : vector<4x256xf32>
    %148 = tpu.matmul %147, %145, %cst_113 {dimension_numbers = #tpu.dot_dimension_numbers<[1], [0], [0], [1], [0, 0, 1, 1], [], []>} : vector<4x4xf32>, vector<4x256xf32>, vector<4x256xf32> -> vector<4x256xf32>
    %149 = arith.addf %139, %148 : vector<4x256xf32>
    %c0_114 = arith.constant 0 : index
    %c128_115 = arith.constant 128 : index
    %150 = vector.load %arg8[%c0_114, %c128_115] : memref<4x512xf32, #tpu.memory_space<vmem>>, vector<4x256xf32>
    %c1_116 = arith.constant 1 : index
    %c1_117 = arith.constant 1 : index
    %c0_118 = arith.constant 0 : index
    %c0_119 = arith.constant 0 : index
    %151 = vector.load %arg4[%c1_116, %c1_117, %c0_118, %c0_119] : memref<3x3x4x4xf32, #tpu.memory_space<vmem>>, vector<1x1x4x4xf32>
    %152 = vector.shape_cast %151 : vector<1x1x4x4xf32> to vector<4x4xf32>
    %cst_120 = arith.constant dense<0.000000e+00> : vector<4x256xf32>
    %153 = tpu.matmul %152, %150, %cst_120 {dimension_numbers = #tpu.dot_dimension_numbers<[1], [0], [0], [1], [0, 0, 1, 1], [], []>} : vector<4x4xf32>, vector<4x256xf32>, vector<4x256xf32> -> vector<4x256xf32>
    %154 = arith.addf %149, %153 : vector<4x256xf32>
    %c0_121 = arith.constant 0 : index
    %c129_122 = arith.constant 129 : index
    %155 = vector.load %arg8[%c0_121, %c129_122] : memref<4x512xf32, #tpu.memory_space<vmem>>, vector<4x256xf32>
    %c0_i32_123 = arith.constant 0 : i32
    %156 = arith.sitofp %c0_i32_123 : i32 to f32
    %157 = vector.shape_cast %31 : vector<1x256xi1> to vector<1x256xi1>
    %158 = vector.broadcast %157 : vector<1x256xi1> to vector<4x256xi1>
    %159 = vector.broadcast %156 : f32 to vector<4x256xf32>
    %160 = arith.select %158, %155, %159 : vector<4x256xi1>, vector<4x256xf32>
    %c1_124 = arith.constant 1 : index
    %c2_125 = arith.constant 2 : index
    %c0_126 = arith.constant 0 : index
    %c0_127 = arith.constant 0 : index
    %161 = vector.load %arg4[%c1_124, %c2_125, %c0_126, %c0_127] : memref<3x3x4x4xf32, #tpu.memory_space<vmem>>, vector<1x1x4x4xf32>
    %162 = vector.shape_cast %161 : vector<1x1x4x4xf32> to vector<4x4xf32>
    %cst_128 = arith.constant dense<0.000000e+00> : vector<4x256xf32>
    %163 = tpu.matmul %162, %160, %cst_128 {dimension_numbers = #tpu.dot_dimension_numbers<[1], [0], [0], [1], [0, 0, 1, 1], [], []>} : vector<4x4xf32>, vector<4x256xf32>, vector<4x256xf32> -> vector<4x256xf32>
    %164 = arith.addf %154, %163 : vector<4x256xf32>
    %c0_129 = arith.constant 0 : index
    %c143_130 = arith.constant 143 : index
    %165 = vector.load %arg8[%c0_129, %c143_130] : memref<4x512xf32, #tpu.memory_space<vmem>>, vector<4x256xf32>
    %c0_i32_131 = arith.constant 0 : i32
    %166 = arith.sitofp %c0_i32_131 : i32 to f32
    %167 = vector.shape_cast %29 : vector<1x256xi1> to vector<1x256xi1>
    %168 = vector.broadcast %167 : vector<1x256xi1> to vector<4x256xi1>
    %169 = vector.broadcast %166 : f32 to vector<4x256xf32>
    %170 = arith.select %168, %165, %169 : vector<4x256xi1>, vector<4x256xf32>
    %c2_132 = arith.constant 2 : index
    %c0_133 = arith.constant 0 : index
    %c0_134 = arith.constant 0 : index
    %c0_135 = arith.constant 0 : index
    %171 = vector.load %arg4[%c2_132, %c0_133, %c0_134, %c0_135] : memref<3x3x4x4xf32, #tpu.memory_space<vmem>>, vector<1x1x4x4xf32>
    %172 = vector.shape_cast %171 : vector<1x1x4x4xf32> to vector<4x4xf32>
    %cst_136 = arith.constant dense<0.000000e+00> : vector<4x256xf32>
    %173 = tpu.matmul %172, %170, %cst_136 {dimension_numbers = #tpu.dot_dimension_numbers<[1], [0], [0], [1], [0, 0, 1, 1], [], []>} : vector<4x4xf32>, vector<4x256xf32>, vector<4x256xf32> -> vector<4x256xf32>
    %174 = arith.addf %164, %173 : vector<4x256xf32>
    %c0_137 = arith.constant 0 : index
    %c144_138 = arith.constant 144 : index
    %175 = vector.load %arg8[%c0_137, %c144_138] : memref<4x512xf32, #tpu.memory_space<vmem>>, vector<4x256xf32>
    %c2_139 = arith.constant 2 : index
    %c1_140 = arith.constant 1 : index
    %c0_141 = arith.constant 0 : index
    %c0_142 = arith.constant 0 : index
    %176 = vector.load %arg4[%c2_139, %c1_140, %c0_141, %c0_142] : memref<3x3x4x4xf32, #tpu.memory_space<vmem>>, vector<1x1x4x4xf32>
    %177 = vector.shape_cast %176 : vector<1x1x4x4xf32> to vector<4x4xf32>
    %cst_143 = arith.constant dense<0.000000e+00> : vector<4x256xf32>
    %178 = tpu.matmul %177, %175, %cst_143 {dimension_numbers = #tpu.dot_dimension_numbers<[1], [0], [0], [1], [0, 0, 1, 1], [], []>} : vector<4x4xf32>, vector<4x256xf32>, vector<4x256xf32> -> vector<4x256xf32>
    %179 = arith.addf %174, %178 : vector<4x256xf32>
    %c0_144 = arith.constant 0 : index
    %c145_145 = arith.constant 145 : index
    %180 = vector.load %arg8[%c0_144, %c145_145] : memref<4x512xf32, #tpu.memory_space<vmem>>, vector<4x256xf32>
    %c0_i32_146 = arith.constant 0 : i32
    %181 = arith.sitofp %c0_i32_146 : i32 to f32
    %182 = vector.shape_cast %31 : vector<1x256xi1> to vector<1x256xi1>
    %183 = vector.broadcast %182 : vector<1x256xi1> to vector<4x256xi1>
    %184 = vector.broadcast %181 : f32 to vector<4x256xf32>
    %185 = arith.select %183, %180, %184 : vector<4x256xi1>, vector<4x256xf32>
    %c2_147 = arith.constant 2 : index
    %c2_148 = arith.constant 2 : index
    %c0_149 = arith.constant 0 : index
    %c0_150 = arith.constant 0 : index
    %186 = vector.load %arg4[%c2_147, %c2_148, %c0_149, %c0_150] : memref<3x3x4x4xf32, #tpu.memory_space<vmem>>, vector<1x1x4x4xf32>
    %187 = vector.shape_cast %186 : vector<1x1x4x4xf32> to vector<4x4xf32>
    %cst_151 = arith.constant dense<0.000000e+00> : vector<4x256xf32>
    %188 = tpu.matmul %187, %185, %cst_151 {dimension_numbers = #tpu.dot_dimension_numbers<[1], [0], [0], [1], [0, 0, 1, 1], [], []>} : vector<4x4xf32>, vector<4x256xf32>, vector<4x256xf32> -> vector<4x256xf32>
    %189 = arith.addf %179, %188 : vector<4x256xf32>
    %c0_152 = arith.constant 0 : index
    %c0_153 = arith.constant 0 : index
    %190 = vector.load %arg5[%c0_152, %c0_153] : memref<4x1xf32, #tpu.memory_space<vmem>>, vector<4x1xf32>
    %191 = vector.broadcast %190 : vector<4x1xf32> to vector<4x256xf32>
    %192 = arith.addf %189, %191 : vector<4x256xf32>
    %193 = arith.addf %192, %9 : vector<4x256xf32>
    %cst_154 = arith.constant 0.000000e+00 : f32
    %194 = vector.broadcast %cst_154 : f32 to vector<4x256xf32>
    %195 = arith.maximumf %193, %194 : vector<4x256xf32>
    %c0_155 = arith.constant 0 : index
    %c0_156 = arith.constant 0 : index
    %c0_157 = arith.constant 0 : index
    %196 = vector.load %arg6[%c0_155, %c0_156, %c0_157] : memref<1x4x256xf32, #tpu.memory_space<vmem>>, vector<1x4x256xf32>
    %197 = vector.shape_cast %196 : vector<1x4x256xf32> to vector<4x256xf32>
    %198 = vector.shape_cast %195 : vector<4x256xf32> to vector<1x4x256xf32>
    tpu.vector_store %arg6[%c0_155, %c0_156, %c0_157], %198 {strides = array<i32>} : memref<1x4x256xf32, #tpu.memory_space<vmem>>, vector<1x4x256xf32>,
    return
  }
  func.func @transform_0(%arg0: i32) -> (i32, i32, i32) {
    %c0_i32 = arith.constant 0 : i32
    %c0_i32_0 = arith.constant 0 : i32
    %c0_i32_1 = arith.constant 0 : i32
    return %arg0, %c0_i32, %c0_i32_0 : i32, i32, i32
  }
  func.func @transform_1(%arg0: i32) -> (i32, i32, i32, i32) {
    %c0_i32 = arith.constant 0 : i32
    %c0_i32_0 = arith.constant 0 : i32
    %c0_i32_1 = arith.constant 0 : i32
    %c0_i32_2 = arith.constant 0 : i32
    %c0_i32_3 = arith.constant 0 : i32
    return %c0_i32, %c0_i32_0, %c0_i32_1, %c0_i32_2 : i32, i32, i32, i32
  }
  func.func @transform_2(%arg0: i32) -> (i32, i32) {
    %c0_i32 = arith.constant 0 : i32
    %c0_i32_0 = arith.constant 0 : i32
    %c0_i32_1 = arith.constant 0 : i32
    return %c0_i32, %c0_i32_0 : i32, i32
  }
  func.func @transform_3(%arg0: i32) -> (i32, i32, i32, i32) {
    %c0_i32 = arith.constant 0 : i32
    %c0_i32_0 = arith.constant 0 : i32
    %c0_i32_1 = arith.constant 0 : i32
    %c0_i32_2 = arith.constant 0 : i32
    %c0_i32_3 = arith.constant 0 : i32
    return %c0_i32, %c0_i32_0, %c0_i32_1, %c0_i32_2 : i32, i32, i32, i32
  }
  func.func @transform_4(%arg0: i32) -> (i32, i32) {
    %c0_i32 = arith.constant 0 : i32
    %c0_i32_0 = arith.constant 0 : i32
    %c0_i32_1 = arith.constant 0 : i32
    return %c0_i32, %c0_i32_0 : i32, i32
  }
  func.func @transform_5(%arg0: i32) -> (i32, i32, i32) {
    %c0_i32 = arith.constant 0 : i32
    %c0_i32_0 = arith.constant 0 : i32
    %c0_i32_1 = arith.constant 0 : i32
    return %arg0, %c0_i32, %c0_i32_0 : i32, i32, i32
  }
}

module attributes {stable_mosaic.version = 11 : i64} {
  func.func @_resblock_kernel(%arg0: i32, %arg1: memref<1x4x256xf32, #tpu.memory_space<vmem>>, %arg2: memref<3x3x4x4xf32, #tpu.memory_space<vmem>>, %arg3: memref<4x1xf32, #tpu.memory_space<vmem>>, %arg4: memref<3x3x4x4xf32, #tpu.memory_space<vmem>>, %arg5: memref<4x1xf32, #tpu.memory_space<vmem>>, %arg6: memref<1x4x256xf32, #tpu.memory_space<vmem>>, %arg7: memref<4x512xf32, #tpu.memory_space<vmem>>, %arg8: memref<4x512xf32, #tpu.memory_space<vmem>>) attributes {dimension_semantics = [#tpu.dimension_semantics<parallel>], iteration_bounds = array<i64: 2>, scalar_prefetch = 0 : i64, scratch_operands = 2 : i64, tpu.core_type = #tpu.core_type<tc>, window_params = [{transform_indices = @transform_0, window_bounds = array<i64: 1, 4, 256>}, {pipeline_mode = #tpu.pipeline_mode<synchronous>, transform_indices = @transform_1, window_bounds = array<i64: 3, 3, 4, 4>}, {pipeline_mode = #tpu.pipeline_mode<synchronous>, transform_indices = @transform_2, window_bounds = array<i64: 4, 1>}, {pipeline_mode = #tpu.pipeline_mode<synchronous>, transform_indices = @transform_3, window_bounds = array<i64: 3, 3, 4, 4>}, {pipeline_mode = #tpu.pipeline_mode<synchronous>, transform_indices = @transform_4, window_bounds = array<i64: 4, 1>}, {transform_indices = @transform_5, window_bounds = array<i64: 1, 4, 256>}]} {
    %cst = arith.constant 0.000000e+00 : f32
    %0 = vector.broadcast %cst : f32 to vector<4x128xf32>
    %c0 = arith.constant 0 : index
    %c0_0 = arith.constant 0 : index
    %1 = vector.load %arg7[%c0, %c0_0] : memref<4x512xf32, #tpu.memory_space<vmem>>, vector<4x128xf32>
    tpu.vector_store %arg7[%c0, %c0_0], %0 {strides = array<i32>} : memref<4x512xf32, #tpu.memory_space<vmem>>, vector<4x128xf32>,
    %cst_1 = arith.constant 0.000000e+00 : f32
    %2 = vector.broadcast %cst_1 : f32 to vector<4x128xf32>
    %c0_2 = arith.constant 0 : index
    %c384 = arith.constant 384 : index
    %3 = vector.load %arg7[%c0_2, %c384] : memref<4x512xf32, #tpu.memory_space<vmem>>, vector<4x128xf32>
    tpu.vector_store %arg7[%c0_2, %c384], %2 {strides = array<i32>} : memref<4x512xf32, #tpu.memory_space<vmem>>, vector<4x128xf32>,
    %cst_3 = arith.constant 0.000000e+00 : f32
    %4 = vector.broadcast %cst_3 : f32 to vector<4x128xf32>
    %c0_4 = arith.constant 0 : index
    %c0_5 = arith.constant 0 : index
    %5 = vector.load %arg8[%c0_4, %c0_5] : memref<4x512xf32, #tpu.memory_space<vmem>>, vector<4x128xf32>
    tpu.vector_store %arg8[%c0_4, %c0_5], %4 {strides = array<i32>} : memref<4x512xf32, #tpu.memory_space<vmem>>, vector<4x128xf32>,
    %cst_6 = arith.constant 0.000000e+00 : f32
    %6 = vector.broadcast %cst_6 : f32 to vector<4x128xf32>
    %c0_7 = arith.constant 0 : index
    %c384_8 = arith.constant 384 : index
    %7 = vector.load %arg8[%c0_7, %c384_8] : memref<4x512xf32, #tpu.memory_space<vmem>>, vector<4x128xf32>
    tpu.vector_store %arg8[%c0_7, %c384_8], %6 {strides = array<i32>} : memref<4x512xf32, #tpu.memory_space<vmem>>, vector<4x128xf32>,
    %c0_9 = arith.constant 0 : index
    %c0_10 = arith.constant 0 : index
    %c0_11 = arith.constant 0 : index
    %8 = vector.load %arg1[%c0_9, %c0_10, %c0_11] : memref<1x4x256xf32, #tpu.memory_space<vmem>>, vector<1x4x256xf32>
    %9 = vector.shape_cast %8 : vector<1x4x256xf32> to vector<4x256xf32>
    %c0_12 = arith.constant 0 : index
    %c128 = arith.constant 128 : index
    %10 = vector.load %arg7[%c0_12, %c128] : memref<4x512xf32, #tpu.memory_space<vmem>>, vector<4x256xf32>
    tpu.vector_store %arg7[%c0_12, %c128], %9 {strides = array<i32>} : memref<4x512xf32, #tpu.memory_space<vmem>>, vector<4x256xf32>,
    %11 = tpu.iota {dimensions = array<i32: 1>} : vector<1x256xi32>
    %c16_i32 = arith.constant 16 : i32
    %c0_i32 = arith.constant 0 : i32
    %12 = arith.cmpi eq, %c16_i32, %c0_i32 : i32
    %c1_i32 = arith.constant 1 : i32
    %13 = arith.select %12, %c1_i32, %c16_i32 : i32
    %14 = vector.broadcast %13 : i32 to vector<1x256xi32>
    %15 = arith.remsi %11, %14 : vector<1x256xi32>
    %c0_i32_13 = arith.constant 0 : i32
    %16 = vector.broadcast %c0_i32_13 : i32 to vector<1x256xi32>
    %17 = arith.cmpi ne, %15, %16 : vector<1x256xi32>
    %c0_i32_14 = arith.constant 0 : i32
    %18 = vector.broadcast %c0_i32_14 : i32 to vector<1x256xi32>
    %19 = arith.cmpi slt, %15, %18 : vector<1x256xi32>
    %c0_i32_15 = arith.constant 0 : i32
    %20 = arith.cmpi slt, %13, %c0_i32_15 : i32
    %21 = vector.broadcast %20 : i1 to vector<1x256xi1>
    %22 = vector.broadcast %21 : vector<1x256xi1> to vector<1x256xi1>
    %23 = arith.xori %19, %22 : vector<1x256xi1>
    %24 = arith.andi %23, %17 : vector<1x256xi1>
    %25 = vector.broadcast %13 : i32 to vector<1x256xi32>
    %26 = arith.addi %15, %25 : vector<1x256xi32>
    %27 = arith.select %24, %26, %15 : vector<1x256xi1>, vector<1x256xi32>
    %c0_i32_16 = arith.constant 0 : i32
    %28 = vector.broadcast %c0_i32_16 : i32 to vector<1x256xi32>
    %29 = arith.cmpi ne, %27, %28 : vector<1x256xi32>
    %c15_i32 = arith.constant 15 : i32
    %30 = vector.broadcast %c15_i32 : i32 to vector<1x256xi32>
    %31 = arith.cmpi ne, %27, %30 : vector<1x256xi32>
    %cst_17 = arith.constant 0.000000e+00 : f32
    %32 = vector.broadcast %cst_17 : f32 to vector<4x256xf32>
    %c0_18 = arith.constant 0 : index
    %c111 = arith.constant 111 : index
    %33 = vector.load %arg7[%c0_18, %c111] : memref<4x512xf32, #tpu.memory_space<vmem>>, vector<4x256xf32>
    %c0_i32_19 = arith.constant 0 : i32
    %34 = arith.sitofp %c0_i32_19 : i32 to f32
    %35 = vector.shape_cast %29 : vector<1x256xi1> to vector<1x256xi1>
    %36 = vector.broadcast %35 : vector<1x256xi1> to vector<4x256xi1>
    %37 = vector.broadcast %34 : f32 to vector<4x256xf32>
    %38 = arith.select %36, %33, %37 : vector<4x256xi1>, vector<4x256xf32>
    %c0_20 = arith.constant 0 : index
    %c0_21 = arith.constant 0 : index
    %c0_22 = arith.constant 0 : index
    %c0_23 = arith.constant 0 : index
    %39 = vector.load %arg2[%c0_20, %c0_21, %c0_22, %c0_23] : memref<3x3x4x4xf32, #tpu.memory_space<vmem>>, vector<1x1x4x4xf32>
    %40 = vector.shape_cast %39 : vector<1x1x4x4xf32> to vector<4x4xf32>
    %cst_24 = arith.constant dense<0.000000e+00> : vector<4x256xf32>
    %41 = tpu.matmul %40, %38, %cst_24 {dimension_numbers = #tpu.dot_dimension_numbers<[1], [0], [0], [1], [0, 0, 1, 1], [], []>} : vector<4x4xf32>, vector<4x256xf32>, vector<4x256xf32> -> vector<4x256xf32>
    %42 = arith.addf %32, %41 : vector<4x256xf32>
    %c0_25 = arith.constant 0 : index
    %c112 = arith.constant 112 : index
    %43 = vector.load %arg7[%c0_25, %c112] : memref<4x512xf32, #tpu.memory_space<vmem>>, vector<4x256xf32>
    %c0_26 = arith.constant 0 : index
    %c1 = arith.constant 1 : index
    %c0_27 = arith.constant 0 : index
    %c0_28 = arith.constant 0 : index
    %44 = vector.load %arg2[%c0_26, %c1, %c0_27, %c0_28] : memref<3x3x4x4xf32, #tpu.memory_space<vmem>>, vector<1x1x4x4xf32>
    %45 = vector.shape_cast %44 : vector<1x1x4x4xf32> to vector<4x4xf32>
    %cst_29 = arith.constant dense<0.000000e+00> : vector<4x256xf32>
    %46 = tpu.matmul %45, %43, %cst_29 {dimension_numbers = #tpu.dot_dimension_numbers<[1], [0], [0], [1], [0, 0, 1, 1], [], []>} : vector<4x4xf32>, vector<4x256xf32>, vector<4x256xf32> -> vector<4x256xf32>
    %47 = arith.addf %42, %46 : vector<4x256xf32>
    %c0_30 = arith.constant 0 : index
    %c113 = arith.constant 113 : index
    %48 = vector.load %arg7[%c0_30, %c113] : memref<4x512xf32, #tpu.memory_space<vmem>>, vector<4x256xf32>
    %c0_i32_31 = arith.constant 0 : i32
    %49 = arith.sitofp %c0_i32_31 : i32 to f32
    %50 = vector.shape_cast %31 : vector<1x256xi1> to vector<1x256xi1>
    %51 = vector.broadcast %50 : vector<1x256xi1> to vector<4x256xi1>
    %52 = vector.broadcast %49 : f32 to vector<4x256xf32>
    %53 = arith.select %51, %48, %52 : vector<4x256xi1>, vector<4x256xf32>
    %c0_32 = arith.constant 0 : index
    %c2 = arith.constant 2 : index
    %c0_33 = arith.constant 0 : index
    %c0_34 = arith.constant 0 : index
    %54 = vector.load %arg2[%c0_32, %c2, %c0_33, %c0_34] : memref<3x3x4x4xf32, #tpu.memory_space<vmem>>, vector<1x1x4x4xf32>
    %55 = vector.shape_cast %54 : vector<1x1x4x4xf32> to vector<4x4xf32>
    %cst_35 = arith.constant dense<0.000000e+00> : vector<4x256xf32>
    %56 = tpu.matmul %55, %53, %cst_35 {dimension_numbers = #tpu.dot_dimension_numbers<[1], [0], [0], [1], [0, 0, 1, 1], [], []>} : vector<4x4xf32>, vector<4x256xf32>, vector<4x256xf32> -> vector<4x256xf32>
    %57 = arith.addf %47, %56 : vector<4x256xf32>
    %c0_36 = arith.constant 0 : index
    %c127 = arith.constant 127 : index
    %58 = vector.load %arg7[%c0_36, %c127] : memref<4x512xf32, #tpu.memory_space<vmem>>, vector<4x256xf32>
    %c0_i32_37 = arith.constant 0 : i32
    %59 = arith.sitofp %c0_i32_37 : i32 to f32
    %60 = vector.shape_cast %29 : vector<1x256xi1> to vector<1x256xi1>
    %61 = vector.broadcast %60 : vector<1x256xi1> to vector<4x256xi1>
    %62 = vector.broadcast %59 : f32 to vector<4x256xf32>
    %63 = arith.select %61, %58, %62 : vector<4x256xi1>, vector<4x256xf32>
    %c1_38 = arith.constant 1 : index
    %c0_39 = arith.constant 0 : index
    %c0_40 = arith.constant 0 : index
    %c0_41 = arith.constant 0 : index
    %64 = vector.load %arg2[%c1_38, %c0_39, %c0_40, %c0_41] : memref<3x3x4x4xf32, #tpu.memory_space<vmem>>, vector<1x1x4x4xf32>
    %65 = vector.shape_cast %64 : vector<1x1x4x4xf32> to vector<4x4xf32>
    %cst_42 = arith.constant dense<0.000000e+00> : vector<4x256xf32>
    %66 = tpu.matmul %65, %63, %cst_42 {dimension_numbers = #tpu.dot_dimension_numbers<[1], [0], [0], [1], [0, 0, 1, 1], [], []>} : vector<4x4xf32>, vector<4x256xf32>, vector<4x256xf32> -> vector<4x256xf32>
    %67 = arith.addf %57, %66 : vector<4x256xf32>
    %c0_43 = arith.constant 0 : index
    %c128_44 = arith.constant 128 : index
    %68 = vector.load %arg7[%c0_43, %c128_44] : memref<4x512xf32, #tpu.memory_space<vmem>>, vector<4x256xf32>
    %c1_45 = arith.constant 1 : index
    %c1_46 = arith.constant 1 : index
    %c0_47 = arith.constant 0 : index
    %c0_48 = arith.constant 0 : index
    %69 = vector.load %arg2[%c1_45, %c1_46, %c0_47, %c0_48] : memref<3x3x4x4xf32, #tpu.memory_space<vmem>>, vector<1x1x4x4xf32>
    %70 = vector.shape_cast %69 : vector<1x1x4x4xf32> to vector<4x4xf32>
    %cst_49 = arith.constant dense<0.000000e+00> : vector<4x256xf32>
    %71 = tpu.matmul %70, %68, %cst_49 {dimension_numbers = #tpu.dot_dimension_numbers<[1], [0], [0], [1], [0, 0, 1, 1], [], []>} : vector<4x4xf32>, vector<4x256xf32>, vector<4x256xf32> -> vector<4x256xf32>
    %72 = arith.addf %67, %71 : vector<4x256xf32>
    %c0_50 = arith.constant 0 : index
    %c129 = arith.constant 129 : index
    %73 = vector.load %arg7[%c0_50, %c129] : memref<4x512xf32, #tpu.memory_space<vmem>>, vector<4x256xf32>
    %c0_i32_51 = arith.constant 0 : i32
    %74 = arith.sitofp %c0_i32_51 : i32 to f32
    %75 = vector.shape_cast %31 : vector<1x256xi1> to vector<1x256xi1>
    %76 = vector.broadcast %75 : vector<1x256xi1> to vector<4x256xi1>
    %77 = vector.broadcast %74 : f32 to vector<4x256xf32>
    %78 = arith.select %76, %73, %77 : vector<4x256xi1>, vector<4x256xf32>
    %c1_52 = arith.constant 1 : index
    %c2_53 = arith.constant 2 : index
    %c0_54 = arith.constant 0 : index
    %c0_55 = arith.constant 0 : index
    %79 = vector.load %arg2[%c1_52, %c2_53, %c0_54, %c0_55] : memref<3x3x4x4xf32, #tpu.memory_space<vmem>>, vector<1x1x4x4xf32>
    %80 = vector.shape_cast %79 : vector<1x1x4x4xf32> to vector<4x4xf32>
    %cst_56 = arith.constant dense<0.000000e+00> : vector<4x256xf32>
    %81 = tpu.matmul %80, %78, %cst_56 {dimension_numbers = #tpu.dot_dimension_numbers<[1], [0], [0], [1], [0, 0, 1, 1], [], []>} : vector<4x4xf32>, vector<4x256xf32>, vector<4x256xf32> -> vector<4x256xf32>
    %82 = arith.addf %72, %81 : vector<4x256xf32>
    %c0_57 = arith.constant 0 : index
    %c143 = arith.constant 143 : index
    %83 = vector.load %arg7[%c0_57, %c143] : memref<4x512xf32, #tpu.memory_space<vmem>>, vector<4x256xf32>
    %c0_i32_58 = arith.constant 0 : i32
    %84 = arith.sitofp %c0_i32_58 : i32 to f32
    %85 = vector.shape_cast %29 : vector<1x256xi1> to vector<1x256xi1>
    %86 = vector.broadcast %85 : vector<1x256xi1> to vector<4x256xi1>
    %87 = vector.broadcast %84 : f32 to vector<4x256xf32>
    %88 = arith.select %86, %83, %87 : vector<4x256xi1>, vector<4x256xf32>
    %c2_59 = arith.constant 2 : index
    %c0_60 = arith.constant 0 : index
    %c0_61 = arith.constant 0 : index
    %c0_62 = arith.constant 0 : index
    %89 = vector.load %arg2[%c2_59, %c0_60, %c0_61, %c0_62] : memref<3x3x4x4xf32, #tpu.memory_space<vmem>>, vector<1x1x4x4xf32>
    %90 = vector.shape_cast %89 : vector<1x1x4x4xf32> to vector<4x4xf32>
    %cst_63 = arith.constant dense<0.000000e+00> : vector<4x256xf32>
    %91 = tpu.matmul %90, %88, %cst_63 {dimension_numbers = #tpu.dot_dimension_numbers<[1], [0], [0], [1], [0, 0, 1, 1], [], []>} : vector<4x4xf32>, vector<4x256xf32>, vector<4x256xf32> -> vector<4x256xf32>
    %92 = arith.addf %82, %91 : vector<4x256xf32>
    %c0_64 = arith.constant 0 : index
    %c144 = arith.constant 144 : index
    %93 = vector.load %arg7[%c0_64, %c144] : memref<4x512xf32, #tpu.memory_space<vmem>>, vector<4x256xf32>
    %c2_65 = arith.constant 2 : index
    %c1_66 = arith.constant 1 : index
    %c0_67 = arith.constant 0 : index
    %c0_68 = arith.constant 0 : index
    %94 = vector.load %arg2[%c2_65, %c1_66, %c0_67, %c0_68] : memref<3x3x4x4xf32, #tpu.memory_space<vmem>>, vector<1x1x4x4xf32>
    %95 = vector.shape_cast %94 : vector<1x1x4x4xf32> to vector<4x4xf32>
    %cst_69 = arith.constant dense<0.000000e+00> : vector<4x256xf32>
    %96 = tpu.matmul %95, %93, %cst_69 {dimension_numbers = #tpu.dot_dimension_numbers<[1], [0], [0], [1], [0, 0, 1, 1], [], []>} : vector<4x4xf32>, vector<4x256xf32>, vector<4x256xf32> -> vector<4x256xf32>
    %97 = arith.addf %92, %96 : vector<4x256xf32>
    %c0_70 = arith.constant 0 : index
    %c145 = arith.constant 145 : index
    %98 = vector.load %arg7[%c0_70, %c145] : memref<4x512xf32, #tpu.memory_space<vmem>>, vector<4x256xf32>
    %c0_i32_71 = arith.constant 0 : i32
    %99 = arith.sitofp %c0_i32_71 : i32 to f32
    %100 = vector.shape_cast %31 : vector<1x256xi1> to vector<1x256xi1>
    %101 = vector.broadcast %100 : vector<1x256xi1> to vector<4x256xi1>
    %102 = vector.broadcast %99 : f32 to vector<4x256xf32>
    %103 = arith.select %101, %98, %102 : vector<4x256xi1>, vector<4x256xf32>
    %c2_72 = arith.constant 2 : index
    %c2_73 = arith.constant 2 : index
    %c0_74 = arith.constant 0 : index
    %c0_75 = arith.constant 0 : index
    %104 = vector.load %arg2[%c2_72, %c2_73, %c0_74, %c0_75] : memref<3x3x4x4xf32, #tpu.memory_space<vmem>>, vector<1x1x4x4xf32>
    %105 = vector.shape_cast %104 : vector<1x1x4x4xf32> to vector<4x4xf32>
    %cst_76 = arith.constant dense<0.000000e+00> : vector<4x256xf32>
    %106 = tpu.matmul %105, %103, %cst_76 {dimension_numbers = #tpu.dot_dimension_numbers<[1], [0], [0], [1], [0, 0, 1, 1], [], []>} : vector<4x4xf32>, vector<4x256xf32>, vector<4x256xf32> -> vector<4x256xf32>
    %107 = arith.addf %97, %106 : vector<4x256xf32>
    %c0_77 = arith.constant 0 : index
    %c0_78 = arith.constant 0 : index
    %108 = vector.load %arg3[%c0_77, %c0_78] : memref<4x1xf32, #tpu.memory_space<vmem>>, vector<4x1xf32>
    %109 = vector.broadcast %108 : vector<4x1xf32> to vector<4x256xf32>
    %110 = arith.addf %107, %109 : vector<4x256xf32>
    %cst_79 = arith.constant 0.000000e+00 : f32
    %111 = vector.broadcast %cst_79 : f32 to vector<4x256xf32>
    %112 = arith.maximumf %110, %111 : vector<4x256xf32>
    %c0_80 = arith.constant 0 : index
    %c128_81 = arith.constant 128 : index
    %113 = vector.load %arg8[%c0_80, %c128_81] : memref<4x512xf32, #tpu.memory_space<vmem>>, vector<4x256xf32>
    tpu.vector_store %arg8[%c0_80, %c128_81], %112 {strides = array<i32>} : memref<4x512xf32, #tpu.memory_space<vmem>>, vector<4x256xf32>,
    %cst_82 = arith.constant 0.000000e+00 : f32
    %114 = vector.broadcast %cst_82 : f32 to vector<4x256xf32>
    %c0_83 = arith.constant 0 : index
    %c111_84 = arith.constant 111 : index
    %115 = vector.load %arg8[%c0_83, %c111_84] : memref<4x512xf32, #tpu.memory_space<vmem>>, vector<4x256xf32>
    %c0_i32_85 = arith.constant 0 : i32
    %116 = arith.sitofp %c0_i32_85 : i32 to f32
    %117 = vector.shape_cast %29 : vector<1x256xi1> to vector<1x256xi1>
    %118 = vector.broadcast %117 : vector<1x256xi1> to vector<4x256xi1>
    %119 = vector.broadcast %116 : f32 to vector<4x256xf32>
    %120 = arith.select %118, %115, %119 : vector<4x256xi1>, vector<4x256xf32>
    %c0_86 = arith.constant 0 : index
    %c0_87 = arith.constant 0 : index
    %c0_88 = arith.constant 0 : index
    %c0_89 = arith.constant 0 : index
    %121 = vector.load %arg4[%c0_86, %c0_87, %c0_88, %c0_89] : memref<3x3x4x4xf32, #tpu.memory_space<vmem>>, vector<1x1x4x4xf32>
    %122 = vector.shape_cast %121 : vector<1x1x4x4xf32> to vector<4x4xf32>
    %cst_90 = arith.constant dense<0.000000e+00> : vector<4x256xf32>
    %123 = tpu.matmul %122, %120, %cst_90 {dimension_numbers = #tpu.dot_dimension_numbers<[1], [0], [0], [1], [0, 0, 1, 1], [], []>} : vector<4x4xf32>, vector<4x256xf32>, vector<4x256xf32> -> vector<4x256xf32>
    %124 = arith.addf %114, %123 : vector<4x256xf32>
    %c0_91 = arith.constant 0 : index
    %c112_92 = arith.constant 112 : index
    %125 = vector.load %arg8[%c0_91, %c112_92] : memref<4x512xf32, #tpu.memory_space<vmem>>, vector<4x256xf32>
    %c0_93 = arith.constant 0 : index
    %c1_94 = arith.constant 1 : index
    %c0_95 = arith.constant 0 : index
    %c0_96 = arith.constant 0 : index
    %126 = vector.load %arg4[%c0_93, %c1_94, %c0_95, %c0_96] : memref<3x3x4x4xf32, #tpu.memory_space<vmem>>, vector<1x1x4x4xf32>
    %127 = vector.shape_cast %126 : vector<1x1x4x4xf32> to vector<4x4xf32>
    %cst_97 = arith.constant dense<0.000000e+00> : vector<4x256xf32>
    %128 = tpu.matmul %127, %125, %cst_97 {dimension_numbers = #tpu.dot_dimension_numbers<[1], [0], [0], [1], [0, 0, 1, 1], [], []>} : vector<4x4xf32>, vector<4x256xf32>, vector<4x256xf32> -> vector<4x256xf32>
    %129 = arith.addf %124, %128 : vector<4x256xf32>
    %c0_98 = arith.constant 0 : index
    %c113_99 = arith.constant 113 : index
    %130 = vector.load %arg8[%c0_98, %c113_99] : memref<4x512xf32, #tpu.memory_space<vmem>>, vector<4x256xf32>
    %c0_i32_100 = arith.constant 0 : i32
    %131 = arith.sitofp %c0_i32_100 : i32 to f32
    %132 = vector.shape_cast %31 : vector<1x256xi1> to vector<1x256xi1>
    %133 = vector.broadcast %132 : vector<1x256xi1> to vector<4x256xi1>
    %134 = vector.broadcast %131 : f32 to vector<4x256xf32>
    %135 = arith.select %133, %130, %134 : vector<4x256xi1>, vector<4x256xf32>
    %c0_101 = arith.constant 0 : index
    %c2_102 = arith.constant 2 : index
    %c0_103 = arith.constant 0 : index
    %c0_104 = arith.constant 0 : index
    %136 = vector.load %arg4[%c0_101, %c2_102, %c0_103, %c0_104] : memref<3x3x4x4xf32, #tpu.memory_space<vmem>>, vector<1x1x4x4xf32>
    %137 = vector.shape_cast %136 : vector<1x1x4x4xf32> to vector<4x4xf32>
    %cst_105 = arith.constant dense<0.000000e+00> : vector<4x256xf32>
    %138 = tpu.matmul %137, %135, %cst_105 {dimension_numbers = #tpu.dot_dimension_numbers<[1], [0], [0], [1], [0, 0, 1, 1], [], []>} : vector<4x4xf32>, vector<4x256xf32>, vector<4x256xf32> -> vector<4x256xf32>
    %139 = arith.addf %129, %138 : vector<4x256xf32>
    %c0_106 = arith.constant 0 : index
    %c127_107 = arith.constant 127 : index
    %140 = vector.load %arg8[%c0_106, %c127_107] : memref<4x512xf32, #tpu.memory_space<vmem>>, vector<4x256xf32>
    %c0_i32_108 = arith.constant 0 : i32
    %141 = arith.sitofp %c0_i32_108 : i32 to f32
    %142 = vector.shape_cast %29 : vector<1x256xi1> to vector<1x256xi1>
    %143 = vector.broadcast %142 : vector<1x256xi1> to vector<4x256xi1>
    %144 = vector.broadcast %141 : f32 to vector<4x256xf32>
    %145 = arith.select %143, %140, %144 : vector<4x256xi1>, vector<4x256xf32>
    %c1_109 = arith.constant 1 : index
    %c0_110 = arith.constant 0 : index
    %c0_111 = arith.constant 0 : index
    %c0_112 = arith.constant 0 : index
    %146 = vector.load %arg4[%c1_109, %c0_110, %c0_111, %c0_112] : memref<3x3x4x4xf32, #tpu.memory_space<vmem>>, vector<1x1x4x4xf32>
    %147 = vector.shape_cast %146 : vector<1x1x4x4xf32> to vector<4x4xf32>
    %cst_113 = arith.constant dense<0.000000e+00> : vector<4x256xf32>
    %148 = tpu.matmul %147, %145, %cst_113 {dimension_numbers = #tpu.dot_dimension_numbers<[1], [0], [0], [1], [0, 0, 1, 1], [], []>} : vector<4x4xf32>, vector<4x256xf32>, vector<4x256xf32> -> vector<4x256xf32>
    %149 = arith.addf %139, %148 : vector<4x256xf32>
    %c0_114 = arith.constant 0 : index
    %c128_115 = arith.constant 128 : index
    %150 = vector.load %arg8[%c0_114, %c128_115] : memref<4x512xf32, #tpu.memory_space<vmem>>, vector<4x256xf32>
    %c1_116 = arith.constant 1 : index
    %c1_117 = arith.constant 1 : index
    %c0_118 = arith.constant 0 : index
    %c0_119 = arith.constant 0 : index
    %151 = vector.load %arg4[%c1_116, %c1_117, %c0_118, %c0_119] : memref<3x3x4x4xf32, #tpu.memory_space<vmem>>, vector<1x1x4x4xf32>
    %152 = vector.shape_cast %151 : vector<1x1x4x4xf32> to vector<4x4xf32>
    %cst_120 = arith.constant dense<0.000000e+00> : vector<4x256xf32>
    %153 = tpu.matmul %152, %150, %cst_120 {dimension_numbers = #tpu.dot_dimension_numbers<[1], [0], [0], [1], [0, 0, 1, 1], [], []>} : vector<4x4xf32>, vector<4x256xf32>, vector<4x256xf32> -> vector<4x256xf32>
    %154 = arith.addf %149, %153 : vector<4x256xf32>
    %c0_121 = arith.constant 0 : index
    %c129_122 = arith.constant 129 : index
    %155 = vector.load %arg8[%c0_121, %c129_122] : memref<4x512xf32, #tpu.memory_space<vmem>>, vector<4x256xf32>
    %c0_i32_123 = arith.constant 0 : i32
    %156 = arith.sitofp %c0_i32_123 : i32 to f32
    %157 = vector.shape_cast %31 : vector<1x256xi1> to vector<1x256xi1>
    %158 = vector.broadcast %157 : vector<1x256xi1> to vector<4x256xi1>
    %159 = vector.broadcast %156 : f32 to vector<4x256xf32>
    %160 = arith.select %158, %155, %159 : vector<4x256xi1>, vector<4x256xf32>
    %c1_124 = arith.constant 1 : index
    %c2_125 = arith.constant 2 : index
    %c0_126 = arith.constant 0 : index
    %c0_127 = arith.constant 0 : index
    %161 = vector.load %arg4[%c1_124, %c2_125, %c0_126, %c0_127] : memref<3x3x4x4xf32, #tpu.memory_space<vmem>>, vector<1x1x4x4xf32>
    %162 = vector.shape_cast %161 : vector<1x1x4x4xf32> to vector<4x4xf32>
    %cst_128 = arith.constant dense<0.000000e+00> : vector<4x256xf32>
    %163 = tpu.matmul %162, %160, %cst_128 {dimension_numbers = #tpu.dot_dimension_numbers<[1], [0], [0], [1], [0, 0, 1, 1], [], []>} : vector<4x4xf32>, vector<4x256xf32>, vector<4x256xf32> -> vector<4x256xf32>
    %164 = arith.addf %154, %163 : vector<4x256xf32>
    %c0_129 = arith.constant 0 : index
    %c143_130 = arith.constant 143 : index
    %165 = vector.load %arg8[%c0_129, %c143_130] : memref<4x512xf32, #tpu.memory_space<vmem>>, vector<4x256xf32>
    %c0_i32_131 = arith.constant 0 : i32
    %166 = arith.sitofp %c0_i32_131 : i32 to f32
    %167 = vector.shape_cast %29 : vector<1x256xi1> to vector<1x256xi1>
    %168 = vector.broadcast %167 : vector<1x256xi1> to vector<4x256xi1>
    %169 = vector.broadcast %166 : f32 to vector<4x256xf32>
    %170 = arith.select %168, %165, %169 : vector<4x256xi1>, vector<4x256xf32>
    %c2_132 = arith.constant 2 : index
    %c0_133 = arith.constant 0 : index
    %c0_134 = arith.constant 0 : index
    %c0_135 = arith.constant 0 : index
    %171 = vector.load %arg4[%c2_132, %c0_133, %c0_134, %c0_135] : memref<3x3x4x4xf32, #tpu.memory_space<vmem>>, vector<1x1x4x4xf32>
    %172 = vector.shape_cast %171 : vector<1x1x4x4xf32> to vector<4x4xf32>
    %cst_136 = arith.constant dense<0.000000e+00> : vector<4x256xf32>
    %173 = tpu.matmul %172, %170, %cst_136 {dimension_numbers = #tpu.dot_dimension_numbers<[1], [0], [0], [1], [0, 0, 1, 1], [], []>} : vector<4x4xf32>, vector<4x256xf32>, vector<4x256xf32> -> vector<4x256xf32>
    %174 = arith.addf %164, %173 : vector<4x256xf32>
    %c0_137 = arith.constant 0 : index
    %c144_138 = arith.constant 144 : index
    %175 = vector.load %arg8[%c0_137, %c144_138] : memref<4x512xf32, #tpu.memory_space<vmem>>, vector<4x256xf32>
    %c2_139 = arith.constant 2 : index
    %c1_140 = arith.constant 1 : index
    %c0_141 = arith.constant 0 : index
    %c0_142 = arith.constant 0 : index
    %176 = vector.load %arg4[%c2_139, %c1_140, %c0_141, %c0_142] : memref<3x3x4x4xf32, #tpu.memory_space<vmem>>, vector<1x1x4x4xf32>
    %177 = vector.shape_cast %176 : vector<1x1x4x4xf32> to vector<4x4xf32>
    %cst_143 = arith.constant dense<0.000000e+00> : vector<4x256xf32>
    %178 = tpu.matmul %177, %175, %cst_143 {dimension_numbers = #tpu.dot_dimension_numbers<[1], [0], [0], [1], [0, 0, 1, 1], [], []>} : vector<4x4xf32>, vector<4x256xf32>, vector<4x256xf32> -> vector<4x256xf32>
    %179 = arith.addf %174, %178 : vector<4x256xf32>
    %c0_144 = arith.constant 0 : index
    %c145_145 = arith.constant 145 : index
    %180 = vector.load %arg8[%c0_144, %c145_145] : memref<4x512xf32, #tpu.memory_space<vmem>>, vector<4x256xf32>
    %c0_i32_146 = arith.constant 0 : i32
    %181 = arith.sitofp %c0_i32_146 : i32 to f32
    %182 = vector.shape_cast %31 : vector<1x256xi1> to vector<1x256xi1>
    %183 = vector.broadcast %182 : vector<1x256xi1> to vector<4x256xi1>
    %184 = vector.broadcast %181 : f32 to vector<4x256xf32>
    %185 = arith.select %183, %180, %184 : vector<4x256xi1>, vector<4x256xf32>
    %c2_147 = arith.constant 2 : index
    %c2_148 = arith.constant 2 : index
    %c0_149 = arith.constant 0 : index
    %c0_150 = arith.constant 0 : index
    %186 = vector.load %arg4[%c2_147, %c2_148, %c0_149, %c0_150] : memref<3x3x4x4xf32, #tpu.memory_space<vmem>>, vector<1x1x4x4xf32>
    %187 = vector.shape_cast %186 : vector<1x1x4x4xf32> to vector<4x4xf32>
    %cst_151 = arith.constant dense<0.000000e+00> : vector<4x256xf32>
    %188 = tpu.matmul %187, %185, %cst_151 {dimension_numbers = #tpu.dot_dimension_numbers<[1], [0], [0], [1], [0, 0, 1, 1], [], []>} : vector<4x4xf32>, vector<4x256xf32>, vector<4x256xf32> -> vector<4x256xf32>
    %189 = arith.addf %179, %188 : vector<4x256xf32>
    %c0_152 = arith.constant 0 : index
    %c0_153 = arith.constant 0 : index
    %190 = vector.load %arg5[%c0_152, %c0_153] : memref<4x1xf32, #tpu.memory_space<vmem>>, vector<4x1xf32>
    %191 = vector.broadcast %190 : vector<4x1xf32> to vector<4x256xf32>
    %192 = arith.addf %189, %191 : vector<4x256xf32>
    %193 = arith.addf %192, %9 : vector<4x256xf32>
    %cst_154 = arith.constant 0.000000e+00 : f32
    %194 = vector.broadcast %cst_154 : f32 to vector<4x256xf32>
    %195 = arith.maximumf %193, %194 : vector<4x256xf32>
    %c0_155 = arith.constant 0 : index
    %c0_156 = arith.constant 0 : index
    %c0_157 = arith.constant 0 : index
    %196 = vector.load %arg6[%c0_155, %c0_156, %c0_157] : memref<1x4x256xf32, #tpu.memory_space<vmem>>, vector<1x4x256xf32>
    %197 = vector.shape_cast %196 : vector<1x4x256xf32> to vector<4x256xf32>
    %198 = vector.shape_cast %195 : vector<4x256xf32> to vector<1x4x256xf32>
    tpu.vector_store %arg6[%c0_155, %c0_156, %c0_157], %198 {strides = array<i32>} : memref<1x4x256xf32, #tpu.memory_space<vmem>>, vector<1x4x256xf32>,
    return
  }
  func.func @transform_0(%arg0: i32) -> (i32, i32, i32) {
    %c0_i32 = arith.constant 0 : i32
    %c0_i32_0 = arith.constant 0 : i32
    %c0_i32_1 = arith.constant 0 : i32
    return %arg0, %c0_i32, %c0_i32_0 : i32, i32, i32
  }
  func.func @transform_1(%arg0: i32) -> (i32, i32, i32, i32) {
    %c0_i32 = arith.constant 0 : i32
    %c0_i32_0 = arith.constant 0 : i32
    %c0_i32_1 = arith.constant 0 : i32
    %c0_i32_2 = arith.constant 0 : i32
    %c0_i32_3 = arith.constant 0 : i32
    return %c0_i32, %c0_i32_0, %c0_i32_1, %c0_i32_2 : i32, i32, i32, i32
  }
  func.func @transform_2(%arg0: i32) -> (i32, i32) {
    %c0_i32 = arith.constant 0 : i32
    %c0_i32_0 = arith.constant 0 : i32
    %c0_i32_1 = arith.constant 0 : i32
    return %c0_i32, %c0_i32_0 : i32, i32
  }
  func.func @transform_3(%arg0: i32) -> (i32, i32, i32, i32) {
    %c0_i32 = arith.constant 0 : i32
    %c0_i32_0 = arith.constant 0 : i32
    %c0_i32_1 = arith.constant 0 : i32
    %c0_i32_2 = arith.constant 0 : i32
    %c0_i32_3 = arith.constant 0 : i32
    return %c0_i32, %c0_i32_0, %c0_i32_1, %c0_i32_2 : i32, i32, i32, i32
  }
  func.func @transform_4(%arg0: i32) -> (i32, i32) {
    %c0_i32 = arith.constant 0 : i32
    %c0_i32_0 = arith.constant 0 : i32
    %c0_i32_1 = arith.constant 0 : i32
    return %c0_i32, %c0_i32_0 : i32, i32
  }
  func.func @transform_5(%arg0: i32) -> (i32, i32, i32) {
    %c0_i32 = arith.constant 0 : i32
    %c0_i32_0 = arith.constant 0 : i32
    %c0_i32_1 = arith.constant 0 : i32
    return %arg0, %c0_i32, %c0_i32_0 : i32, i32, i32
  }
}

</mosaic_0001>

<llo_original>
// kernel: tpu_custom_call.1
$region0: #{tpu_custom_call.1}
  #allocation0 [shape = 'u32[]', space=smem, size = 0x4, offset = 0x4, fixed_abs, tag = 'smem constant byte address 0x4 - core index']
  #allocation1 [shape = 'u32[144,128]{1,0:T(1,128)}', space=vmem, size = 0x12000, scoped, tag = 'internal scratch']
  #allocation2 [shape = 'f32[4,512]{1,0:T(4,128)}', space=vmem, size = 0x2000, scoped, tag = 'scratch operand']
  #allocation3 [shape = 'f32[4,512]{1,0:T(4,128)}', space=vmem, size = 0x2000, scoped, tag = 'scratch operand']
  %s0 = inlined_call_operand.hbm [shape: f32[2,4,256], index: 0, kind: input, shape index: {}]
  %s1 = inlined_call_operand.hbm [shape: f32[3,3,4,4], index: 1, kind: input, shape index: {}]
  %s2 = inlined_call_operand.vmem [shape: f32[4,1], index: 2, kind: input, shape index: {}]
  %s3 = inlined_call_operand.hbm [shape: f32[3,3,4,4], index: 3, kind: input, shape index: {}]
  %s4 = inlined_call_operand.vmem [shape: f32[4,1], index: 4, kind: input, shape index: {}]
  %s5 = inlined_call_operand.hbm [shape: f32[2,4,256], index: 5, kind: output, shape index: {}]
  %s6 = sld [smem:[#allocation0]]
  $region65: #{tpu_custom_call.1} parent=0
    _
  %s8 = ssub.s32 1, %s6
  %s9 = scalar_select 0, %s8, %s6
  $region1: #{tpu_custom_call.1} parent=0
    #allocation4 [shape = 'u8[8192]{0}', space=vmem, size = 0x2000, scoped, tag = 'input window, operand 0']
    #allocation5 [shape = 's32[2]{0}', space=sflag, size = 0x8, scoped, tag = 'scoped memory for tpu_custom_call.1']
    #allocation6 [shape = 's32[2]{0}', space=sflag, size = 0x8, scoped, tag = 'scoped memory for tpu_custom_call.1']
    #allocation7 [shape = 'u8[18432]{0}', space=vmem, size = 0x4800, scoped, tag = 'input window, operand 1, single buffered']
    #allocation8 [shape = 's32[1]{0}', space=sflag, size = 0x4, scoped, tag = 'scoped memory for tpu_custom_call.1']
    #allocation9 [shape = 'u8[18432]{0}', space=vmem, size = 0x4800, scoped, tag = 'input window, operand 3, single buffered']
    #allocation10 [shape = 'u8[8192]{0}', space=vmem, size = 0x2000, scoped, tag = 'output window, operand 0']
    %10 = vsyncpa [#allocation5], 0
    %s11 = scalar_lea.sflag [#allocation5], 1
    %12 = vsyncpa %s11, 0
    %13 = vsyncpa [#allocation8], 0
    %14 = vsyncpa [#allocation6], 0
    %s15 = scalar_lea.sflag [#allocation6], 1
    %16 = vsyncpa %s15, 0
    loop: start=0, step=1, limit=4
    $region2: #{tpu_custom_call.1} parent=1 // loop_pre_header
      _
    $region3: #{tpu_custom_call.1} parent=1 // loop_header
      %s18 = sphi 0, %s22
      %p19 = scmp.ge.s32.totalorder %s18, 4
      %s28 = sphi 0, %s30
      %s31 = sphi 0, %s28
      %s32 = sphi 0, %s31
      %s48 = sphi 0, %s32
      %s52 = sphi 0, %s52
      %s54 = sphi 0, %s52
      %s55 = sphi 0, %s54
      %s69 = sphi 0, %s55
      %s73 = sphi 0, %s73
      %s75 = sphi 0, %s73
      %s76 = sphi 0, %s75
      %s90 = sphi 0, %s76
      %s94 = sphi 0, %s94
      %s96 = sphi 0, %s94
      %s97 = sphi 0, %s96
      %s111 = sphi 0, %s97
      %s115 = sphi 0, %s115
      %s117 = sphi 0, %s115
      %s118 = sphi 0, %s117
      %s132 = sphi 0, %s118
      %s138 = sphi 0, %s140
      %s141 = sphi 0, %s138
      %s142 = sphi 0, %s141
      %s158 = sphi 0, %s142
    $region4: #{tpu_custom_call.1} parent=1 // loop_header_branch
      %21 = sbr.rel (%p19) target = $region8
    $region5: #{tpu_custom_call.1} parent=1 // loop_body
      %s23 = ssub.s32 %s18, 1
      %s24 = ssub.s32 %s18, 2
      %s25 = sadd.s32 %s18, 1
      %s26 = ssub.s32 %s18, %s25
      %p27 = scmp.eq.s32.totalorder %s26, 0
      %s29 = sadd.s32 %s28, 1
      %s30 = scalar_select %p27, %s28, %s29
      %p33 = pneg %p27
      %p34 = scmp.eq.s32.totalorder %s18, 1
      %p35 = por %p33, %p34
      %p36 = scmp.ne.s32.totalorder %s28, %s31
      %p37 = scmp.eq.s32.totalorder %s18, 0
      %p38 = por %p36, %p37
      %p39 = scmp.ne.s32.totalorder %s28, %s31
      %p40 = scmp.eq.s32.totalorder %s23, 1
      %p41 = por %p39, %p40
      %p42 = scmp.ne.s32.totalorder %s31, %s32
      %p43 = scmp.eq.s32.totalorder %s23, 0
      %p44 = por %p42, %p43
      %p45 = scmp.ne.s32.totalorder %s31, %s32
      %p46 = scmp.eq.s32.totalorder %s24, 1
      %p47 = por %p45, %p46
      %p49 = scmp.ne.s32.totalorder %s32, %s48
      %p50 = scmp.eq.s32.totalorder %s24, 0
      %p51 = por %p49, %p50
      %s53 = sadd.s32 %s52, 1
      %p56 = scmp.eq.s32.totalorder %s18, 1
      %p57 = scmp.ne.s32.totalorder %s52, %s54
      %p58 = scmp.eq.s32.totalorder %s18, 0
      %p59 = por %p57, %p58
      %p60 = scmp.ne.s32.totalorder %s52, %s54
      %p61 = scmp.eq.s32.totalorder %s23, 1
      %p62 = por %p60, %p61
      %p63 = scmp.ne.s32.totalorder %s54, %s55
      %p64 = scmp.eq.s32.totalorder %s23, 0
      %p65 = por %p63, %p64
      %p66 = scmp.ne.s32.totalorder %s54, %s55
      %p67 = scmp.eq.s32.totalorder %s24, 1
      %p68 = por %p66, %p67
      %p70 = scmp.ne.s32.totalorder %s55, %s69
      %p71 = scmp.eq.s32.totalorder %s24, 0
      %p72 = por %p70, %p71
      %s74 = sadd.s32 %s73, 1
      %p77 = scmp.eq.s32.totalorder %s18, 1
      %p78 = scmp.ne.s32.totalorder %s73, %s75
      %p79 = scmp.eq.s32.totalorder %s18, 0
      %p80 = por %p78, %p79
      %p81 = scmp.ne.s32.totalorder %s73, %s75
      %p82 = scmp.eq.s32.totalorder %s23, 1
      %p83 = por %p81, %p82
      %p84 = scmp.ne.s32.totalorder %s75, %s76
      %p85 = scmp.eq.s32.totalorder %s23, 0
      %p86 = por %p84, %p85
      %p87 = scmp.ne.s32.totalorder %s75, %s76
      %p88 = scmp.eq.s32.totalorder %s24, 1
      %p89 = por %p87, %p88
      %p91 = scmp.ne.s32.totalorder %s76, %s90
      %p92 = scmp.eq.s32.totalorder %s24, 0
      %p93 = por %p91, %p92
      %s95 = sadd.s32 %s94, 1
      %p98 = scmp.eq.s32.totalorder %s18, 1
      %p99 = scmp.ne.s32.totalorder %s94, %s96
      %p100 = scmp.eq.s32.totalorder %s18, 0
      %p101 = por %p99, %p100
      %p102 = scmp.ne.s32.totalorder %s94, %s96
      %p103 = scmp.eq.s32.totalorder %s23, 1
      %p104 = por %p102, %p103
      %p105 = scmp.ne.s32.totalorder %s96, %s97
      %p106 = scmp.eq.s32.totalorder %s23, 0
      %p107 = por %p105, %p106
      %p108 = scmp.ne.s32.totalorder %s96, %s97
      %p109 = scmp.eq.s32.totalorder %s24, 1
      %p110 = por %p108, %p109
      %p112 = scmp.ne.s32.totalorder %s97, %s111
      %p113 = scmp.eq.s32.totalorder %s24, 0
      %p114 = por %p112, %p113
      %s116 = sadd.s32 %s115, 1
      %p119 = scmp.eq.s32.totalorder %s18, 1
      %p120 = scmp.ne.s32.totalorder %s115, %s117
      %p121 = scmp.eq.s32.totalorder %s18, 0
      %p122 = por %p120, %p121
      %p123 = scmp.ne.s32.totalorder %s115, %s117
      %p124 = scmp.eq.s32.totalorder %s23, 1
      %p125 = por %p123, %p124
      %p126 = scmp.ne.s32.totalorder %s117, %s118
      %p127 = scmp.eq.s32.totalorder %s23, 0
      %p128 = por %p126, %p127
      %p129 = scmp.ne.s32.totalorder %s117, %s118
      %p130 = scmp.eq.s32.totalorder %s24, 1
      %p131 = por %p129, %p130
      %p133 = scmp.ne.s32.totalorder %s118, %s132
      %p134 = scmp.eq.s32.totalorder %s24, 0
      %p135 = por %p133, %p134
      %s136 = ssub.s32 %s18, %s25
      %p137 = scmp.eq.s32.totalorder %s136, 0
      %s139 = sadd.s32 %s138, 1
      %s140 = scalar_select %p137, %s138, %s139
      %p143 = pneg %p137
      %p144 = scmp.eq.s32.totalorder %s18, 1
      %p145 = por %p143, %p144
      %p146 = scmp.ne.s32.totalorder %s138, %s141
      %p147 = scmp.eq.s32.totalorder %s18, 0
      %p148 = por %p146, %p147
      %p149 = scmp.ne.s32.totalorder %s138, %s141
      %p150 = scmp.eq.s32.totalorder %s23, 1
      %p151 = por %p149, %p150
      %p152 = scmp.ne.s32.totalorder %s141, %s142
      %p153 = scmp.eq.s32.totalorder %s23, 0
      %p154 = por %p152, %p153
      %p155 = scmp.ne.s32.totalorder %s141, %s142
      %p156 = scmp.eq.s32.totalorder %s24, 1
      %p157 = por %p155, %p156
      %p159 = scmp.ne.s32.totalorder %s142, %s158
      %p160 = scmp.eq.s32.totalorder %s24, 0
      %p161 = por %p159, %p160
      %p162 = scmp.le.s32.totalorder 1, %s18
      %p163 = scmp.lt.s32.totalorder %s18, 3
      %p164 = pnand %p162, %p163
      %p165 = pneg %p164
      // Predicated region
      $region9: #{tpu_custom_call.1} parent=5 // pred_check
        _
      $region10: #{tpu_custom_call.1} parent=5 // pred_check_branch
        %167 = sbr.rel (%p164) target = $region12
      $region11: #{tpu_custom_call.1} parent=5 // pred_region
        %s168 = ssub.s32 %s18, 1
        // Predicated region
        $region13: #{tpu_custom_call.1} parent=11 // pred_check
          %p169 = pneg %p65
        $region14: #{tpu_custom_call.1} parent=11 // pred_check_branch
          %171 = sbr.rel (%p169) target = $region16
        $region15: #{tpu_custom_call.1} parent=11 // pred_region
          %s173 = ssub.s32 576, 576
          %174 = vsyncadd [#allocation8], %s173
          %s175 = sshll.u32 [#allocation7], 4
          %s176 = int_to_ptr.vmem [resolvable:$true] %s175
          %181 = dma.hbm_to_vmem [thread:$0]  %s1, 576, %s176, [#allocation8], 64, 64, 4
        $region16: #{tpu_custom_call.1} parent=11 // pred_fallthru
          _
        // Predicated region
        $region17: #{tpu_custom_call.1} parent=11 // pred_check
          %p182 = pneg %p86
        $region18: #{tpu_custom_call.1} parent=11 // pred_check_branch
          %184 = sbr.rel (%p182) target = $region20
        $region19: #{tpu_custom_call.1} parent=11 // pred_region
          _
        $region20: #{tpu_custom_call.1} parent=11 // pred_fallthru
          _
        // Predicated region
        $region21: #{tpu_custom_call.1} parent=11 // pred_check
          %p185 = pneg %p107
        $region22: #{tpu_custom_call.1} parent=11 // pred_check_branch
          %187 = sbr.rel (%p185) target = $region24
        $region23: #{tpu_custom_call.1} parent=11 // pred_region
          %s189 = ssub.s32 576, 576
          %190 = vsyncadd [#allocation8], %s189
          %s191 = sshll.u32 [#allocation9], 4
          %s192 = int_to_ptr.vmem [resolvable:$true] %s191
          %197 = dma.hbm_to_vmem [thread:$0]  %s3, 576, %s192, [#allocation8], 64, 64, 4
        $region24: #{tpu_custom_call.1} parent=11 // pred_fallthru
          _
        // Predicated region
        $region25: #{tpu_custom_call.1} parent=11 // pred_check
          %p198 = pneg %p128
        $region26: #{tpu_custom_call.1} parent=11 // pred_check_branch
          %200 = sbr.rel (%p198) target = $region28
        $region27: #{tpu_custom_call.1} parent=11 // pred_region
          _
        $region28: #{tpu_custom_call.1} parent=11 // pred_fallthru
          _
      $region12: #{tpu_custom_call.1} parent=5 // pred_fallthru
        _
      %p201 = scmp.lt.s32.totalorder %s18, 2
      // Predicated region
      $region29: #{tpu_custom_call.1} parent=5 // pred_check
        %p202 = pneg %p201
      $region30: #{tpu_custom_call.1} parent=5 // pred_check_branch
        %204 = sbr.rel (%p202) target = $region32
      $region31: #{tpu_custom_call.1} parent=5 // pred_region
        // Predicated region
        $region33: #{tpu_custom_call.1} parent=31 // pred_check
          %p205 = pneg %p38
        $region34: #{tpu_custom_call.1} parent=31 // pred_check_branch
          %207 = sbr.rel (%p205) target = $region36
        $region35: #{tpu_custom_call.1} parent=31 // pred_region
          %s208 = sand.u32 %s28, 1
          %s209 = scalar_lea.sflag [#allocation5], %s208
          %s210 = sand.u32 %s28, 1
          %s211 = smul.addr %s210, 8
          %s212 = scalar_lea.vmem [#allocation4], %s211
          %s214 = ssub.s32 128, 128
          %215 = vsyncadd %s209, %s214
          %s216 = smul.addr %s18, 2
          %s217 = smul.addr %s216, 64
          %s218 = scalar_lea.hbm %s0, %s217
          %s220 = sshll.u32 %s212, 4
          %s221 = int_to_ptr.vmem [resolvable:$true] %s220
          %223 = dma.hbm_to_vmem [thread:$0]  %s218, 128, %s221, %s209
        $region36: #{tpu_custom_call.1} parent=31 // pred_fallthru
          _
      $region32: #{tpu_custom_call.1} parent=5 // pred_fallthru
        _
      %p224 = scmp.le.s32.totalorder 1, %s18
      %p225 = scmp.lt.s32.totalorder %s18, 3
      %p226 = pnand %p224, %p225
      %p227 = pneg %p226
      // Predicated region
      $region37: #{tpu_custom_call.1} parent=5 // pred_check
        _
      $region38: #{tpu_custom_call.1} parent=5 // pred_check_branch
        %229 = sbr.rel (%p226) target = $region40
      $region39: #{tpu_custom_call.1} parent=5 // pred_region
        %s230 = ssub.s32 %s18, 1
        %s231 = sand.u32 %s31, 1
        %s232 = scalar_lea.sflag [#allocation5], %s231
        %s233 = sand.u32 %s31, 1
        %s234 = smul.addr %s233, 8
        %s235 = scalar_lea.vmem [#allocation4], %s234
        // Predicated region
        $region41: #{tpu_custom_call.1} parent=39 // pred_check
          %p236 = pneg %p44
        $region42: #{tpu_custom_call.1} parent=39 // pred_check_branch
          %238 = sbr.rel (%p236) target = $region44
        $region43: #{tpu_custom_call.1} parent=39 // pred_region
          %239 = dma.done %s232, 128
        $region44: #{tpu_custom_call.1} parent=39 // pred_fallthru
          _
        // Predicated region
        $region45: #{tpu_custom_call.1} parent=39 // pred_check
          %p240 = pneg %p65
        $region46: #{tpu_custom_call.1} parent=39 // pred_check_branch
          %242 = sbr.rel (%p240) target = $region48
        $region47: #{tpu_custom_call.1} parent=39 // pred_region
          %243 = dma.done [#allocation8], 576
        $region48: #{tpu_custom_call.1} parent=39 // pred_fallthru
          _
        // Predicated region
        $region49: #{tpu_custom_call.1} parent=39 // pred_check
          %p244 = pneg %p107
        $region50: #{tpu_custom_call.1} parent=39 // pred_check_branch
          %246 = sbr.rel (%p244) target = $region52
        $region51: #{tpu_custom_call.1} parent=39 // pred_region
          %247 = dma.done [#allocation8], 576
        $region52: #{tpu_custom_call.1} parent=39 // pred_fallthru
          _
        %s248 = sand.u32 %s31, 1
        %s249 = scalar_lea.sflag [#allocation5], %s248
        %s250 = sand.u32 %s31, 1
        %s251 = smul.addr %s250, 8
        %s252 = scalar_lea.vmem [#allocation4], %s251
        %p253 = pneg %p44
        %p254 = pneg %p41
        %p255 = pneg %p65
        %p256 = pneg %p62
        %p257 = pneg %p86
        %p258 = pneg %p83
        %p259 = pneg %p107
        %p260 = pneg %p104
        %p261 = pneg %p128
        %p262 = pneg %p125
        %p263 = pneg %p154
        %p264 = pneg %p151
        %s265 = sand.u32 %s141, 1
        %s266 = scalar_lea.sflag [#allocation6], %s265
        %s267 = sand.u32 %s141, 1
        %s268 = smul.addr %s267, 8
        %s269 = scalar_lea.vmem [#allocation10], %s268
        %270 = vst [vmem:[#allocation2] sm:$0xf] 0.0
        %271 = vst [vmem:[#allocation2 + $0xc] sm:$0xf] 0.0
        %272 = vst [vmem:[#allocation3] sm:$0xf] 0.0
        %273 = vst [vmem:[#allocation3 + $0xc] sm:$0xf] 0.0
        %v274 = vld [vmem:[%s235] sm:$0xff]
        %275 = vst [vmem:[#allocation2 + $0x4] sm:$0xff] %v274
        %v276 = vlaneseq
        %v277 = vand.u32 %v276, 127
        %v278 = vadd.s32 %v277, 128
        %vm279 = vcmp.lt.s32.totalorder %v277, 0
        %v280 = vsub.s32 0, %v277
        %v281 = vsel %vm279, %v280, %v277
        %v282 = vshrl.u32 %v281, 4
        %v283 = vand.u32 %v281, 15
        %v284 = vsub.s32 0, %v283
        %v285 = vsel %vm279, %v284, %v283
        %vm286 = vcmp.lt.s32.totalorder %v278, 0
        %v287 = vsub.s32 0, %v278
        %v288 = vsel %vm286, %v287, %v278
        %v289 = vshrl.u32 %v288, 4
        %v290 = vand.u32 %v288, 15
        %v291 = vsub.s32 0, %v290
        %v292 = vsel %vm286, %v291, %v290
        %vm293 = vcmp.ne.s32.totalorder %v285, 0
        %vm294 = vcmp.ne.s32.totalorder %v292, 0
        %vm295 = vcmp.lt.s32.totalorder %v285, 0
        %vm296 = vcmp.lt.s32.totalorder %v292, 0
        %vm297 = vmand %vm295, %vm293
        %vm298 = vmand %vm296, %vm294
        %v299 = vadd.s32 %v285, 16
        %v300 = vadd.s32 %v292, 16
        %v301 = vsel %vm297, %v299, %v285
        %v302 = vsel %vm298, %v300, %v292
        %vm303 = vcmp.ne.s32.totalorder %v301, 0
        %vm304 = vcmp.ne.s32.totalorder %v302, 0
        %vm305 = vcmp.ne.s32.totalorder %v301, 15
        %vm306 = vcmp.ne.s32.totalorder %v302, 15
        %v307 = vld [vmem:[#allocation2] sm:$0xff]
        %v308 = vld [vmem:[#allocation2 + $0x8] sm:$0xf]
        %v309 = vsel %vm303, 1, 0
        %v310 = vsel %vm304, 1, 0
        %vm311 = vcmp.eq.s32.totalorder %v309, 1
        %vm312 = vcmp.eq.s32.totalorder %v310, 1
        %v315 = vcombine.high %v307, %v307
        %316 = vrot.lane.b32.xlu0 %v307, 17
        %v317 = vpop.permute.xlu0 %316
        %318 = vrot.lane.b32.xlu0 %v315, 17
        %v319 = vpop.permute.xlu0 %318
        %320 = vrot.lane.b32.xlu0 %v308, 17
        %v321 = vpop.permute.xlu0 %320
        %vm322 = vcmask 138240
        %v323 = vsel %vm322, %v317, %v319
        %v324 = vsel %vm322, %v319, %v321
        %v327 = vsel %vm311, %v323, 0.0
        %v328 = vsel %vm312, %v324, 0.0
        %v329 = vld [vmem:[#allocation7] sm:$0xf]
        %s330 = scalar_lea.vmem [#allocation7], 4
        %v331 = vld [vmem:[%s330] sm:$0xf]
        %332 = vrot.lane.b32.xlu0 %v307, 16
        %v333 = vpop.permute.xlu0 %332
        %334 = vrot.lane.b32.xlu0 %v315, 16
        %v335 = vpop.permute.xlu0 %334
        %336 = vrot.lane.b32.xlu0 %v308, 16
        %v337 = vpop.permute.xlu0 %336
        %vm338 = vcmask 130048
        %v339 = vsel %vm338, %v333, %v335
        %v340 = vsel %vm338, %v335, %v337
        %vm341 = vcmask 31744
        %v343 = vsel %vm341, %v331, 0
        %vm345 = vcmask 1043456
        %v346 = vsel %vm345, %v339, 0
        %v348 = vsel %vm345, %v340, 0
        %350 = vmatprep.subr.mxu0 %v348
        %351 = vmatpush1.msra.mxu0 %v346
        %352 = vmatprep.subr.mxu0 0.0
        %353 = vmatpush1.msra.mxu0 0.0
        %354 = vmatprep.subr.mxu0 0.0
        %355 = vmatpush1.msra.mxu0 0.0
        %356 = vmatprep.subr.mxu0 0.0
        %357 = vmatpush1.msra.mxu0 0.0
        %358 = vmatprep.subr.mxu0 0.0
        %359 = vmatpush1.msra.mxu0 0.0
        %360 = vmatprep.subr.mxu0 0.0
        %361 = vmatpush1.msra.mxu0 0.0
        %362 = vmatprep.subr.mxu0 0.0
        %363 = vmatpush1.msra.mxu0 0.0
        %364 = vmatprep.subr.mxu0 0.0
        %365 = vmatpush1.msra.mxu0 0.0
        %366 = vmatprep.subr.mxu0 0.0
        %367 = vmatpush1.msra.mxu0 0.0
        %368 = vmatprep.subr.mxu0 0.0
        %369 = vmatpush1.msra.mxu0 0.0
        %370 = vmatprep.subr.mxu0 0.0
        %371 = vmatpush1.msra.mxu0 0.0
        %372 = vmatprep.subr.mxu0 0.0
        %373 = vmatpush1.msra.mxu0 0.0
        %374 = vmatprep.subr.mxu0 0.0
        %375 = vmatpush1.msra.mxu0 0.0
        %376 = vmatprep.subr.mxu0 0.0
        %377 = vmatpush1.msra.mxu0 0.0
        %378 = vmatprep.subr.mxu0 0.0
        %379 = vmatpush1.msra.mxu0 0.0
        %380 = vmatprep.subr.mxu0 0.0
        %381 = vmatpush1.msra.mxu0 0.0
        %382 = vmatprep.subr.mxu0 0.0
        %383 = vmatpush1.msra.mxu0 0.0
        %384 = vmatprep.subr.mxu0 0.0
        %385 = vmatpush1.msra.mxu0 0.0
        %386 = vmatprep.subr.mxu0 0.0
        %387 = vmatpush1.msra.mxu0 0.0
        %388 = vmatprep.subr.mxu0 0.0
        %389 = vmatpush1.msra.mxu0 0.0
        %390 = vmatprep.subr.mxu0 0.0
        %391 = vmatpush1.msra.mxu0 0.0
        %392 = vmatprep.subr.mxu0 0.0
        %393 = vmatpush1.msra.mxu0 0.0
        %394 = vmatprep.subr.mxu0 0.0
        %395 = vmatpush1.msra.mxu0 0.0
        %396 = vmatprep.subr.mxu0 0.0
        %397 = vmatpush1.msra.mxu0 0.0
        %398 = vmatprep.subr.mxu0 0.0
        %399 = vmatpush1.msra.mxu0 0.0
        %400 = vmatprep.subr.mxu0 0.0
        %401 = vmatpush1.msra.mxu0 0.0
        %402 = vmatprep.subr.mxu0 0.0
        %403 = vmatpush1.msra.mxu0 0.0
        %404 = vmatprep.subr.mxu0 0.0
        %405 = vmatpush1.msra.mxu0 0.0
        %406 = vmatprep.subr.mxu0 0.0
        %407 = vmatpush1.msra.mxu0 0.0
        %408 = vmatprep.subr.mxu0 0.0
        %409 = vmatpush1.msra.mxu0 0.0
        %410 = vmatprep.subr.mxu0 0.0
        %411 = vmatpush1.msra.mxu0 0.0
        %412 = vmatprep.subr.mxu0 0.0
        %413 = vmatpush1.msra.mxu0 0.0
        %414 = vmatprep.mubr.f32.mxu0 0.0
        %415 = vmatmul.mubr.f32.gmra.mrb[0].mxu0 %v343
        %v416 = vpop.f32.mrb[0].mxu0
        %v417 = vadd.f32 0.0, %v416
        %v418 = vpop.f32.mrb[0].mxu0
        %v419 = vadd.f32 0.0, %v418
        %420 = vdwg.mxu0
        %v422 = vsel %vm341, %v329, 0
        %v425 = vsel %vm345, %v327, 0
        %v428 = vsel %vm345, %v328, 0
        %430 = vmatprep.subr.mxu0 %v428
        %431 = vmatpush1.msra.mxu0 %v425
        %432 = vmatprep.subr.mxu0 0.0
        %433 = vmatpush1.msra.mxu0 0.0
        %434 = vmatprep.subr.mxu0 0.0
        %435 = vmatpush1.msra.mxu0 0.0
        %436 = vmatprep.subr.mxu0 0.0
        %437 = vmatpush1.msra.mxu0 0.0
        %438 = vmatprep.subr.mxu0 0.0
        %439 = vmatpush1.msra.mxu0 0.0
        %440 = vmatprep.subr.mxu0 0.0
        %441 = vmatpush1.msra.mxu0 0.0
        %442 = vmatprep.subr.mxu0 0.0
        %443 = vmatpush1.msra.mxu0 0.0
        %444 = vmatprep.subr.mxu0 0.0
        %445 = vmatpush1.msra.mxu0 0.0
        %446 = vmatprep.subr.mxu0 0.0
        %447 = vmatpush1.msra.mxu0 0.0
        %448 = vmatprep.subr.mxu0 0.0
        %449 = vmatpush1.msra.mxu0 0.0
        %450 = vmatprep.subr.mxu0 0.0
        %451 = vmatpush1.msra.mxu0 0.0
        %452 = vmatprep.subr.mxu0 0.0
        %453 = vmatpush1.msra.mxu0 0.0
        %454 = vmatprep.subr.mxu0 0.0
        %455 = vmatpush1.msra.mxu0 0.0
        %456 = vmatprep.subr.mxu0 0.0
        %457 = vmatpush1.msra.mxu0 0.0
        %458 = vmatprep.subr.mxu0 0.0
        %459 = vmatpush1.msra.mxu0 0.0
        %460 = vmatprep.subr.mxu0 0.0
        %461 = vmatpush1.msra.mxu0 0.0
        %462 = vmatprep.subr.mxu0 0.0
        %463 = vmatpush1.msra.mxu0 0.0
        %464 = vmatprep.subr.mxu0 0.0
        %465 = vmatpush1.msra.mxu0 0.0
        %466 = vmatprep.subr.mxu0 0.0
        %467 = vmatpush1.msra.mxu0 0.0
        %468 = vmatprep.subr.mxu0 0.0
        %469 = vmatpush1.msra.mxu0 0.0
        %470 = vmatprep.subr.mxu0 0.0
        %471 = vmatpush1.msra.mxu0 0.0
        %472 = vmatprep.subr.mxu0 0.0
        %473 = vmatpush1.msra.mxu0 0.0
        %474 = vmatprep.subr.mxu0 0.0
        %475 = vmatpush1.msra.mxu0 0.0
        %476 = vmatprep.subr.mxu0 0.0
        %477 = vmatpush1.msra.mxu0 0.0
        %478 = vmatprep.subr.mxu0 0.0
        %479 = vmatpush1.msra.mxu0 0.0
        %480 = vmatprep.subr.mxu0 0.0
        %481 = vmatpush1.msra.mxu0 0.0
        %482 = vmatprep.subr.mxu0 0.0
        %483 = vmatpush1.msra.mxu0 0.0
        %484 = vmatprep.subr.mxu0 0.0
        %485 = vmatpush1.msra.mxu0 0.0
        %486 = vmatprep.subr.mxu0 0.0
        %487 = vmatpush1.msra.mxu0 0.0
        %488 = vmatprep.subr.mxu0 0.0
        %489 = vmatpush1.msra.mxu0 0.0
        %490 = vmatprep.subr.mxu0 0.0
        %491 = vmatpush1.msra.mxu0 0.0
        %492 = vmatprep.subr.mxu0 0.0
        %493 = vmatpush1.msra.mxu0 0.0
        %494 = vmatprep.mubr.f32.mxu0 0.0
        %495 = vmatmul.mubr.f32.gmra.mrb[0].mxu0 %v422
        %v496 = vpop.f32.mrb[0].mxu0
        %v497 = vadd.f32 %v417, %v496
        %v498 = vpop.f32.mrb[0].mxu0
        %v499 = vadd.f32 %v419, %v498
        %500 = vdwg.mxu0
        %v501 = vld [vmem:[#allocation2] sm:$0xff]
        %v502 = vld [vmem:[#allocation2 + $0x8] sm:$0xf]
        %v503 = vsel %vm305, 1, 0
        %v504 = vsel %vm306, 1, 0
        %vm505 = vcmp.eq.s32.totalorder %v503, 1
        %vm506 = vcmp.eq.s32.totalorder %v504, 1
        %v509 = vcombine.high %v501, %v501
        %510 = vrot.lane.b32.xlu0 %v501, 15
        %v511 = vpop.permute.xlu0 %510
        %512 = vrot.lane.b32.xlu0 %v509, 15
        %v513 = vpop.permute.xlu0 %512
        %514 = vrot.lane.b32.xlu0 %v502, 15
        %v515 = vpop.permute.xlu0 %514
        %vm516 = vcmask 121856
        %v517 = vsel %vm516, %v511, %v513
        %v518 = vsel %vm516, %v513, %v515
        %v521 = vsel %vm505, %v517, 0.0
        %v522 = vsel %vm506, %v518, 0.0
        %s523 = scalar_lea.vmem [#allocation7], 8
        %v524 = vld [vmem:[%s523] sm:$0xf]
        %v526 = vsel %vm341, %v524, 0
        %v529 = vsel %vm345, %v521, 0
        %v532 = vsel %vm345, %v522, 0
        %534 = vmatprep.subr.mxu0 %v532
        %535 = vmatpush1.msra.mxu0 %v529
        %536 = vmatprep.subr.mxu0 0.0
        %537 = vmatpush1.msra.mxu0 0.0
        %538 = vmatprep.subr.mxu0 0.0
        %539 = vmatpush1.msra.mxu0 0.0
        %540 = vmatprep.subr.mxu0 0.0
        %541 = vmatpush1.msra.mxu0 0.0
        %542 = vmatprep.subr.mxu0 0.0
        %543 = vmatpush1.msra.mxu0 0.0
        %544 = vmatprep.subr.mxu0 0.0
        %545 = vmatpush1.msra.mxu0 0.0
        %546 = vmatprep.subr.mxu0 0.0
        %547 = vmatpush1.msra.mxu0 0.0
        %548 = vmatprep.subr.mxu0 0.0
        %549 = vmatpush1.msra.mxu0 0.0
        %550 = vmatprep.subr.mxu0 0.0
        %551 = vmatpush1.msra.mxu0 0.0
        %552 = vmatprep.subr.mxu0 0.0
        %553 = vmatpush1.msra.mxu0 0.0
        %554 = vmatprep.subr.mxu0 0.0
        %555 = vmatpush1.msra.mxu0 0.0
        %556 = vmatprep.subr.mxu0 0.0
        %557 = vmatpush1.msra.mxu0 0.0
        %558 = vmatprep.subr.mxu0 0.0
        %559 = vmatpush1.msra.mxu0 0.0
        %560 = vmatprep.subr.mxu0 0.0
        %561 = vmatpush1.msra.mxu0 0.0
        %562 = vmatprep.subr.mxu0 0.0
        %563 = vmatpush1.msra.mxu0 0.0
        %564 = vmatprep.subr.mxu0 0.0
        %565 = vmatpush1.msra.mxu0 0.0
        %566 = vmatprep.subr.mxu0 0.0
        %567 = vmatpush1.msra.mxu0 0.0
        %568 = vmatprep.subr.mxu0 0.0
        %569 = vmatpush1.msra.mxu0 0.0
        %570 = vmatprep.subr.mxu0 0.0
        %571 = vmatpush1.msra.mxu0 0.0
        %572 = vmatprep.subr.mxu0 0.0
        %573 = vmatpush1.msra.mxu0 0.0
        %574 = vmatprep.subr.mxu0 0.0
        %575 = vmatpush1.msra.mxu0 0.0
        %576 = vmatprep.subr.mxu0 0.0
        %577 = vmatpush1.msra.mxu0 0.0
        %578 = vmatprep.subr.mxu0 0.0
        %579 = vmatpush1.msra.mxu0 0.0
        %580 = vmatprep.subr.mxu0 0.0
        %581 = vmatpush1.msra.mxu0 0.0
        %582 = vmatprep.subr.mxu0 0.0
        %583 = vmatpush1.msra.mxu0 0.0
        %584 = vmatprep.subr.mxu0 0.0
        %585 = vmatpush1.msra.mxu0 0.0
        %586 = vmatprep.subr.mxu0 0.0
        %587 = vmatpush1.msra.mxu0 0.0
        %588 = vmatprep.subr.mxu0 0.0
        %589 = vmatpush1.msra.mxu0 0.0
        %590 = vmatprep.subr.mxu0 0.0
        %591 = vmatpush1.msra.mxu0 0.0
        %592 = vmatprep.subr.mxu0 0.0
        %593 = vmatpush1.msra.mxu0 0.0
        %594 = vmatprep.subr.mxu0 0.0
        %595 = vmatpush1.msra.mxu0 0.0
        %596 = vmatprep.subr.mxu0 0.0
        %597 = vmatpush1.msra.mxu0 0.0
        %598 = vmatprep.mubr.f32.mxu0 0.0
        %599 = vmatmul.mubr.f32.gmra.mrb[0].mxu0 %v526
        %v600 = vpop.f32.mrb[0].mxu0
        %v601 = vadd.f32 0.0, %v600
        %v602 = vpop.f32.mrb[0].mxu0
        %v603 = vadd.f32 0.0, %v602
        %604 = vdwg.mxu0
        %v605 = vadd.f32 %v497, %v601
        %v606 = vadd.f32 %v499, %v603
        %v607 = vld [vmem:[#allocation2] sm:$0xff]
        %v608 = vld [vmem:[#allocation2 + $0x8] sm:$0xf]
        %v611 = vcombine.high %v607, %v607
        %612 = vrot.lane.b32.xlu0 %v607, 1
        %v613 = vpop.permute.xlu0 %612
        %614 = vrot.lane.b32.xlu0 %v611, 1
        %v615 = vpop.permute.xlu0 %614
        %616 = vrot.lane.b32.xlu0 %v608, 1
        %v617 = vpop.permute.xlu0 %616
        %vm618 = vcmask 7168
        %v619 = vsel %vm618, %v613, %v615
        %v620 = vsel %vm618, %v615, %v617
        %v623 = vsel %vm311, %v619, 0.0
        %v624 = vsel %vm312, %v620, 0.0
        %s625 = scalar_lea.vmem [#allocation7], 12
        %v626 = vld [vmem:[%s625] sm:$0xf]
        %v628 = vsel %vm341, %v626, 0
        %v631 = vsel %vm345, %v623, 0
        %v634 = vsel %vm345, %v624, 0
        %636 = vmatprep.subr.mxu0 %v634
        %637 = vmatpush1.msra.mxu0 %v631
        %638 = vmatprep.subr.mxu0 0.0
        %639 = vmatpush1.msra.mxu0 0.0
        %640 = vmatprep.subr.mxu0 0.0
        %641 = vmatpush1.msra.mxu0 0.0
        %642 = vmatprep.subr.mxu0 0.0
        %643 = vmatpush1.msra.mxu0 0.0
        %644 = vmatprep.subr.mxu0 0.0
        %645 = vmatpush1.msra.mxu0 0.0
        %646 = vmatprep.subr.mxu0 0.0
        %647 = vmatpush1.msra.mxu0 0.0
        %648 = vmatprep.subr.mxu0 0.0
        %649 = vmatpush1.msra.mxu0 0.0
        %650 = vmatprep.subr.mxu0 0.0
        %651 = vmatpush1.msra.mxu0 0.0
        %652 = vmatprep.subr.mxu0 0.0
        %653 = vmatpush1.msra.mxu0 0.0
        %654 = vmatprep.subr.mxu0 0.0
        %655 = vmatpush1.msra.mxu0 0.0
        %656 = vmatprep.subr.mxu0 0.0
        %657 = vmatpush1.msra.mxu0 0.0
        %658 = vmatprep.subr.mxu0 0.0
        %659 = vmatpush1.msra.mxu0 0.0
        %660 = vmatprep.subr.mxu0 0.0
        %661 = vmatpush1.msra.mxu0 0.0
        %662 = vmatprep.subr.mxu0 0.0
        %663 = vmatpush1.msra.mxu0 0.0
        %664 = vmatprep.subr.mxu0 0.0
        %665 = vmatpush1.msra.mxu0 0.0
        %666 = vmatprep.subr.mxu0 0.0
        %667 = vmatpush1.msra.mxu0 0.0
        %668 = vmatprep.subr.mxu0 0.0
        %669 = vmatpush1.msra.mxu0 0.0
        %670 = vmatprep.subr.mxu0 0.0
        %671 = vmatpush1.msra.mxu0 0.0
        %672 = vmatprep.subr.mxu0 0.0
        %673 = vmatpush1.msra.mxu0 0.0
        %674 = vmatprep.subr.mxu0 0.0
        %675 = vmatpush1.msra.mxu0 0.0
        %676 = vmatprep.subr.mxu0 0.0
        %677 = vmatpush1.msra.mxu0 0.0
        %678 = vmatprep.subr.mxu0 0.0
        %679 = vmatpush1.msra.mxu0 0.0
        %680 = vmatprep.subr.mxu0 0.0
        %681 = vmatpush1.msra.mxu0 0.0
        %682 = vmatprep.subr.mxu0 0.0
        %683 = vmatpush1.msra.mxu0 0.0
        %684 = vmatprep.subr.mxu0 0.0
        %685 = vmatpush1.msra.mxu0 0.0
        %686 = vmatprep.subr.mxu0 0.0
        %687 = vmatpush1.msra.mxu0 0.0
        %688 = vmatprep.subr.mxu0 0.0
        %689 = vmatpush1.msra.mxu0 0.0
        %690 = vmatprep.subr.mxu0 0.0
        %691 = vmatpush1.msra.mxu0 0.0
        %692 = vmatprep.subr.mxu0 0.0
        %693 = vmatpush1.msra.mxu0 0.0
        %694 = vmatprep.subr.mxu0 0.0
        %695 = vmatpush1.msra.mxu0 0.0
        %696 = vmatprep.subr.mxu0 0.0
        %697 = vmatpush1.msra.mxu0 0.0
        %698 = vmatprep.subr.mxu0 0.0
        %699 = vmatpush1.msra.mxu0 0.0
        %700 = vmatprep.mubr.f32.mxu0 0.0
        %701 = vmatmul.mubr.f32.gmra.mrb[0].mxu0 %v628
        %v702 = vpop.f32.mrb[0].mxu0
        %v703 = vadd.f32 0.0, %v702
        %v704 = vpop.f32.mrb[0].mxu0
        %v705 = vadd.f32 0.0, %v704
        %706 = vdwg.mxu0
        %v707 = vadd.f32 %v605, %v703
        %v708 = vadd.f32 %v606, %v705
        %v709 = vld [vmem:[#allocation2 + $0x4] sm:$0xff]
        %s710 = scalar_lea.vmem [#allocation7], 16
        %v711 = vld [vmem:[%s710] sm:$0xf]
        %v713 = vcombine.high %v709, %v709
        %v715 = vsel %vm341, %v711, 0
        %v717 = vsel %vm345, %v709, 0
        %v719 = vsel %vm345, %v713, 0
        %721 = vmatprep.subr.mxu0 %v719
        %722 = vmatpush1.msra.mxu0 %v717
        %723 = vmatprep.subr.mxu0 0.0
        %724 = vmatpush1.msra.mxu0 0.0
        %725 = vmatprep.subr.mxu0 0.0
        %726 = vmatpush1.msra.mxu0 0.0
        %727 = vmatprep.subr.mxu0 0.0
        %728 = vmatpush1.msra.mxu0 0.0
        %729 = vmatprep.subr.mxu0 0.0
        %730 = vmatpush1.msra.mxu0 0.0
        %731 = vmatprep.subr.mxu0 0.0
        %732 = vmatpush1.msra.mxu0 0.0
        %733 = vmatprep.subr.mxu0 0.0
        %734 = vmatpush1.msra.mxu0 0.0
        %735 = vmatprep.subr.mxu0 0.0
        %736 = vmatpush1.msra.mxu0 0.0
        %737 = vmatprep.subr.mxu0 0.0
        %738 = vmatpush1.msra.mxu0 0.0
        %739 = vmatprep.subr.mxu0 0.0
        %740 = vmatpush1.msra.mxu0 0.0
        %741 = vmatprep.subr.mxu0 0.0
        %742 = vmatpush1.msra.mxu0 0.0
        %743 = vmatprep.subr.mxu0 0.0
        %744 = vmatpush1.msra.mxu0 0.0
        %745 = vmatprep.subr.mxu0 0.0
        %746 = vmatpush1.msra.mxu0 0.0
        %747 = vmatprep.subr.mxu0 0.0
        %748 = vmatpush1.msra.mxu0 0.0
        %749 = vmatprep.subr.mxu0 0.0
        %750 = vmatpush1.msra.mxu0 0.0
        %751 = vmatprep.subr.mxu0 0.0
        %752 = vmatpush1.msra.mxu0 0.0
        %753 = vmatprep.subr.mxu0 0.0
        %754 = vmatpush1.msra.mxu0 0.0
        %755 = vmatprep.subr.mxu0 0.0
        %756 = vmatpush1.msra.mxu0 0.0
        %757 = vmatprep.subr.mxu0 0.0
        %758 = vmatpush1.msra.mxu0 0.0
        %759 = vmatprep.subr.mxu0 0.0
        %760 = vmatpush1.msra.mxu0 0.0
        %761 = vmatprep.subr.mxu0 0.0
        %762 = vmatpush1.msra.mxu0 0.0
        %763 = vmatprep.subr.mxu0 0.0
        %764 = vmatpush1.msra.mxu0 0.0
        %765 = vmatprep.subr.mxu0 0.0
        %766 = vmatpush1.msra.mxu0 0.0
        %767 = vmatprep.subr.mxu0 0.0
        %768 = vmatpush1.msra.mxu0 0.0
        %769 = vmatprep.subr.mxu0 0.0
        %770 = vmatpush1.msra.mxu0 0.0
        %771 = vmatprep.subr.mxu0 0.0
        %772 = vmatpush1.msra.mxu0 0.0
        %773 = vmatprep.subr.mxu0 0.0
        %774 = vmatpush1.msra.mxu0 0.0
        %775 = vmatprep.subr.mxu0 0.0
        %776 = vmatpush1.msra.mxu0 0.0
        %777 = vmatprep.subr.mxu0 0.0
        %778 = vmatpush1.msra.mxu0 0.0
        %779 = vmatprep.subr.mxu0 0.0
        %780 = vmatpush1.msra.mxu0 0.0
        %781 = vmatprep.subr.mxu0 0.0
        %782 = vmatpush1.msra.mxu0 0.0
        %783 = vmatprep.subr.mxu0 0.0
        %784 = vmatpush1.msra.mxu0 0.0
        %785 = vmatprep.mubr.f32.mxu0 0.0
        %786 = vmatmul.mubr.f32.gmra.mrb[0].mxu0 %v715
        %v787 = vpop.f32.mrb[0].mxu0
        %v788 = vadd.f32 0.0, %v787
        %v789 = vpop.f32.mrb[0].mxu0
        %v790 = vadd.f32 0.0, %v789
        %791 = vdwg.mxu0
        %v792 = vadd.f32 %v707, %v788
        %v793 = vadd.f32 %v708, %v790
        %v794 = vld [vmem:[#allocation2 + $0x4] sm:$0xff]
        %v795 = vld [vmem:[#allocation2 + $0xc] sm:$0xf]
        %v798 = vcombine.high %v794, %v794
        %799 = vrot.lane.b32.xlu0 %v794, 127
        %v800 = vpop.permute.xlu0 %799
        %801 = vrot.lane.b32.xlu0 %v798, 127
        %v802 = vpop.permute.xlu0 %801
        %803 = vrot.lane.b32.xlu0 %v795, 127
        %v804 = vpop.permute.xlu0 %803
        %vm805 = vcmask 1039360
        %v806 = vsel %vm805, %v800, %v802
        %v807 = vsel %vm805, %v802, %v804
        %v810 = vsel %vm505, %v806, 0.0
        %v811 = vsel %vm506, %v807, 0.0
        %s812 = scalar_lea.vmem [#allocation7], 20
        %v813 = vld [vmem:[%s812] sm:$0xf]
        %v815 = vsel %vm341, %v813, 0
        %v818 = vsel %vm345, %v810, 0
        %v821 = vsel %vm345, %v811, 0
        %823 = vmatprep.subr.mxu0 %v821
        %824 = vmatpush1.msra.mxu0 %v818
        %825 = vmatprep.subr.mxu0 0.0
        %826 = vmatpush1.msra.mxu0 0.0
        %827 = vmatprep.subr.mxu0 0.0
        %828 = vmatpush1.msra.mxu0 0.0
        %829 = vmatprep.subr.mxu0 0.0
        %830 = vmatpush1.msra.mxu0 0.0
        %831 = vmatprep.subr.mxu0 0.0
        %832 = vmatpush1.msra.mxu0 0.0
        %833 = vmatprep.subr.mxu0 0.0
        %834 = vmatpush1.msra.mxu0 0.0
        %835 = vmatprep.subr.mxu0 0.0
        %836 = vmatpush1.msra.mxu0 0.0
        %837 = vmatprep.subr.mxu0 0.0
        %838 = vmatpush1.msra.mxu0 0.0
        %839 = vmatprep.subr.mxu0 0.0
        %840 = vmatpush1.msra.mxu0 0.0
        %841 = vmatprep.subr.mxu0 0.0
        %842 = vmatpush1.msra.mxu0 0.0
        %843 = vmatprep.subr.mxu0 0.0
        %844 = vmatpush1.msra.mxu0 0.0
        %845 = vmatprep.subr.mxu0 0.0
        %846 = vmatpush1.msra.mxu0 0.0
        %847 = vmatprep.subr.mxu0 0.0
        %848 = vmatpush1.msra.mxu0 0.0
        %849 = vmatprep.subr.mxu0 0.0
        %850 = vmatpush1.msra.mxu0 0.0
        %851 = vmatprep.subr.mxu0 0.0
        %852 = vmatpush1.msra.mxu0 0.0
        %853 = vmatprep.subr.mxu0 0.0
        %854 = vmatpush1.msra.mxu0 0.0
        %855 = vmatprep.subr.mxu0 0.0
        %856 = vmatpush1.msra.mxu0 0.0
        %857 = vmatprep.subr.mxu0 0.0
        %858 = vmatpush1.msra.mxu0 0.0
        %859 = vmatprep.subr.mxu0 0.0
        %860 = vmatpush1.msra.mxu0 0.0
        %861 = vmatprep.subr.mxu0 0.0
        %862 = vmatpush1.msra.mxu0 0.0
        %863 = vmatprep.subr.mxu0 0.0
        %864 = vmatpush1.msra.mxu0 0.0
        %865 = vmatprep.subr.mxu0 0.0
        %866 = vmatpush1.msra.mxu0 0.0
        %867 = vmatprep.subr.mxu0 0.0
        %868 = vmatpush1.msra.mxu0 0.0
        %869 = vmatprep.subr.mxu0 0.0
        %870 = vmatpush1.msra.mxu0 0.0
        %871 = vmatprep.subr.mxu0 0.0
        %872 = vmatpush1.msra.mxu0 0.0
        %873 = vmatprep.subr.mxu0 0.0
        %874 = vmatpush1.msra.mxu0 0.0
        %875 = vmatprep.subr.mxu0 0.0
        %876 = vmatpush1.msra.mxu0 0.0
        %877 = vmatprep.subr.mxu0 0.0
        %878 = vmatpush1.msra.mxu0 0.0
        %879 = vmatprep.subr.mxu0 0.0
        %880 = vmatpush1.msra.mxu0 0.0
        %881 = vmatprep.subr.mxu0 0.0
        %882 = vmatpush1.msra.mxu0 0.0
        %883 = vmatprep.subr.mxu0 0.0
        %884 = vmatpush1.msra.mxu0 0.0
        %885 = vmatprep.subr.mxu0 0.0
        %886 = vmatpush1.msra.mxu0 0.0
        %887 = vmatprep.mubr.f32.mxu0 0.0
        %888 = vmatmul.mubr.f32.gmra.mrb[0].mxu0 %v815
        %v889 = vpop.f32.mrb[0].mxu0
        %v890 = vadd.f32 0.0, %v889
        %v891 = vpop.f32.mrb[0].mxu0
        %v892 = vadd.f32 0.0, %v891
        %893 = vdwg.mxu0
        %v894 = vadd.f32 %v792, %v890
        %v895 = vadd.f32 %v793, %v892
        %v896 = vld [vmem:[#allocation2 + $0x4] sm:$0xff]
        %v897 = vld [vmem:[#allocation2 + $0xc] sm:$0xf]
        %v900 = vcombine.high %v896, %v896
        %901 = vrot.lane.b32.xlu0 %v896, 113
        %v902 = vpop.permute.xlu0 %901
        %903 = vrot.lane.b32.xlu0 %v900, 113
        %v904 = vpop.permute.xlu0 %903
        %905 = vrot.lane.b32.xlu0 %v897, 113
        %v906 = vpop.permute.xlu0 %905
        %vm907 = vcmask 924672
        %v908 = vsel %vm907, %v902, %v904
        %v909 = vsel %vm907, %v904, %v906
        %v912 = vsel %vm311, %v908, 0.0
        %v913 = vsel %vm312, %v909, 0.0
        %s914 = scalar_lea.vmem [#allocation7], 24
        %v915 = vld [vmem:[%s914] sm:$0xf]
        %v917 = vsel %vm341, %v915, 0
        %v920 = vsel %vm345, %v912, 0
        %v923 = vsel %vm345, %v913, 0
        %925 = vmatprep.subr.mxu0 %v923
        %926 = vmatpush1.msra.mxu0 %v920
        %927 = vmatprep.subr.mxu0 0.0
        %928 = vmatpush1.msra.mxu0 0.0
        %929 = vmatprep.subr.mxu0 0.0
        %930 = vmatpush1.msra.mxu0 0.0
        %931 = vmatprep.subr.mxu0 0.0
        %932 = vmatpush1.msra.mxu0 0.0
        %933 = vmatprep.subr.mxu0 0.0
        %934 = vmatpush1.msra.mxu0 0.0
        %935 = vmatprep.subr.mxu0 0.0
        %936 = vmatpush1.msra.mxu0 0.0
        %937 = vmatprep.subr.mxu0 0.0
        %938 = vmatpush1.msra.mxu0 0.0
        %939 = vmatprep.subr.mxu0 0.0
        %940 = vmatpush1.msra.mxu0 0.0
        %941 = vmatprep.subr.mxu0 0.0
        %942 = vmatpush1.msra.mxu0 0.0
        %943 = vmatprep.subr.mxu0 0.0
        %944 = vmatpush1.msra.mxu0 0.0
        %945 = vmatprep.subr.mxu0 0.0
        %946 = vmatpush1.msra.mxu0 0.0
        %947 = vmatprep.subr.mxu0 0.0
        %948 = vmatpush1.msra.mxu0 0.0
        %949 = vmatprep.subr.mxu0 0.0
        %950 = vmatpush1.msra.mxu0 0.0
        %951 = vmatprep.subr.mxu0 0.0
        %952 = vmatpush1.msra.mxu0 0.0
        %953 = vmatprep.subr.mxu0 0.0
        %954 = vmatpush1.msra.mxu0 0.0
        %955 = vmatprep.subr.mxu0 0.0
        %956 = vmatpush1.msra.mxu0 0.0
        %957 = vmatprep.subr.mxu0 0.0
        %958 = vmatpush1.msra.mxu0 0.0
        %959 = vmatprep.subr.mxu0 0.0
        %960 = vmatpush1.msra.mxu0 0.0
        %961 = vmatprep.subr.mxu0 0.0
        %962 = vmatpush1.msra.mxu0 0.0
        %963 = vmatprep.subr.mxu0 0.0
        %964 = vmatpush1.msra.mxu0 0.0
        %965 = vmatprep.subr.mxu0 0.0
        %966 = vmatpush1.msra.mxu0 0.0
        %967 = vmatprep.subr.mxu0 0.0
        %968 = vmatpush1.msra.mxu0 0.0
        %969 = vmatprep.subr.mxu0 0.0
        %970 = vmatpush1.msra.mxu0 0.0
        %971 = vmatprep.subr.mxu0 0.0
        %972 = vmatpush1.msra.mxu0 0.0
        %973 = vmatprep.subr.mxu0 0.0
        %974 = vmatpush1.msra.mxu0 0.0
        %975 = vmatprep.subr.mxu0 0.0
        %976 = vmatpush1.msra.mxu0 0.0
        %977 = vmatprep.subr.mxu0 0.0
        %978 = vmatpush1.msra.mxu0 0.0
        %979 = vmatprep.subr.mxu0 0.0
        %980 = vmatpush1.msra.mxu0 0.0
        %981 = vmatprep.subr.mxu0 0.0
        %982 = vmatpush1.msra.mxu0 0.0
        %983 = vmatprep.subr.mxu0 0.0
        %984 = vmatpush1.msra.mxu0 0.0
        %985 = vmatprep.subr.mxu0 0.0
        %986 = vmatpush1.msra.mxu0 0.0
        %987 = vmatprep.subr.mxu0 0.0
        %988 = vmatpush1.msra.mxu0 0.0
        %989 = vmatprep.mubr.f32.mxu0 0.0
        %990 = vmatmul.mubr.f32.gmra.mrb[0].mxu0 %v917
        %v991 = vpop.f32.mrb[0].mxu0
        %v992 = vadd.f32 0.0, %v991
        %v993 = vpop.f32.mrb[0].mxu0
        %v994 = vadd.f32 0.0, %v993
        %995 = vdwg.mxu0
        %v996 = vadd.f32 %v894, %v992
        %v997 = vadd.f32 %v895, %v994
        %v998 = vld [vmem:[#allocation2 + $0x4] sm:$0xff]
        %v999 = vld [vmem:[#allocation2 + $0xc] sm:$0xf]
        %s1000 = scalar_lea.vmem [#allocation7], 28
        %v1001 = vld [vmem:[%s1000] sm:$0xf]
        %v1004 = vcombine.high %v998, %v998
        %1005 = vrot.lane.b32.xlu0 %v998, 112
        %v1006 = vpop.permute.xlu0 %1005
        %1007 = vrot.lane.b32.xlu0 %v1004, 112
        %v1008 = vpop.permute.xlu0 %1007
        %1009 = vrot.lane.b32.xlu0 %v999, 112
        %v1010 = vpop.permute.xlu0 %1009
        %vm1011 = vcmask 916480
        %v1012 = vsel %vm1011, %v1006, %v1008
        %v1013 = vsel %vm1011, %v1008, %v1010
        %v1015 = vsel %vm341, %v1001, 0
        %v1017 = vsel %vm345, %v1012, 0
        %v1019 = vsel %vm345, %v1013, 0
        %1021 = vmatprep.subr.mxu0 %v1019
        %1022 = vmatpush1.msra.mxu0 %v1017
        %1023 = vmatprep.subr.mxu0 0.0
        %1024 = vmatpush1.msra.mxu0 0.0
        %1025 = vmatprep.subr.mxu0 0.0
        %1026 = vmatpush1.msra.mxu0 0.0
        %1027 = vmatprep.subr.mxu0 0.0
        %1028 = vmatpush1.msra.mxu0 0.0
        %1029 = vmatprep.subr.mxu0 0.0
        %1030 = vmatpush1.msra.mxu0 0.0
        %1031 = vmatprep.subr.mxu0 0.0
        %1032 = vmatpush1.msra.mxu0 0.0
        %1033 = vmatprep.subr.mxu0 0.0
        %1034 = vmatpush1.msra.mxu0 0.0
        %1035 = vmatprep.subr.mxu0 0.0
        %1036 = vmatpush1.msra.mxu0 0.0
        %1037 = vmatprep.subr.mxu0 0.0
        %1038 = vmatpush1.msra.mxu0 0.0
        %1039 = vmatprep.subr.mxu0 0.0
        %1040 = vmatpush1.msra.mxu0 0.0
        %1041 = vmatprep.subr.mxu0 0.0
        %1042 = vmatpush1.msra.mxu0 0.0
        %1043 = vmatprep.subr.mxu0 0.0
        %1044 = vmatpush1.msra.mxu0 0.0
        %1045 = vmatprep.subr.mxu0 0.0
        %1046 = vmatpush1.msra.mxu0 0.0
        %1047 = vmatprep.subr.mxu0 0.0
        %1048 = vmatpush1.msra.mxu0 0.0
        %1049 = vmatprep.subr.mxu0 0.0
        %1050 = vmatpush1.msra.mxu0 0.0
        %1051 = vmatprep.subr.mxu0 0.0
        %1052 = vmatpush1.msra.mxu0 0.0
        %1053 = vmatprep.subr.mxu0 0.0
        %1054 = vmatpush1.msra.mxu0 0.0
        %1055 = vmatprep.subr.mxu0 0.0
        %1056 = vmatpush1.msra.mxu0 0.0
        %1057 = vmatprep.subr.mxu0 0.0
        %1058 = vmatpush1.msra.mxu0 0.0
        %1059 = vmatprep.subr.mxu0 0.0
        %1060 = vmatpush1.msra.mxu0 0.0
        %1061 = vmatprep.subr.mxu0 0.0
        %1062 = vmatpush1.msra.mxu0 0.0
        %1063 = vmatprep.subr.mxu0 0.0
        %1064 = vmatpush1.msra.mxu0 0.0
        %1065 = vmatprep.subr.mxu0 0.0
        %1066 = vmatpush1.msra.mxu0 0.0
        %1067 = vmatprep.subr.mxu0 0.0
        %1068 = vmatpush1.msra.mxu0 0.0
        %1069 = vmatprep.subr.mxu0 0.0
        %1070 = vmatpush1.msra.mxu0 0.0
        %1071 = vmatprep.subr.mxu0 0.0
        %1072 = vmatpush1.msra.mxu0 0.0
        %1073 = vmatprep.subr.mxu0 0.0
        %1074 = vmatpush1.msra.mxu0 0.0
        %1075 = vmatprep.subr.mxu0 0.0
        %1076 = vmatpush1.msra.mxu0 0.0
        %1077 = vmatprep.subr.mxu0 0.0
        %1078 = vmatpush1.msra.mxu0 0.0
        %1079 = vmatprep.subr.mxu0 0.0
        %1080 = vmatpush1.msra.mxu0 0.0
        %1081 = vmatprep.subr.mxu0 0.0
        %1082 = vmatpush1.msra.mxu0 0.0
        %1083 = vmatprep.subr.mxu0 0.0
        %1084 = vmatpush1.msra.mxu0 0.0
        %1085 = vmatprep.mubr.f32.mxu0 0.0
        %1086 = vmatmul.mubr.f32.gmra.mrb[0].mxu0 %v1015
        %v1087 = vpop.f32.mrb[0].mxu0
        %v1088 = vadd.f32 0.0, %v1087
        %v1089 = vpop.f32.mrb[0].mxu0
        %v1090 = vadd.f32 0.0, %v1089
        %1091 = vdwg.mxu0
        %v1092 = vadd.f32 %v996, %v1088
        %v1093 = vadd.f32 %v997, %v1090
        %v1094 = vld [vmem:[#allocation2 + $0x4] sm:$0xff]
        %v1095 = vld [vmem:[#allocation2 + $0xc] sm:$0xf]
        %v1098 = vcombine.high %v1094, %v1094
        %1099 = vrot.lane.b32.xlu0 %v1094, 111
        %v1100 = vpop.permute.xlu0 %1099
        %1101 = vrot.lane.b32.xlu0 %v1098, 111
        %v1102 = vpop.permute.xlu0 %1101
        %1103 = vrot.lane.b32.xlu0 %v1095, 111
        %v1104 = vpop.permute.xlu0 %1103
        %vm1105 = vcmask 908288
        %v1106 = vsel %vm1105, %v1100, %v1102
        %v1107 = vsel %vm1105, %v1102, %v1104
        %v1110 = vsel %vm505, %v1106, 0.0
        %v1111 = vsel %vm506, %v1107, 0.0
        %s1112 = scalar_lea.vmem [#allocation7], 32
        %v1113 = vld [vmem:[%s1112] sm:$0xf]
        %v1115 = vsel %vm341, %v1113, 0
        %v1118 = vsel %vm345, %v1110, 0
        %v1121 = vsel %vm345, %v1111, 0
        %1123 = vmatprep.subr.mxu0 %v1121
        %1124 = vmatpush1.msra.mxu0 %v1118
        %1125 = vmatprep.subr.mxu0 0.0
        %1126 = vmatpush1.msra.mxu0 0.0
        %1127 = vmatprep.subr.mxu0 0.0
        %1128 = vmatpush1.msra.mxu0 0.0
        %1129 = vmatprep.subr.mxu0 0.0
        %1130 = vmatpush1.msra.mxu0 0.0
        %1131 = vmatprep.subr.mxu0 0.0
        %1132 = vmatpush1.msra.mxu0 0.0
        %1133 = vmatprep.subr.mxu0 0.0
        %1134 = vmatpush1.msra.mxu0 0.0
        %1135 = vmatprep.subr.mxu0 0.0
        %1136 = vmatpush1.msra.mxu0 0.0
        %1137 = vmatprep.subr.mxu0 0.0
        %1138 = vmatpush1.msra.mxu0 0.0
        %1139 = vmatprep.subr.mxu0 0.0
        %1140 = vmatpush1.msra.mxu0 0.0
        %1141 = vmatprep.subr.mxu0 0.0
        %1142 = vmatpush1.msra.mxu0 0.0
        %1143 = vmatprep.subr.mxu0 0.0
        %1144 = vmatpush1.msra.mxu0 0.0
        %1145 = vmatprep.subr.mxu0 0.0
        %1146 = vmatpush1.msra.mxu0 0.0
        %1147 = vmatprep.subr.mxu0 0.0
        %1148 = vmatpush1.msra.mxu0 0.0
        %1149 = vmatprep.subr.mxu0 0.0
        %1150 = vmatpush1.msra.mxu0 0.0
        %1151 = vmatprep.subr.mxu0 0.0
        %1152 = vmatpush1.msra.mxu0 0.0
        %1153 = vmatprep.subr.mxu0 0.0
        %1154 = vmatpush1.msra.mxu0 0.0
        %1155 = vmatprep.subr.mxu0 0.0
        %1156 = vmatpush1.msra.mxu0 0.0
        %1157 = vmatprep.subr.mxu0 0.0
        %1158 = vmatpush1.msra.mxu0 0.0
        %1159 = vmatprep.subr.mxu0 0.0
        %1160 = vmatpush1.msra.mxu0 0.0
        %1161 = vmatprep.subr.mxu0 0.0
        %1162 = vmatpush1.msra.mxu0 0.0
        %1163 = vmatprep.subr.mxu0 0.0
        %1164 = vmatpush1.msra.mxu0 0.0
        %1165 = vmatprep.subr.mxu0 0.0
        %1166 = vmatpush1.msra.mxu0 0.0
        %1167 = vmatprep.subr.mxu0 0.0
        %1168 = vmatpush1.msra.mxu0 0.0
        %1169 = vmatprep.subr.mxu0 0.0
        %1170 = vmatpush1.msra.mxu0 0.0
        %1171 = vmatprep.subr.mxu0 0.0
        %1172 = vmatpush1.msra.mxu0 0.0
        %1173 = vmatprep.subr.mxu0 0.0
        %1174 = vmatpush1.msra.mxu0 0.0
        %1175 = vmatprep.subr.mxu0 0.0
        %1176 = vmatpush1.msra.mxu0 0.0
        %1177 = vmatprep.subr.mxu0 0.0
        %1178 = vmatpush1.msra.mxu0 0.0
        %1179 = vmatprep.subr.mxu0 0.0
        %1180 = vmatpush1.msra.mxu0 0.0
        %1181 = vmatprep.subr.mxu0 0.0
        %1182 = vmatpush1.msra.mxu0 0.0
        %1183 = vmatprep.subr.mxu0 0.0
        %1184 = vmatpush1.msra.mxu0 0.0
        %1185 = vmatprep.subr.mxu0 0.0
        %1186 = vmatpush1.msra.mxu0 0.0
        %1187 = vmatprep.mubr.f32.mxu0 0.0
        %1188 = vmatmul.mubr.f32.gmra.mrb[0].mxu0 %v1115
        %v1189 = vpop.f32.mrb[0].mxu0
        %v1190 = vadd.f32 0.0, %v1189
        %v1191 = vpop.f32.mrb[0].mxu0
        %v1192 = vadd.f32 0.0, %v1191
        %1193 = vdwg.mxu0
        %v1194 = vadd.f32 %v1092, %v1190
        %v1195 = vadd.f32 %v1093, %v1192
        %v1196 = vld [vmem:[%s2] sm:$0xf]
        %1198 = vset.pattern.permute.xlu0 0
        %1199 = vperm.xlu0 %1198, %v1196
        %v1200 = vpop.permute.xlu0 %1199
        %v1202 = vadd.f32 %v1194, %v1200
        %v1203 = vadd.f32 %v1195, %v1200
        %v1204 = vmax.f32 %v1202, 0.0
        %v1205 = vmax.f32 %v1203, 0.0
        %v1208 = vcombine.low %v1204, %v1205
        %1210 = vst [vmem:[#allocation3 + $0x4] sm:$0xff] %v1208
        %v1211 = vld [vmem:[#allocation3] sm:$0xff]
        %v1212 = vld [vmem:[#allocation3 + $0x8] sm:$0xf]
        %v1215 = vcombine.high %v1211, %v1211
        %1216 = vrot.lane.b32.xlu0 %v1211, 17
        %v1217 = vpop.permute.xlu0 %1216
        %1218 = vrot.lane.b32.xlu0 %v1215, 17
        %v1219 = vpop.permute.xlu0 %1218
        %1220 = vrot.lane.b32.xlu0 %v1212, 17
        %v1221 = vpop.permute.xlu0 %1220
        %v1222 = vsel %vm322, %v1217, %v1219
        %v1223 = vsel %vm322, %v1219, %v1221
        %v1226 = vsel %vm311, %v1222, 0.0
        %v1227 = vsel %vm312, %v1223, 0.0
        %v1228 = vld [vmem:[#allocation9] sm:$0xf]
        %s1229 = scalar_lea.vmem [#allocation9], 4
        %v1230 = vld [vmem:[%s1229] sm:$0xf]
        %1231 = vrot.lane.b32.xlu0 %v1211, 16
        %v1232 = vpop.permute.xlu0 %1231
        %1233 = vrot.lane.b32.xlu0 %v1215, 16
        %v1234 = vpop.permute.xlu0 %1233
        %1235 = vrot.lane.b32.xlu0 %v1212, 16
        %v1236 = vpop.permute.xlu0 %1235
        %v1237 = vsel %vm338, %v1232, %v1234
        %v1238 = vsel %vm338, %v1234, %v1236
        %v1240 = vsel %vm341, %v1230, 0
        %v1242 = vsel %vm345, %v1237, 0
        %v1244 = vsel %vm345, %v1238, 0
        %1246 = vmatprep.subr.mxu0 %v1244
        %1247 = vmatpush1.msra.mxu0 %v1242
        %1248 = vmatprep.subr.mxu0 0.0
        %1249 = vmatpush1.msra.mxu0 0.0
        %1250 = vmatprep.subr.mxu0 0.0
        %1251 = vmatpush1.msra.mxu0 0.0
        %1252 = vmatprep.subr.mxu0 0.0
        %1253 = vmatpush1.msra.mxu0 0.0
        %1254 = vmatprep.subr.mxu0 0.0
        %1255 = vmatpush1.msra.mxu0 0.0
        %1256 = vmatprep.subr.mxu0 0.0
        %1257 = vmatpush1.msra.mxu0 0.0
        %1258 = vmatprep.subr.mxu0 0.0
        %1259 = vmatpush1.msra.mxu0 0.0
        %1260 = vmatprep.subr.mxu0 0.0
        %1261 = vmatpush1.msra.mxu0 0.0
        %1262 = vmatprep.subr.mxu0 0.0
        %1263 = vmatpush1.msra.mxu0 0.0
        %1264 = vmatprep.subr.mxu0 0.0
        %1265 = vmatpush1.msra.mxu0 0.0
        %1266 = vmatprep.subr.mxu0 0.0
        %1267 = vmatpush1.msra.mxu0 0.0
        %1268 = vmatprep.subr.mxu0 0.0
        %1269 = vmatpush1.msra.mxu0 0.0
        %1270 = vmatprep.subr.mxu0 0.0
        %1271 = vmatpush1.msra.mxu0 0.0
        %1272 = vmatprep.subr.mxu0 0.0
        %1273 = vmatpush1.msra.mxu0 0.0
        %1274 = vmatprep.subr.mxu0 0.0
        %1275 = vmatpush1.msra.mxu0 0.0
        %1276 = vmatprep.subr.mxu0 0.0
        %1277 = vmatpush1.msra.mxu0 0.0
        %1278 = vmatprep.subr.mxu0 0.0
        %1279 = vmatpush1.msra.mxu0 0.0
        %1280 = vmatprep.subr.mxu0 0.0
        %1281 = vmatpush1.msra.mxu0 0.0
        %1282 = vmatprep.subr.mxu0 0.0
        %1283 = vmatpush1.msra.mxu0 0.0
        %1284 = vmatprep.subr.mxu0 0.0
        %1285 = vmatpush1.msra.mxu0 0.0
        %1286 = vmatprep.subr.mxu0 0.0
        %1287 = vmatpush1.msra.mxu0 0.0
        %1288 = vmatprep.subr.mxu0 0.0
        %1289 = vmatpush1.msra.mxu0 0.0
        %1290 = vmatprep.subr.mxu0 0.0
        %1291 = vmatpush1.msra.mxu0 0.0
        %1292 = vmatprep.subr.mxu0 0.0
        %1293 = vmatpush1.msra.mxu0 0.0
        %1294 = vmatprep.subr.mxu0 0.0
        %1295 = vmatpush1.msra.mxu0 0.0
        %1296 = vmatprep.subr.mxu0 0.0
        %1297 = vmatpush1.msra.mxu0 0.0
        %1298 = vmatprep.subr.mxu0 0.0
        %1299 = vmatpush1.msra.mxu0 0.0
        %1300 = vmatprep.subr.mxu0 0.0
        %1301 = vmatpush1.msra.mxu0 0.0
        %1302 = vmatprep.subr.mxu0 0.0
        %1303 = vmatpush1.msra.mxu0 0.0
        %1304 = vmatprep.subr.mxu0 0.0
        %1305 = vmatpush1.msra.mxu0 0.0
        %1306 = vmatprep.subr.mxu0 0.0
        %1307 = vmatpush1.msra.mxu0 0.0
        %1308 = vmatprep.subr.mxu0 0.0
        %1309 = vmatpush1.msra.mxu0 0.0
        %1310 = vmatprep.mubr.f32.mxu0 0.0
        %1311 = vmatmul.mubr.f32.gmra.mrb[0].mxu0 %v1240
        %v1312 = vpop.f32.mrb[0].mxu0
        %v1313 = vadd.f32 0.0, %v1312
        %v1314 = vpop.f32.mrb[0].mxu0
        %v1315 = vadd.f32 0.0, %v1314
        %1316 = vdwg.mxu0
        %v1318 = vsel %vm341, %v1228, 0
        %v1321 = vsel %vm345, %v1226, 0
        %v1324 = vsel %vm345, %v1227, 0
        %1326 = vmatprep.subr.mxu0 %v1324
        %1327 = vmatpush1.msra.mxu0 %v1321
        %1328 = vmatprep.subr.mxu0 0.0
        %1329 = vmatpush1.msra.mxu0 0.0
        %1330 = vmatprep.subr.mxu0 0.0
        %1331 = vmatpush1.msra.mxu0 0.0
        %1332 = vmatprep.subr.mxu0 0.0
        %1333 = vmatpush1.msra.mxu0 0.0
        %1334 = vmatprep.subr.mxu0 0.0
        %1335 = vmatpush1.msra.mxu0 0.0
        %1336 = vmatprep.subr.mxu0 0.0
        %1337 = vmatpush1.msra.mxu0 0.0
        %1338 = vmatprep.subr.mxu0 0.0
        %1339 = vmatpush1.msra.mxu0 0.0
        %1340 = vmatprep.subr.mxu0 0.0
        %1341 = vmatpush1.msra.mxu0 0.0
        %1342 = vmatprep.subr.mxu0 0.0
        %1343 = vmatpush1.msra.mxu0 0.0
        %1344 = vmatprep.subr.mxu0 0.0
        %1345 = vmatpush1.msra.mxu0 0.0
        %1346 = vmatprep.subr.mxu0 0.0
        %1347 = vmatpush1.msra.mxu0 0.0
        %1348 = vmatprep.subr.mxu0 0.0
        %1349 = vmatpush1.msra.mxu0 0.0
        %1350 = vmatprep.subr.mxu0 0.0
        %1351 = vmatpush1.msra.mxu0 0.0
        %1352 = vmatprep.subr.mxu0 0.0
        %1353 = vmatpush1.msra.mxu0 0.0
        %1354 = vmatprep.subr.mxu0 0.0
        %1355 = vmatpush1.msra.mxu0 0.0
        %1356 = vmatprep.subr.mxu0 0.0
        %1357 = vmatpush1.msra.mxu0 0.0
        %1358 = vmatprep.subr.mxu0 0.0
        %1359 = vmatpush1.msra.mxu0 0.0
        %1360 = vmatprep.subr.mxu0 0.0
        %1361 = vmatpush1.msra.mxu0 0.0
        %1362 = vmatprep.subr.mxu0 0.0
        %1363 = vmatpush1.msra.mxu0 0.0
        %1364 = vmatprep.subr.mxu0 0.0
        %1365 = vmatpush1.msra.mxu0 0.0
        %1366 = vmatprep.subr.mxu0 0.0
        %1367 = vmatpush1.msra.mxu0 0.0
        %1368 = vmatprep.subr.mxu0 0.0
        %1369 = vmatpush1.msra.mxu0 0.0
        %1370 = vmatprep.subr.mxu0 0.0
        %1371 = vmatpush1.msra.mxu0 0.0
        %1372 = vmatprep.subr.mxu0 0.0
        %1373 = vmatpush1.msra.mxu0 0.0
        %1374 = vmatprep.subr.mxu0 0.0
        %1375 = vmatpush1.msra.mxu0 0.0
        %1376 = vmatprep.subr.mxu0 0.0
        %1377 = vmatpush1.msra.mxu0 0.0
        %1378 = vmatprep.subr.mxu0 0.0
        %1379 = vmatpush1.msra.mxu0 0.0
        %1380 = vmatprep.subr.mxu0 0.0
        %1381 = vmatpush1.msra.mxu0 0.0
        %1382 = vmatprep.subr.mxu0 0.0
        %1383 = vmatpush1.msra.mxu0 0.0
        %1384 = vmatprep.subr.mxu0 0.0
        %1385 = vmatpush1.msra.mxu0 0.0
        %1386 = vmatprep.subr.mxu0 0.0
        %1387 = vmatpush1.msra.mxu0 0.0
        %1388 = vmatprep.subr.mxu0 0.0
        %1389 = vmatpush1.msra.mxu0 0.0
        %1390 = vmatprep.mubr.f32.mxu0 0.0
        %1391 = vmatmul.mubr.f32.gmra.mrb[0].mxu0 %v1318
        %v1392 = vpop.f32.mrb[0].mxu0
        %v1393 = vadd.f32 %v1313, %v1392
        %v1394 = vpop.f32.mrb[0].mxu0
        %v1395 = vadd.f32 %v1315, %v1394
        %1396 = vdwg.mxu0
        %v1397 = vld [vmem:[#allocation3] sm:$0xff]
        %v1398 = vld [vmem:[#allocation3 + $0x8] sm:$0xf]
        %v1401 = vcombine.high %v1397, %v1397
        %1402 = vrot.lane.b32.xlu0 %v1397, 15
        %v1403 = vpop.permute.xlu0 %1402
        %1404 = vrot.lane.b32.xlu0 %v1401, 15
        %v1405 = vpop.permute.xlu0 %1404
        %1406 = vrot.lane.b32.xlu0 %v1398, 15
        %v1407 = vpop.permute.xlu0 %1406
        %v1408 = vsel %vm516, %v1403, %v1405
        %v1409 = vsel %vm516, %v1405, %v1407
        %v1412 = vsel %vm505, %v1408, 0.0
        %v1413 = vsel %vm506, %v1409, 0.0
        %s1414 = scalar_lea.vmem [#allocation9], 8
        %v1415 = vld [vmem:[%s1414] sm:$0xf]
        %v1417 = vsel %vm341, %v1415, 0
        %v1420 = vsel %vm345, %v1412, 0
        %v1423 = vsel %vm345, %v1413, 0
        %1425 = vmatprep.subr.mxu0 %v1423
        %1426 = vmatpush1.msra.mxu0 %v1420
        %1427 = vmatprep.subr.mxu0 0.0
        %1428 = vmatpush1.msra.mxu0 0.0
        %1429 = vmatprep.subr.mxu0 0.0
        %1430 = vmatpush1.msra.mxu0 0.0
        %1431 = vmatprep.subr.mxu0 0.0
        %1432 = vmatpush1.msra.mxu0 0.0
        %1433 = vmatprep.subr.mxu0 0.0
        %1434 = vmatpush1.msra.mxu0 0.0
        %1435 = vmatprep.subr.mxu0 0.0
        %1436 = vmatpush1.msra.mxu0 0.0
        %1437 = vmatprep.subr.mxu0 0.0
        %1438 = vmatpush1.msra.mxu0 0.0
        %1439 = vmatprep.subr.mxu0 0.0
        %1440 = vmatpush1.msra.mxu0 0.0
        %1441 = vmatprep.subr.mxu0 0.0
        %1442 = vmatpush1.msra.mxu0 0.0
        %1443 = vmatprep.subr.mxu0 0.0
        %1444 = vmatpush1.msra.mxu0 0.0
        %1445 = vmatprep.subr.mxu0 0.0
        %1446 = vmatpush1.msra.mxu0 0.0
        %1447 = vmatprep.subr.mxu0 0.0
        %1448 = vmatpush1.msra.mxu0 0.0
        %1449 = vmatprep.subr.mxu0 0.0
        %1450 = vmatpush1.msra.mxu0 0.0
        %1451 = vmatprep.subr.mxu0 0.0
        %1452 = vmatpush1.msra.mxu0 0.0
        %1453 = vmatprep.subr.mxu0 0.0
        %1454 = vmatpush1.msra.mxu0 0.0
        %1455 = vmatprep.subr.mxu0 0.0
        %1456 = vmatpush1.msra.mxu0 0.0
        %1457 = vmatprep.subr.mxu0 0.0
        %1458 = vmatpush1.msra.mxu0 0.0
        %1459 = vmatprep.subr.mxu0 0.0
        %1460 = vmatpush1.msra.mxu0 0.0
        %1461 = vmatprep.subr.mxu0 0.0
        %1462 = vmatpush1.msra.mxu0 0.0
        %1463 = vmatprep.subr.mxu0 0.0
        %1464 = vmatpush1.msra.mxu0 0.0
        %1465 = vmatprep.subr.mxu0 0.0
        %1466 = vmatpush1.msra.mxu0 0.0
        %1467 = vmatprep.subr.mxu0 0.0
        %1468 = vmatpush1.msra.mxu0 0.0
        %1469 = vmatprep.subr.mxu0 0.0
        %1470 = vmatpush1.msra.mxu0 0.0
        %1471 = vmatprep.subr.mxu0 0.0
        %1472 = vmatpush1.msra.mxu0 0.0
        %1473 = vmatprep.subr.mxu0 0.0
        %1474 = vmatpush1.msra.mxu0 0.0
        %1475 = vmatprep.subr.mxu0 0.0
        %1476 = vmatpush1.msra.mxu0 0.0
        %1477 = vmatprep.subr.mxu0 0.0
        %1478 = vmatpush1.msra.mxu0 0.0
        %1479 = vmatprep.subr.mxu0 0.0
        %1480 = vmatpush1.msra.mxu0 0.0
        %1481 = vmatprep.subr.mxu0 0.0
        %1482 = vmatpush1.msra.mxu0 0.0
        %1483 = vmatprep.subr.mxu0 0.0
        %1484 = vmatpush1.msra.mxu0 0.0
        %1485 = vmatprep.subr.mxu0 0.0
        %1486 = vmatpush1.msra.mxu0 0.0
        %1487 = vmatprep.subr.mxu0 0.0
        %1488 = vmatpush1.msra.mxu0 0.0
        %1489 = vmatprep.mubr.f32.mxu0 0.0
        %1490 = vmatmul.mubr.f32.gmra.mrb[0].mxu0 %v1417
        %v1491 = vpop.f32.mrb[0].mxu0
        %v1492 = vadd.f32 0.0, %v1491
        %v1493 = vpop.f32.mrb[0].mxu0
        %v1494 = vadd.f32 0.0, %v1493
        %1495 = vdwg.mxu0
        %v1496 = vadd.f32 %v1393, %v1492
        %v1497 = vadd.f32 %v1395, %v1494
        %v1498 = vld [vmem:[#allocation3] sm:$0xff]
        %v1499 = vld [vmem:[#allocation3 + $0x8] sm:$0xf]
        %v1502 = vcombine.high %v1498, %v1498
        %1503 = vrot.lane.b32.xlu0 %v1498, 1
        %v1504 = vpop.permute.xlu0 %1503
        %1505 = vrot.lane.b32.xlu0 %v1502, 1
        %v1506 = vpop.permute.xlu0 %1505
        %1507 = vrot.lane.b32.xlu0 %v1499, 1
        %v1508 = vpop.permute.xlu0 %1507
        %v1509 = vsel %vm618, %v1504, %v1506
        %v1510 = vsel %vm618, %v1506, %v1508
        %v1513 = vsel %vm311, %v1509, 0.0
        %v1514 = vsel %vm312, %v1510, 0.0
        %s1515 = scalar_lea.vmem [#allocation9], 12
        %v1516 = vld [vmem:[%s1515] sm:$0xf]
        %v1518 = vsel %vm341, %v1516, 0
        %v1521 = vsel %vm345, %v1513, 0
        %v1524 = vsel %vm345, %v1514, 0
        %1526 = vmatprep.subr.mxu0 %v1524
        %1527 = vmatpush1.msra.mxu0 %v1521
        %1528 = vmatprep.subr.mxu0 0.0
        %1529 = vmatpush1.msra.mxu0 0.0
        %1530 = vmatprep.subr.mxu0 0.0
        %1531 = vmatpush1.msra.mxu0 0.0
        %1532 = vmatprep.subr.mxu0 0.0
        %1533 = vmatpush1.msra.mxu0 0.0
        %1534 = vmatprep.subr.mxu0 0.0
        %1535 = vmatpush1.msra.mxu0 0.0
        %1536 = vmatprep.subr.mxu0 0.0
        %1537 = vmatpush1.msra.mxu0 0.0
        %1538 = vmatprep.subr.mxu0 0.0
        %1539 = vmatpush1.msra.mxu0 0.0
        %1540 = vmatprep.subr.mxu0 0.0
        %1541 = vmatpush1.msra.mxu0 0.0
        %1542 = vmatprep.subr.mxu0 0.0
        %1543 = vmatpush1.msra.mxu0 0.0
        %1544 = vmatprep.subr.mxu0 0.0
        %1545 = vmatpush1.msra.mxu0 0.0
        %1546 = vmatprep.subr.mxu0 0.0
        %1547 = vmatpush1.msra.mxu0 0.0
        %1548 = vmatprep.subr.mxu0 0.0
        %1549 = vmatpush1.msra.mxu0 0.0
        %1550 = vmatprep.subr.mxu0 0.0
        %1551 = vmatpush1.msra.mxu0 0.0
        %1552 = vmatprep.subr.mxu0 0.0
        %1553 = vmatpush1.msra.mxu0 0.0
        %1554 = vmatprep.subr.mxu0 0.0
        %1555 = vmatpush1.msra.mxu0 0.0
        %1556 = vmatprep.subr.mxu0 0.0
        %1557 = vmatpush1.msra.mxu0 0.0
        %1558 = vmatprep.subr.mxu0 0.0
        %1559 = vmatpush1.msra.mxu0 0.0
        %1560 = vmatprep.subr.mxu0 0.0
        %1561 = vmatpush1.msra.mxu0 0.0
        %1562 = vmatprep.subr.mxu0 0.0
        %1563 = vmatpush1.msra.mxu0 0.0
        %1564 = vmatprep.subr.mxu0 0.0
        %1565 = vmatpush1.msra.mxu0 0.0
        %1566 = vmatprep.subr.mxu0 0.0
        %1567 = vmatpush1.msra.mxu0 0.0
        %1568 = vmatprep.subr.mxu0 0.0
        %1569 = vmatpush1.msra.mxu0 0.0
        %1570 = vmatprep.subr.mxu0 0.0
        %1571 = vmatpush1.msra.mxu0 0.0
        %1572 = vmatprep.subr.mxu0 0.0
        %1573 = vmatpush1.msra.mxu0 0.0
        %1574 = vmatprep.subr.mxu0 0.0
        %1575 = vmatpush1.msra.mxu0 0.0
        %1576 = vmatprep.subr.mxu0 0.0
        %1577 = vmatpush1.msra.mxu0 0.0
        %1578 = vmatprep.subr.mxu0 0.0
        %1579 = vmatpush1.msra.mxu0 0.0
        %1580 = vmatprep.subr.mxu0 0.0
        %1581 = vmatpush1.msra.mxu0 0.0
        %1582 = vmatprep.subr.mxu0 0.0
        %1583 = vmatpush1.msra.mxu0 0.0
        %1584 = vmatprep.subr.mxu0 0.0
        %1585 = vmatpush1.msra.mxu0 0.0
        %1586 = vmatprep.subr.mxu0 0.0
        %1587 = vmatpush1.msra.mxu0 0.0
        %1588 = vmatprep.subr.mxu0 0.0
        %1589 = vmatpush1.msra.mxu0 0.0
        %1590 = vmatprep.mubr.f32.mxu0 0.0
        %1591 = vmatmul.mubr.f32.gmra.mrb[0].mxu0 %v1518
        %v1592 = vpop.f32.mrb[0].mxu0
        %v1593 = vadd.f32 0.0, %v1592
        %v1594 = vpop.f32.mrb[0].mxu0
        %v1595 = vadd.f32 0.0, %v1594
        %1596 = vdwg.mxu0
        %v1597 = vadd.f32 %v1496, %v1593
        %v1598 = vadd.f32 %v1497, %v1595
        %v1599 = vld [vmem:[#allocation3 + $0x4] sm:$0xff]
        %s1600 = scalar_lea.vmem [#allocation9], 16
        %v1601 = vld [vmem:[%s1600] sm:$0xf]
        %v1603 = vcombine.high %v1599, %v1599
        %v1605 = vsel %vm341, %v1601, 0
        %v1607 = vsel %vm345, %v1599, 0
        %v1609 = vsel %vm345, %v1603, 0
        %1611 = vmatprep.subr.mxu0 %v1609
        %1612 = vmatpush1.msra.mxu0 %v1607
        %1613 = vmatprep.subr.mxu0 0.0
        %1614 = vmatpush1.msra.mxu0 0.0
        %1615 = vmatprep.subr.mxu0 0.0
        %1616 = vmatpush1.msra.mxu0 0.0
        %1617 = vmatprep.subr.mxu0 0.0
        %1618 = vmatpush1.msra.mxu0 0.0
        %1619 = vmatprep.subr.mxu0 0.0
        %1620 = vmatpush1.msra.mxu0 0.0
        %1621 = vmatprep.subr.mxu0 0.0
        %1622 = vmatpush1.msra.mxu0 0.0
        %1623 = vmatprep.subr.mxu0 0.0
        %1624 = vmatpush1.msra.mxu0 0.0
        %1625 = vmatprep.subr.mxu0 0.0
        %1626 = vmatpush1.msra.mxu0 0.0
        %1627 = vmatprep.subr.mxu0 0.0
        %1628 = vmatpush1.msra.mxu0 0.0
        %1629 = vmatprep.subr.mxu0 0.0
        %1630 = vmatpush1.msra.mxu0 0.0
        %1631 = vmatprep.subr.mxu0 0.0
        %1632 = vmatpush1.msra.mxu0 0.0
        %1633 = vmatprep.subr.mxu0 0.0
        %1634 = vmatpush1.msra.mxu0 0.0
        %1635 = vmatprep.subr.mxu0 0.0
        %1636 = vmatpush1.msra.mxu0 0.0
        %1637 = vmatprep.subr.mxu0 0.0
        %1638 = vmatpush1.msra.mxu0 0.0
        %1639 = vmatprep.subr.mxu0 0.0
        %1640 = vmatpush1.msra.mxu0 0.0
        %1641 = vmatprep.subr.mxu0 0.0
        %1642 = vmatpush1.msra.mxu0 0.0
        %1643 = vmatprep.subr.mxu0 0.0
        %1644 = vmatpush1.msra.mxu0 0.0
        %1645 = vmatprep.subr.mxu0 0.0
        %1646 = vmatpush1.msra.mxu0 0.0
        %1647 = vmatprep.subr.mxu0 0.0
        %1648 = vmatpush1.msra.mxu0 0.0
        %1649 = vmatprep.subr.mxu0 0.0
        %1650 = vmatpush1.msra.mxu0 0.0
        %1651 = vmatprep.subr.mxu0 0.0
        %1652 = vmatpush1.msra.mxu0 0.0
        %1653 = vmatprep.subr.mxu0 0.0
        %1654 = vmatpush1.msra.mxu0 0.0
        %1655 = vmatprep.subr.mxu0 0.0
        %1656 = vmatpush1.msra.mxu0 0.0
        %1657 = vmatprep.subr.mxu0 0.0
        %1658 = vmatpush1.msra.mxu0 0.0
        %1659 = vmatprep.subr.mxu0 0.0
        %1660 = vmatpush1.msra.mxu0 0.0
        %1661 = vmatprep.subr.mxu0 0.0
        %1662 = vmatpush1.msra.mxu0 0.0
        %1663 = vmatprep.subr.mxu0 0.0
        %1664 = vmatpush1.msra.mxu0 0.0
        %1665 = vmatprep.subr.mxu0 0.0
        %1666 = vmatpush1.msra.mxu0 0.0
        %1667 = vmatprep.subr.mxu0 0.0
        %1668 = vmatpush1.msra.mxu0 0.0
        %1669 = vmatprep.subr.mxu0 0.0
        %1670 = vmatpush1.msra.mxu0 0.0
        %1671 = vmatprep.subr.mxu0 0.0
        %1672 = vmatpush1.msra.mxu0 0.0
        %1673 = vmatprep.subr.mxu0 0.0
        %1674 = vmatpush1.msra.mxu0 0.0
        %1675 = vmatprep.mubr.f32.mxu0 0.0
        %1676 = vmatmul.mubr.f32.gmra.mrb[0].mxu0 %v1605
        %v1677 = vpop.f32.mrb[0].mxu0
        %v1678 = vadd.f32 0.0, %v1677
        %v1679 = vpop.f32.mrb[0].mxu0
        %v1680 = vadd.f32 0.0, %v1679
        %1681 = vdwg.mxu0
        %v1682 = vadd.f32 %v1597, %v1678
        %v1683 = vadd.f32 %v1598, %v1680
        %v1684 = vld [vmem:[#allocation3 + $0x4] sm:$0xff]
        %v1685 = vld [vmem:[#allocation3 + $0xc] sm:$0xf]
        %v1688 = vcombine.high %v1684, %v1684
        %1689 = vrot.lane.b32.xlu0 %v1684, 127
        %v1690 = vpop.permute.xlu0 %1689
        %1691 = vrot.lane.b32.xlu0 %v1688, 127
        %v1692 = vpop.permute.xlu0 %1691
        %1693 = vrot.lane.b32.xlu0 %v1685, 127
        %v1694 = vpop.permute.xlu0 %1693
        %v1695 = vsel %vm805, %v1690, %v1692
        %v1696 = vsel %vm805, %v1692, %v1694
        %v1699 = vsel %vm505, %v1695, 0.0
        %v1700 = vsel %vm506, %v1696, 0.0
        %s1701 = scalar_lea.vmem [#allocation9], 20
        %v1702 = vld [vmem:[%s1701] sm:$0xf]
        %v1704 = vsel %vm341, %v1702, 0
        %v1707 = vsel %vm345, %v1699, 0
        %v1710 = vsel %vm345, %v1700, 0
        %1712 = vmatprep.subr.mxu0 %v1710
        %1713 = vmatpush1.msra.mxu0 %v1707
        %1714 = vmatprep.subr.mxu0 0.0
        %1715 = vmatpush1.msra.mxu0 0.0
        %1716 = vmatprep.subr.mxu0 0.0
        %1717 = vmatpush1.msra.mxu0 0.0
        %1718 = vmatprep.subr.mxu0 0.0
        %1719 = vmatpush1.msra.mxu0 0.0
        %1720 = vmatprep.subr.mxu0 0.0
        %1721 = vmatpush1.msra.mxu0 0.0
        %1722 = vmatprep.subr.mxu0 0.0
        %1723 = vmatpush1.msra.mxu0 0.0
        %1724 = vmatprep.subr.mxu0 0.0
        %1725 = vmatpush1.msra.mxu0 0.0
        %1726 = vmatprep.subr.mxu0 0.0
        %1727 = vmatpush1.msra.mxu0 0.0
        %1728 = vmatprep.subr.mxu0 0.0
        %1729 = vmatpush1.msra.mxu0 0.0
        %1730 = vmatprep.subr.mxu0 0.0
        %1731 = vmatpush1.msra.mxu0 0.0
        %1732 = vmatprep.subr.mxu0 0.0
        %1733 = vmatpush1.msra.mxu0 0.0
        %1734 = vmatprep.subr.mxu0 0.0
        %1735 = vmatpush1.msra.mxu0 0.0
        %1736 = vmatprep.subr.mxu0 0.0
        %1737 = vmatpush1.msra.mxu0 0.0
        %1738 = vmatprep.subr.mxu0 0.0
        %1739 = vmatpush1.msra.mxu0 0.0
        %1740 = vmatprep.subr.mxu0 0.0
        %1741 = vmatpush1.msra.mxu0 0.0
        %1742 = vmatprep.subr.mxu0 0.0
        %1743 = vmatpush1.msra.mxu0 0.0
        %1744 = vmatprep.subr.mxu0 0.0
        %1745 = vmatpush1.msra.mxu0 0.0
        %1746 = vmatprep.subr.mxu0 0.0
        %1747 = vmatpush1.msra.mxu0 0.0
        %1748 = vmatprep.subr.mxu0 0.0
        %1749 = vmatpush1.msra.mxu0 0.0
        %1750 = vmatprep.subr.mxu0 0.0
        %1751 = vmatpush1.msra.mxu0 0.0
        %1752 = vmatprep.subr.mxu0 0.0
        %1753 = vmatpush1.msra.mxu0 0.0
        %1754 = vmatprep.subr.mxu0 0.0
        %1755 = vmatpush1.msra.mxu0 0.0
        %1756 = vmatprep.subr.mxu0 0.0
        %1757 = vmatpush1.msra.mxu0 0.0
        %1758 = vmatprep.subr.mxu0 0.0
        %1759 = vmatpush1.msra.mxu0 0.0
        %1760 = vmatprep.subr.mxu0 0.0
        %1761 = vmatpush1.msra.mxu0 0.0
        %1762 = vmatprep.subr.mxu0 0.0
        %1763 = vmatpush1.msra.mxu0 0.0
        %1764 = vmatprep.subr.mxu0 0.0
        %1765 = vmatpush1.msra.mxu0 0.0
        %1766 = vmatprep.subr.mxu0 0.0
        %1767 = vmatpush1.msra.mxu0 0.0
        %1768 = vmatprep.subr.mxu0 0.0
        %1769 = vmatpush1.msra.mxu0 0.0
        %1770 = vmatprep.subr.mxu0 0.0
        %1771 = vmatpush1.msra.mxu0 0.0
        %1772 = vmatprep.subr.mxu0 0.0
        %1773 = vmatpush1.msra.mxu0 0.0
        %1774 = vmatprep.subr.mxu0 0.0
        %1775 = vmatpush1.msra.mxu0 0.0
        %1776 = vmatprep.mubr.f32.mxu0 0.0
        %1777 = vmatmul.mubr.f32.gmra.mrb[0].mxu0 %v1704
        %v1778 = vpop.f32.mrb[0].mxu0
        %v1779 = vadd.f32 0.0, %v1778
        %v1780 = vpop.f32.mrb[0].mxu0
        %v1781 = vadd.f32 0.0, %v1780
        %1782 = vdwg.mxu0
        %v1783 = vadd.f32 %v1682, %v1779
        %v1784 = vadd.f32 %v1683, %v1781
        %v1785 = vld [vmem:[#allocation3 + $0x4] sm:$0xff]
        %v1786 = vld [vmem:[#allocation3 + $0xc] sm:$0xf]
        %v1789 = vcombine.high %v1785, %v1785
        %1790 = vrot.lane.b32.xlu0 %v1785, 113
        %v1791 = vpop.permute.xlu0 %1790
        %1792 = vrot.lane.b32.xlu0 %v1789, 113
        %v1793 = vpop.permute.xlu0 %1792
        %1794 = vrot.lane.b32.xlu0 %v1786, 113
        %v1795 = vpop.permute.xlu0 %1794
        %v1796 = vsel %vm907, %v1791, %v1793
        %v1797 = vsel %vm907, %v1793, %v1795
        %v1800 = vsel %vm311, %v1796, 0.0
        %v1801 = vsel %vm312, %v1797, 0.0
        %s1802 = scalar_lea.vmem [#allocation9], 24
        %v1803 = vld [vmem:[%s1802] sm:$0xf]
        %v1805 = vsel %vm341, %v1803, 0
        %v1808 = vsel %vm345, %v1800, 0
        %v1811 = vsel %vm345, %v1801, 0
        %1813 = vmatprep.subr.mxu0 %v1811
        %1814 = vmatpush1.msra.mxu0 %v1808
        %1815 = vmatprep.subr.mxu0 0.0
        %1816 = vmatpush1.msra.mxu0 0.0
        %1817 = vmatprep.subr.mxu0 0.0
        %1818 = vmatpush1.msra.mxu0 0.0
        %1819 = vmatprep.subr.mxu0 0.0
        %1820 = vmatpush1.msra.mxu0 0.0
        %1821 = vmatprep.subr.mxu0 0.0
        %1822 = vmatpush1.msra.mxu0 0.0
        %1823 = vmatprep.subr.mxu0 0.0
        %1824 = vmatpush1.msra.mxu0 0.0
        %1825 = vmatprep.subr.mxu0 0.0
        %1826 = vmatpush1.msra.mxu0 0.0
        %1827 = vmatprep.subr.mxu0 0.0
        %1828 = vmatpush1.msra.mxu0 0.0
        %1829 = vmatprep.subr.mxu0 0.0
        %1830 = vmatpush1.msra.mxu0 0.0
        %1831 = vmatprep.subr.mxu0 0.0
        %1832 = vmatpush1.msra.mxu0 0.0
        %1833 = vmatprep.subr.mxu0 0.0
        %1834 = vmatpush1.msra.mxu0 0.0
        %1835 = vmatprep.subr.mxu0 0.0
        %1836 = vmatpush1.msra.mxu0 0.0
        %1837 = vmatprep.subr.mxu0 0.0
        %1838 = vmatpush1.msra.mxu0 0.0
        %1839 = vmatprep.subr.mxu0 0.0
        %1840 = vmatpush1.msra.mxu0 0.0
        %1841 = vmatprep.subr.mxu0 0.0
        %1842 = vmatpush1.msra.mxu0 0.0
        %1843 = vmatprep.subr.mxu0 0.0
        %1844 = vmatpush1.msra.mxu0 0.0
        %1845 = vmatprep.subr.mxu0 0.0
        %1846 = vmatpush1.msra.mxu0 0.0
        %1847 = vmatprep.subr.mxu0 0.0
        %1848 = vmatpush1.msra.mxu0 0.0
        %1849 = vmatprep.subr.mxu0 0.0
        %1850 = vmatpush1.msra.mxu0 0.0
        %1851 = vmatprep.subr.mxu0 0.0
        %1852 = vmatpush1.msra.mxu0 0.0
        %1853 = vmatprep.subr.mxu0 0.0
        %1854 = vmatpush1.msra.mxu0 0.0
        %1855 = vmatprep.subr.mxu0 0.0
        %1856 = vmatpush1.msra.mxu0 0.0
        %1857 = vmatprep.subr.mxu0 0.0
        %1858 = vmatpush1.msra.mxu0 0.0
        %1859 = vmatprep.subr.mxu0 0.0
        %1860 = vmatpush1.msra.mxu0 0.0
        %1861 = vmatprep.subr.mxu0 0.0
        %1862 = vmatpush1.msra.mxu0 0.0
        %1863 = vmatprep.subr.mxu0 0.0
        %1864 = vmatpush1.msra.mxu0 0.0
        %1865 = vmatprep.subr.mxu0 0.0
        %1866 = vmatpush1.msra.mxu0 0.0
        %1867 = vmatprep.subr.mxu0 0.0
        %1868 = vmatpush1.msra.mxu0 0.0
        %1869 = vmatprep.subr.mxu0 0.0
        %1870 = vmatpush1.msra.mxu0 0.0
        %1871 = vmatprep.subr.mxu0 0.0
        %1872 = vmatpush1.msra.mxu0 0.0
        %1873 = vmatprep.subr.mxu0 0.0
        %1874 = vmatpush1.msra.mxu0 0.0
        %1875 = vmatprep.subr.mxu0 0.0
        %1876 = vmatpush1.msra.mxu0 0.0
        %1877 = vmatprep.mubr.f32.mxu0 0.0
        %1878 = vmatmul.mubr.f32.gmra.mrb[0].mxu0 %v1805
        %v1879 = vpop.f32.mrb[0].mxu0
        %v1880 = vadd.f32 0.0, %v1879
        %v1881 = vpop.f32.mrb[0].mxu0
        %v1882 = vadd.f32 0.0, %v1881
        %1883 = vdwg.mxu0
        %v1884 = vadd.f32 %v1783, %v1880
        %v1885 = vadd.f32 %v1784, %v1882
        %v1886 = vld [vmem:[#allocation3 + $0x4] sm:$0xff]
        %v1887 = vld [vmem:[#allocation3 + $0xc] sm:$0xf]
        %s1888 = scalar_lea.vmem [#allocation9], 28
        %v1889 = vld [vmem:[%s1888] sm:$0xf]
        %v1892 = vcombine.high %v1886, %v1886
        %1893 = vrot.lane.b32.xlu0 %v1886, 112
        %v1894 = vpop.permute.xlu0 %1893
        %1895 = vrot.lane.b32.xlu0 %v1892, 112
        %v1896 = vpop.permute.xlu0 %1895
        %1897 = vrot.lane.b32.xlu0 %v1887, 112
        %v1898 = vpop.permute.xlu0 %1897
        %v1899 = vsel %vm1011, %v1894, %v1896
        %v1900 = vsel %vm1011, %v1896, %v1898
        %v1902 = vsel %vm341, %v1889, 0
        %v1904 = vsel %vm345, %v1899, 0
        %v1906 = vsel %vm345, %v1900, 0
        %1908 = vmatprep.subr.mxu0 %v1906
        %1909 = vmatpush1.msra.mxu0 %v1904
        %1910 = vmatprep.subr.mxu0 0.0
        %1911 = vmatpush1.msra.mxu0 0.0
        %1912 = vmatprep.subr.mxu0 0.0
        %1913 = vmatpush1.msra.mxu0 0.0
        %1914 = vmatprep.subr.mxu0 0.0
        %1915 = vmatpush1.msra.mxu0 0.0
        %1916 = vmatprep.subr.mxu0 0.0
        %1917 = vmatpush1.msra.mxu0 0.0
        %1918 = vmatprep.subr.mxu0 0.0
        %1919 = vmatpush1.msra.mxu0 0.0
        %1920 = vmatprep.subr.mxu0 0.0
        %1921 = vmatpush1.msra.mxu0 0.0
        %1922 = vmatprep.subr.mxu0 0.0
        %1923 = vmatpush1.msra.mxu0 0.0
        %1924 = vmatprep.subr.mxu0 0.0
        %1925 = vmatpush1.msra.mxu0 0.0
        %1926 = vmatprep.subr.mxu0 0.0
        %1927 = vmatpush1.msra.mxu0 0.0
        %1928 = vmatprep.subr.mxu0 0.0
        %1929 = vmatpush1.msra.mxu0 0.0
        %1930 = vmatprep.subr.mxu0 0.0
        %1931 = vmatpush1.msra.mxu0 0.0
        %1932 = vmatprep.subr.mxu0 0.0
        %1933 = vmatpush1.msra.mxu0 0.0
        %1934 = vmatprep.subr.mxu0 0.0
        %1935 = vmatpush1.msra.mxu0 0.0
        %1936 = vmatprep.subr.mxu0 0.0
        %1937 = vmatpush1.msra.mxu0 0.0
        %1938 = vmatprep.subr.mxu0 0.0
        %1939 = vmatpush1.msra.mxu0 0.0
        %1940 = vmatprep.subr.mxu0 0.0
        %1941 = vmatpush1.msra.mxu0 0.0
        %1942 = vmatprep.subr.mxu0 0.0
        %1943 = vmatpush1.msra.mxu0 0.0
        %1944 = vmatprep.subr.mxu0 0.0
        %1945 = vmatpush1.msra.mxu0 0.0
        %1946 = vmatprep.subr.mxu0 0.0
        %1947 = vmatpush1.msra.mxu0 0.0
        %1948 = vmatprep.subr.mxu0 0.0
        %1949 = vmatpush1.msra.mxu0 0.0
        %1950 = vmatprep.subr.mxu0 0.0
        %1951 = vmatpush1.msra.mxu0 0.0
        %1952 = vmatprep.subr.mxu0 0.0
        %1953 = vmatpush1.msra.mxu0 0.0
        %1954 = vmatprep.subr.mxu0 0.0
        %1955 = vmatpush1.msra.mxu0 0.0
        %1956 = vmatprep.subr.mxu0 0.0
        %1957 = vmatpush1.msra.mxu0 0.0
        %1958 = vmatprep.subr.mxu0 0.0
        %1959 = vmatpush1.msra.mxu0 0.0
        %1960 = vmatprep.subr.mxu0 0.0
        %1961 = vmatpush1.msra.mxu0 0.0
        %1962 = vmatprep.subr.mxu0 0.0
        %1963 = vmatpush1.msra.mxu0 0.0
        %1964 = vmatprep.subr.mxu0 0.0
        %1965 = vmatpush1.msra.mxu0 0.0
        %1966 = vmatprep.subr.mxu0 0.0
        %1967 = vmatpush1.msra.mxu0 0.0
        %1968 = vmatprep.subr.mxu0 0.0
        %1969 = vmatpush1.msra.mxu0 0.0
        %1970 = vmatprep.subr.mxu0 0.0
        %1971 = vmatpush1.msra.mxu0 0.0
        %1972 = vmatprep.mubr.f32.mxu0 0.0
        %1973 = vmatmul.mubr.f32.gmra.mrb[0].mxu0 %v1902
        %v1974 = vpop.f32.mrb[0].mxu0
        %v1975 = vadd.f32 0.0, %v1974
        %v1976 = vpop.f32.mrb[0].mxu0
        %v1977 = vadd.f32 0.0, %v1976
        %1978 = vdwg.mxu0
        %v1979 = vadd.f32 %v1884, %v1975
        %v1980 = vadd.f32 %v1885, %v1977
        %v1981 = vld [vmem:[#allocation3 + $0x4] sm:$0xff]
        %v1982 = vld [vmem:[#allocation3 + $0xc] sm:$0xf]
        %v1985 = vcombine.high %v1981, %v1981
        %1986 = vrot.lane.b32.xlu0 %v1981, 111
        %v1987 = vpop.permute.xlu0 %1986
        %1988 = vrot.lane.b32.xlu0 %v1985, 111
        %v1989 = vpop.permute.xlu0 %1988
        %1990 = vrot.lane.b32.xlu0 %v1982, 111
        %v1991 = vpop.permute.xlu0 %1990
        %v1992 = vsel %vm1105, %v1987, %v1989
        %v1993 = vsel %vm1105, %v1989, %v1991
        %v1996 = vsel %vm505, %v1992, 0.0
        %v1997 = vsel %vm506, %v1993, 0.0
        %s1998 = scalar_lea.vmem [#allocation9], 32
        %v1999 = vld [vmem:[%s1998] sm:$0xf]
        %v2001 = vsel %vm341, %v1999, 0
        %v2004 = vsel %vm345, %v1996, 0
        %v2007 = vsel %vm345, %v1997, 0
        %2009 = vmatprep.subr.mxu0 %v2007
        %2010 = vmatpush1.msra.mxu0 %v2004
        %2011 = vmatprep.subr.mxu0 0.0
        %2012 = vmatpush1.msra.mxu0 0.0
        %2013 = vmatprep.subr.mxu0 0.0
        %2014 = vmatpush1.msra.mxu0 0.0
        %2015 = vmatprep.subr.mxu0 0.0
        %2016 = vmatpush1.msra.mxu0 0.0
        %2017 = vmatprep.subr.mxu0 0.0
        %2018 = vmatpush1.msra.mxu0 0.0
        %2019 = vmatprep.subr.mxu0 0.0
        %2020 = vmatpush1.msra.mxu0 0.0
        %2021 = vmatprep.subr.mxu0 0.0
        %2022 = vmatpush1.msra.mxu0 0.0
        %2023 = vmatprep.subr.mxu0 0.0
        %2024 = vmatpush1.msra.mxu0 0.0
        %2025 = vmatprep.subr.mxu0 0.0
        %2026 = vmatpush1.msra.mxu0 0.0
        %2027 = vmatprep.subr.mxu0 0.0
        %2028 = vmatpush1.msra.mxu0 0.0
        %2029 = vmatprep.subr.mxu0 0.0
        %2030 = vmatpush1.msra.mxu0 0.0
        %2031 = vmatprep.subr.mxu0 0.0
        %2032 = vmatpush1.msra.mxu0 0.0
        %2033 = vmatprep.subr.mxu0 0.0
        %2034 = vmatpush1.msra.mxu0 0.0
        %2035 = vmatprep.subr.mxu0 0.0
        %2036 = vmatpush1.msra.mxu0 0.0
        %2037 = vmatprep.subr.mxu0 0.0
        %2038 = vmatpush1.msra.mxu0 0.0
        %2039 = vmatprep.subr.mxu0 0.0
        %2040 = vmatpush1.msra.mxu0 0.0
        %2041 = vmatprep.subr.mxu0 0.0
        %2042 = vmatpush1.msra.mxu0 0.0
        %2043 = vmatprep.subr.mxu0 0.0
        %2044 = vmatpush1.msra.mxu0 0.0
        %2045 = vmatprep.subr.mxu0 0.0
        %2046 = vmatpush1.msra.mxu0 0.0
        %2047 = vmatprep.subr.mxu0 0.0
        %2048 = vmatpush1.msra.mxu0 0.0
        %2049 = vmatprep.subr.mxu0 0.0
        %2050 = vmatpush1.msra.mxu0 0.0
        %2051 = vmatprep.subr.mxu0 0.0
        %2052 = vmatpush1.msra.mxu0 0.0
        %2053 = vmatprep.subr.mxu0 0.0
        %2054 = vmatpush1.msra.mxu0 0.0
        %2055 = vmatprep.subr.mxu0 0.0
        %2056 = vmatpush1.msra.mxu0 0.0
        %2057 = vmatprep.subr.mxu0 0.0
        %2058 = vmatpush1.msra.mxu0 0.0
        %2059 = vmatprep.subr.mxu0 0.0
        %2060 = vmatpush1.msra.mxu0 0.0
        %2061 = vmatprep.subr.mxu0 0.0
        %2062 = vmatpush1.msra.mxu0 0.0
        %2063 = vmatprep.subr.mxu0 0.0
        %2064 = vmatpush1.msra.mxu0 0.0
        %2065 = vmatprep.subr.mxu0 0.0
        %2066 = vmatpush1.msra.mxu0 0.0
        %2067 = vmatprep.subr.mxu0 0.0
        %2068 = vmatpush1.msra.mxu0 0.0
        %2069 = vmatprep.subr.mxu0 0.0
        %2070 = vmatpush1.msra.mxu0 0.0
        %2071 = vmatprep.subr.mxu0 0.0
        %2072 = vmatpush1.msra.mxu0 0.0
        %2073 = vmatprep.mubr.f32.mxu0 0.0
        %2074 = vmatmul.mubr.f32.gmra.mrb[0].mxu0 %v2001
        %v2075 = vpop.f32.mrb[0].mxu0
        %v2076 = vadd.f32 0.0, %v2075
        %v2077 = vpop.f32.mrb[0].mxu0
        %v2078 = vadd.f32 0.0, %v2077
        %2079 = vdwg.mxu0
        %v2080 = vadd.f32 %v1979, %v2076
        %v2081 = vadd.f32 %v1980, %v2078
        %v2082 = vld [vmem:[%s4] sm:$0xf]
        %2084 = vset.pattern.permute.xlu0 0
        %2085 = vperm.xlu0 %2084, %v2082
        %v2086 = vpop.permute.xlu0 %2085
        %v2088 = vadd.f32 %v2080, %v2086
        %v2089 = vadd.f32 %v2081, %v2086
        %v2091 = vcombine.high %v274, %v274
        %v2093 = vadd.f32 %v2088, %v274
        %v2094 = vadd.f32 %v2089, %v2091
        %v2095 = vmax.f32 %v2093, 0.0
        %v2096 = vmax.f32 %v2094, 0.0
        %v2099 = vcombine.low %v2095, %v2096
        %2101 = vst [vmem:[%s269] sm:$0xff] %v2099
        %s2102 = sand.u32 %s141, 1
        %s2103 = scalar_lea.sflag [#allocation6], %s2102
        %s2104 = sand.u32 %s141, 1
        %s2105 = smul.addr %s2104, 8
        %s2106 = scalar_lea.vmem [#allocation10], %s2105
        // Predicated region
        $region53: #{tpu_custom_call.1} parent=39 // pred_check
          %p2107 = pneg %p151
        $region54: #{tpu_custom_call.1} parent=39 // pred_check_branch
          %2109 = sbr.rel (%p2107) target = $region56
        $region55: #{tpu_custom_call.1} parent=39 // pred_region
          %s2111 = ssub.s32 128, 128
          %2112 = vsyncadd %s2103, %s2111
          %s2113 = smul.addr %s23, 2
          %s2114 = smul.addr %s2113, 64
          %s2115 = scalar_lea.hbm %s5, %s2114
          %s2117 = sshll.u32 %s2106, 4
          %s2118 = int_to_ptr.vmem [resolvable:$true] %s2117
          %2120 = dma.vmem_to_hbm [thread:$0]  %s2118, 128, %s2115, %s2103
        $region56: #{tpu_custom_call.1} parent=39 // pred_fallthru
          _
      $region40: #{tpu_custom_call.1} parent=5 // pred_fallthru
        _
      %p2121 = scmp.le.s32.totalorder 2, %s18
      // Predicated region
      $region57: #{tpu_custom_call.1} parent=5 // pred_check
        %p2122 = pneg %p2121
      $region58: #{tpu_custom_call.1} parent=5 // pred_check_branch
        %2124 = sbr.rel (%p2122) target = $region60
      $region59: #{tpu_custom_call.1} parent=5 // pred_region
        %s2125 = ssub.s32 %s18, 2
        // Predicated region
        $region61: #{tpu_custom_call.1} parent=59 // pred_check
          %p2126 = pneg %p157
        $region62: #{tpu_custom_call.1} parent=59 // pred_check_branch
          %2128 = sbr.rel (%p2126) target = $region64
        $region63: #{tpu_custom_call.1} parent=59 // pred_region
          %s2129 = sand.u32 %s142, 1
          %s2130 = scalar_lea.sflag [#allocation6], %s2129
          %s2131 = sand.u32 %s142, 1
          %s2132 = smul.addr %s2131, 8
          %s2133 = scalar_lea.vmem [#allocation10], %s2132
          %2134 = dma.done %s2130, 128
        $region64: #{tpu_custom_call.1} parent=59 // pred_fallthru
          _
      $region60: #{tpu_custom_call.1} parent=5 // pred_fallthru
        _
    $region6: #{tpu_custom_call.1} parent=1 // loop_footer
      %s22 = sadd.s32 1, %s18
    $region7: #{tpu_custom_call.1} parent=1 // loop_footer_branch
      %17 = sbr.rel target = $region3
    $region8: #{tpu_custom_call.1} parent=1 // loop_exit
      _
    %2135 = vsyncpa [#allocation5], 1
    %s2136 = scalar_lea.sflag [#allocation5], 1
    %2137 = vsyncpa %s2136, 1
    %2138 = vsyncpa [#allocation8], 1
    %2139 = vsyncpa [#allocation6], 1
    %s2140 = scalar_lea.sflag [#allocation6], 1
    %2141 = vsyncpa %s2140, 1

// kernel: tpu_custom_call.1
$region0: #{tpu_custom_call.1}
  #allocation0 [shape = 'u32[]', space=smem, size = 0x4, offset = 0x4, fixed_abs, tag = 'smem constant byte address 0x4 - core index']
  #allocation1 [shape = 'u32[144,128]{1,0:T(1,128)}', space=vmem, size = 0x12000, scoped, tag = 'internal scratch']
  #allocation2 [shape = 'f32[4,512]{1,0:T(4,128)}', space=vmem, size = 0x2000, scoped, tag = 'scratch operand']
  #allocation3 [shape = 'f32[4,512]{1,0:T(4,128)}', space=vmem, size = 0x2000, scoped, tag = 'scratch operand']
  %s0 = inlined_call_operand.hbm [shape: f32[2,4,256], index: 0, kind: input, shape index: {}]
  %s1 = inlined_call_operand.hbm [shape: f32[3,3,4,4], index: 1, kind: input, shape index: {}]
  %s2 = inlined_call_operand.vmem [shape: f32[4,1], index: 2, kind: input, shape index: {}]
  %s3 = inlined_call_operand.hbm [shape: f32[3,3,4,4], index: 3, kind: input, shape index: {}]
  %s4 = inlined_call_operand.vmem [shape: f32[4,1], index: 4, kind: input, shape index: {}]
  %s5 = inlined_call_operand.hbm [shape: f32[2,4,256], index: 5, kind: output, shape index: {}]
  %s6 = sld [smem:[#allocation0]]
  $region65: #{tpu_custom_call.1} parent=0
    _
  %s8 = ssub.s32 1, %s6
  %s9 = scalar_select 0, %s8, %s6
  $region1: #{tpu_custom_call.1} parent=0
    #allocation4 [shape = 'u8[8192]{0}', space=vmem, size = 0x2000, scoped, tag = 'input window, operand 0']
    #allocation5 [shape = 's32[2]{0}', space=sflag, size = 0x8, scoped, tag = 'scoped memory for tpu_custom_call.1']
    #allocation6 [shape = 's32[2]{0}', space=sflag, size = 0x8, scoped, tag = 'scoped memory for tpu_custom_call.1']
    #allocation7 [shape = 'u8[18432]{0}', space=vmem, size = 0x4800, scoped, tag = 'input window, operand 1, single buffered']
    #allocation8 [shape = 's32[1]{0}', space=sflag, size = 0x4, scoped, tag = 'scoped memory for tpu_custom_call.1']
    #allocation9 [shape = 'u8[18432]{0}', space=vmem, size = 0x4800, scoped, tag = 'input window, operand 3, single buffered']
    #allocation10 [shape = 'u8[8192]{0}', space=vmem, size = 0x2000, scoped, tag = 'output window, operand 0']
    %10 = vsyncpa [#allocation5], 0
    %s11 = scalar_lea.sflag [#allocation5], 1
    %12 = vsyncpa %s11, 0
    %13 = vsyncpa [#allocation8], 0
    %14 = vsyncpa [#allocation6], 0
    %s15 = scalar_lea.sflag [#allocation6], 1
    %16 = vsyncpa %s15, 0
    loop: start=0, step=1, limit=4
    $region2: #{tpu_custom_call.1} parent=1 // loop_pre_header
      _
    $region3: #{tpu_custom_call.1} parent=1 // loop_header
      %s18 = sphi 0, %s22
      %p19 = scmp.ge.s32.totalorder %s18, 4
      %s28 = sphi 0, %s30
      %s31 = sphi 0, %s28
      %s32 = sphi 0, %s31
      %s48 = sphi 0, %s32
      %s52 = sphi 0, %s52
      %s54 = sphi 0, %s52
      %s55 = sphi 0, %s54
      %s69 = sphi 0, %s55
      %s73 = sphi 0, %s73
      %s75 = sphi 0, %s73
      %s76 = sphi 0, %s75
      %s90 = sphi 0, %s76
      %s94 = sphi 0, %s94
      %s96 = sphi 0, %s94
      %s97 = sphi 0, %s96
      %s111 = sphi 0, %s97
      %s115 = sphi 0, %s115
      %s117 = sphi 0, %s115
      %s118 = sphi 0, %s117
      %s132 = sphi 0, %s118
      %s138 = sphi 0, %s140
      %s141 = sphi 0, %s138
      %s142 = sphi 0, %s141
      %s158 = sphi 0, %s142
    $region4: #{tpu_custom_call.1} parent=1 // loop_header_branch
      %21 = sbr.rel (%p19) target = $region8
    $region5: #{tpu_custom_call.1} parent=1 // loop_body
      %s23 = ssub.s32 %s18, 1
      %s24 = ssub.s32 %s18, 2
      %s25 = sadd.s32 %s18, 1
      %s26 = ssub.s32 %s18, %s25
      %p27 = scmp.eq.s32.totalorder %s26, 0
      %s29 = sadd.s32 %s28, 1
      %s30 = scalar_select %p27, %s28, %s29
      %p33 = pneg %p27
      %p34 = scmp.eq.s32.totalorder %s18, 1
      %p35 = por %p33, %p34
      %p36 = scmp.ne.s32.totalorder %s28, %s31
      %p37 = scmp.eq.s32.totalorder %s18, 0
      %p38 = por %p36, %p37
      %p39 = scmp.ne.s32.totalorder %s28, %s31
      %p40 = scmp.eq.s32.totalorder %s23, 1
      %p41 = por %p39, %p40
      %p42 = scmp.ne.s32.totalorder %s31, %s32
      %p43 = scmp.eq.s32.totalorder %s23, 0
      %p44 = por %p42, %p43
      %p45 = scmp.ne.s32.totalorder %s31, %s32
      %p46 = scmp.eq.s32.totalorder %s24, 1
      %p47 = por %p45, %p46
      %p49 = scmp.ne.s32.totalorder %s32, %s48
      %p50 = scmp.eq.s32.totalorder %s24, 0
      %p51 = por %p49, %p50
      %s53 = sadd.s32 %s52, 1
      %p56 = scmp.eq.s32.totalorder %s18, 1
      %p57 = scmp.ne.s32.totalorder %s52, %s54
      %p58 = scmp.eq.s32.totalorder %s18, 0
      %p59 = por %p57, %p58
      %p60 = scmp.ne.s32.totalorder %s52, %s54
      %p61 = scmp.eq.s32.totalorder %s23, 1
      %p62 = por %p60, %p61
      %p63 = scmp.ne.s32.totalorder %s54, %s55
      %p64 = scmp.eq.s32.totalorder %s23, 0
      %p65 = por %p63, %p64
      %p66 = scmp.ne.s32.totalorder %s54, %s55
      %p67 = scmp.eq.s32.totalorder %s24, 1
      %p68 = por %p66, %p67
      %p70 = scmp.ne.s32.totalorder %s55, %s69
      %p71 = scmp.eq.s32.totalorder %s24, 0
      %p72 = por %p70, %p71
      %s74 = sadd.s32 %s73, 1
      %p77 = scmp.eq.s32.totalorder %s18, 1
      %p78 = scmp.ne.s32.totalorder %s73, %s75
      %p79 = scmp.eq.s32.totalorder %s18, 0
      %p80 = por %p78, %p79
      %p81 = scmp.ne.s32.totalorder %s73, %s75
      %p82 = scmp.eq.s32.totalorder %s23, 1
      %p83 = por %p81, %p82
      %p84 = scmp.ne.s32.totalorder %s75, %s76
      %p85 = scmp.eq.s32.totalorder %s23, 0
      %p86 = por %p84, %p85
      %p87 = scmp.ne.s32.totalorder %s75, %s76
      %p88 = scmp.eq.s32.totalorder %s24, 1
      %p89 = por %p87, %p88
      %p91 = scmp.ne.s32.totalorder %s76, %s90
      %p92 = scmp.eq.s32.totalorder %s24, 0
      %p93 = por %p91, %p92
      %s95 = sadd.s32 %s94, 1
      %p98 = scmp.eq.s32.totalorder %s18, 1
      %p99 = scmp.ne.s32.totalorder %s94, %s96
      %p100 = scmp.eq.s32.totalorder %s18, 0
      %p101 = por %p99, %p100
      %p102 = scmp.ne.s32.totalorder %s94, %s96
      %p103 = scmp.eq.s32.totalorder %s23, 1
      %p104 = por %p102, %p103
      %p105 = scmp.ne.s32.totalorder %s96, %s97
      %p106 = scmp.eq.s32.totalorder %s23, 0
      %p107 = por %p105, %p106
      %p108 = scmp.ne.s32.totalorder %s96, %s97
      %p109 = scmp.eq.s32.totalorder %s24, 1
      %p110 = por %p108, %p109
      %p112 = scmp.ne.s32.totalorder %s97, %s111
      %p113 = scmp.eq.s32.totalorder %s24, 0
      %p114 = por %p112, %p113
      %s116 = sadd.s32 %s115, 1
      %p119 = scmp.eq.s32.totalorder %s18, 1
      %p120 = scmp.ne.s32.totalorder %s115, %s117
      %p121 = scmp.eq.s32.totalorder %s18, 0
      %p122 = por %p120, %p121
      %p123 = scmp.ne.s32.totalorder %s115, %s117
      %p124 = scmp.eq.s32.totalorder %s23, 1
      %p125 = por %p123, %p124
      %p126 = scmp.ne.s32.totalorder %s117, %s118
      %p127 = scmp.eq.s32.totalorder %s23, 0
      %p128 = por %p126, %p127
      %p129 = scmp.ne.s32.totalorder %s117, %s118
      %p130 = scmp.eq.s32.totalorder %s24, 1
      %p131 = por %p129, %p130
      %p133 = scmp.ne.s32.totalorder %s118, %s132
      %p134 = scmp.eq.s32.totalorder %s24, 0
      %p135 = por %p133, %p134
      %s136 = ssub.s32 %s18, %s25
      %p137 = scmp.eq.s32.totalorder %s136, 0
      %s139 = sadd.s32 %s138, 1
      %s140 = scalar_select %p137, %s138, %s139
      %p143 = pneg %p137
      %p144 = scmp.eq.s32.totalorder %s18, 1
      %p145 = por %p143, %p144
      %p146 = scmp.ne.s32.totalorder %s138, %s141
      %p147 = scmp.eq.s32.totalorder %s18, 0
      %p148 = por %p146, %p147
      %p149 = scmp.ne.s32.totalorder %s138, %s141
      %p150 = scmp.eq.s32.totalorder %s23, 1
      %p151 = por %p149, %p150
      %p152 = scmp.ne.s32.totalorder %s141, %s142
      %p153 = scmp.eq.s32.totalorder %s23, 0
      %p154 = por %p152, %p153
      %p155 = scmp.ne.s32.totalorder %s141, %s142
      %p156 = scmp.eq.s32.totalorder %s24, 1
      %p157 = por %p155, %p156
      %p159 = scmp.ne.s32.totalorder %s142, %s158
      %p160 = scmp.eq.s32.totalorder %s24, 0
      %p161 = por %p159, %p160
      %p162 = scmp.le.s32.totalorder 1, %s18
      %p163 = scmp.lt.s32.totalorder %s18, 3
      %p164 = pnand %p162, %p163
      %p165 = pneg %p164
      // Predicated region
      $region9: #{tpu_custom_call.1} parent=5 // pred_check
        _
      $region10: #{tpu_custom_call.1} parent=5 // pred_check_branch
        %167 = sbr.rel (%p164) target = $region12
      $region11: #{tpu_custom_call.1} parent=5 // pred_region
        %s168 = ssub.s32 %s18, 1
        // Predicated region
        $region13: #{tpu_custom_call.1} parent=11 // pred_check
          %p169 = pneg %p65
        $region14: #{tpu_custom_call.1} parent=11 // pred_check_branch
          %171 = sbr.rel (%p169) target = $region16
        $region15: #{tpu_custom_call.1} parent=11 // pred_region
          %s173 = ssub.s32 576, 576
          %174 = vsyncadd [#allocation8], %s173
          %s175 = sshll.u32 [#allocation7], 4
          %s176 = int_to_ptr.vmem [resolvable:$true] %s175
          %181 = dma.hbm_to_vmem [thread:$0]  %s1, 576, %s176, [#allocation8], 64, 64, 4
        $region16: #{tpu_custom_call.1} parent=11 // pred_fallthru
          _
        // Predicated region
        $region17: #{tpu_custom_call.1} parent=11 // pred_check
          %p182 = pneg %p86
        $region18: #{tpu_custom_call.1} parent=11 // pred_check_branch
          %184 = sbr.rel (%p182) target = $region20
        $region19: #{tpu_custom_call.1} parent=11 // pred_region
          _
        $region20: #{tpu_custom_call.1} parent=11 // pred_fallthru
          _
        // Predicated region
        $region21: #{tpu_custom_call.1} parent=11 // pred_check
          %p185 = pneg %p107
        $region22: #{tpu_custom_call.1} parent=11 // pred_check_branch
          %187 = sbr.rel (%p185) target = $region24
        $region23: #{tpu_custom_call.1} parent=11 // pred_region
          %s189 = ssub.s32 576, 576
          %190 = vsyncadd [#allocation8], %s189
          %s191 = sshll.u32 [#allocation9], 4
          %s192 = int_to_ptr.vmem [resolvable:$true] %s191
          %197 = dma.hbm_to_vmem [thread:$0]  %s3, 576, %s192, [#allocation8], 64, 64, 4
        $region24: #{tpu_custom_call.1} parent=11 // pred_fallthru
          _
        // Predicated region
        $region25: #{tpu_custom_call.1} parent=11 // pred_check
          %p198 = pneg %p128
        $region26: #{tpu_custom_call.1} parent=11 // pred_check_branch
          %200 = sbr.rel (%p198) target = $region28
        $region27: #{tpu_custom_call.1} parent=11 // pred_region
          _
        $region28: #{tpu_custom_call.1} parent=11 // pred_fallthru
          _
      $region12: #{tpu_custom_call.1} parent=5 // pred_fallthru
        _
      %p201 = scmp.lt.s32.totalorder %s18, 2
      // Predicated region
      $region29: #{tpu_custom_call.1} parent=5 // pred_check
        %p202 = pneg %p201
      $region30: #{tpu_custom_call.1} parent=5 // pred_check_branch
        %204 = sbr.rel (%p202) target = $region32
      $region31: #{tpu_custom_call.1} parent=5 // pred_region
        // Predicated region
        $region33: #{tpu_custom_call.1} parent=31 // pred_check
          %p205 = pneg %p38
        $region34: #{tpu_custom_call.1} parent=31 // pred_check_branch
          %207 = sbr.rel (%p205) target = $region36
        $region35: #{tpu_custom_call.1} parent=31 // pred_region
          %s208 = sand.u32 %s28, 1
          %s209 = scalar_lea.sflag [#allocation5], %s208
          %s210 = sand.u32 %s28, 1
          %s211 = smul.addr %s210, 8
          %s212 = scalar_lea.vmem [#allocation4], %s211
          %s214 = ssub.s32 128, 128
          %215 = vsyncadd %s209, %s214
          %s216 = smul.addr %s18, 2
          %s217 = smul.addr %s216, 64
          %s218 = scalar_lea.hbm %s0, %s217
          %s220 = sshll.u32 %s212, 4
          %s221 = int_to_ptr.vmem [resolvable:$true] %s220
          %223 = dma.hbm_to_vmem [thread:$0]  %s218, 128, %s221, %s209
        $region36: #{tpu_custom_call.1} parent=31 // pred_fallthru
          _
      $region32: #{tpu_custom_call.1} parent=5 // pred_fallthru
        _
      %p224 = scmp.le.s32.totalorder 1, %s18
      %p225 = scmp.lt.s32.totalorder %s18, 3
      %p226 = pnand %p224, %p225
      %p227 = pneg %p226
      // Predicated region
      $region37: #{tpu_custom_call.1} parent=5 // pred_check
        _
      $region38: #{tpu_custom_call.1} parent=5 // pred_check_branch
        %229 = sbr.rel (%p226) target = $region40
      $region39: #{tpu_custom_call.1} parent=5 // pred_region
        %s230 = ssub.s32 %s18, 1
        %s231 = sand.u32 %s31, 1
        %s232 = scalar_lea.sflag [#allocation5], %s231
        %s233 = sand.u32 %s31, 1
        %s234 = smul.addr %s233, 8
        %s235 = scalar_lea.vmem [#allocation4], %s234
        // Predicated region
        $region41: #{tpu_custom_call.1} parent=39 // pred_check
          %p236 = pneg %p44
        $region42: #{tpu_custom_call.1} parent=39 // pred_check_branch
          %238 = sbr.rel (%p236) target = $region44
        $region43: #{tpu_custom_call.1} parent=39 // pred_region
          %239 = dma.done %s232, 128
        $region44: #{tpu_custom_call.1} parent=39 // pred_fallthru
          _
        // Predicated region
        $region45: #{tpu_custom_call.1} parent=39 // pred_check
          %p240 = pneg %p65
        $region46: #{tpu_custom_call.1} parent=39 // pred_check_branch
          %242 = sbr.rel (%p240) target = $region48
        $region47: #{tpu_custom_call.1} parent=39 // pred_region
          %243 = dma.done [#allocation8], 576
        $region48: #{tpu_custom_call.1} parent=39 // pred_fallthru
          _
        // Predicated region
        $region49: #{tpu_custom_call.1} parent=39 // pred_check
          %p244 = pneg %p107
        $region50: #{tpu_custom_call.1} parent=39 // pred_check_branch
          %246 = sbr.rel (%p244) target = $region52
        $region51: #{tpu_custom_call.1} parent=39 // pred_region
          %247 = dma.done [#allocation8], 576
        $region52: #{tpu_custom_call.1} parent=39 // pred_fallthru
          _
        %s248 = sand.u32 %s31, 1
        %s249 = scalar_lea.sflag [#allocation5], %s248
        %s250 = sand.u32 %s31, 1
        %s251 = smul.addr %s250, 8
        %s252 = scalar_lea.vmem [#allocation4], %s251
        %p253 = pneg %p44
        %p254 = pneg %p41
        %p255 = pneg %p65
        %p256 = pneg %p62
        %p257 = pneg %p86
        %p258 = pneg %p83
        %p259 = pneg %p107
        %p260 = pneg %p104
        %p261 = pneg %p128
        %p262 = pneg %p125
        %p263 = pneg %p154
        %p264 = pneg %p151
        %s265 = sand.u32 %s141, 1
        %s266 = scalar_lea.sflag [#allocation6], %s265
        %s267 = sand.u32 %s141, 1
        %s268 = smul.addr %s267, 8
        %s269 = scalar_lea.vmem [#allocation10], %s268
        %270 = vst [vmem:[#allocation2] sm:$0xf] 0.0
        %271 = vst [vmem:[#allocation2 + $0xc] sm:$0xf] 0.0
        %272 = vst [vmem:[#allocation3] sm:$0xf] 0.0
        %273 = vst [vmem:[#allocation3 + $0xc] sm:$0xf] 0.0
        %v274 = vld [vmem:[%s235] sm:$0xff]
        %275 = vst [vmem:[#allocation2 + $0x4] sm:$0xff] %v274
        %v276 = vlaneseq
        %v277 = vand.u32 %v276, 127
        %v278 = vadd.s32 %v277, 128
        %vm279 = vcmp.lt.s32.totalorder %v277, 0
        %v280 = vsub.s32 0, %v277
        %v281 = vsel %vm279, %v280, %v277
        %v282 = vshrl.u32 %v281, 4
        %v283 = vand.u32 %v281, 15
        %v284 = vsub.s32 0, %v283
        %v285 = vsel %vm279, %v284, %v283
        %vm286 = vcmp.lt.s32.totalorder %v278, 0
        %v287 = vsub.s32 0, %v278
        %v288 = vsel %vm286, %v287, %v278
        %v289 = vshrl.u32 %v288, 4
        %v290 = vand.u32 %v288, 15
        %v291 = vsub.s32 0, %v290
        %v292 = vsel %vm286, %v291, %v290
        %vm293 = vcmp.ne.s32.totalorder %v285, 0
        %vm294 = vcmp.ne.s32.totalorder %v292, 0
        %vm295 = vcmp.lt.s32.totalorder %v285, 0
        %vm296 = vcmp.lt.s32.totalorder %v292, 0
        %vm297 = vmand %vm295, %vm293
        %vm298 = vmand %vm296, %vm294
        %v299 = vadd.s32 %v285, 16
        %v300 = vadd.s32 %v292, 16
        %v301 = vsel %vm297, %v299, %v285
        %v302 = vsel %vm298, %v300, %v292
        %vm303 = vcmp.ne.s32.totalorder %v301, 0
        %vm304 = vcmp.ne.s32.totalorder %v302, 0
        %vm305 = vcmp.ne.s32.totalorder %v301, 15
        %vm306 = vcmp.ne.s32.totalorder %v302, 15
        %v307 = vld [vmem:[#allocation2] sm:$0xff]
        %v308 = vld [vmem:[#allocation2 + $0x8] sm:$0xf]
        %v309 = vsel %vm303, 1, 0
        %v310 = vsel %vm304, 1, 0
        %vm311 = vcmp.eq.s32.totalorder %v309, 1
        %vm312 = vcmp.eq.s32.totalorder %v310, 1
        %v315 = vcombine.high %v307, %v307
        %316 = vrot.lane.b32.xlu0 %v307, 17
        %v317 = vpop.permute.xlu0 %316
        %318 = vrot.lane.b32.xlu0 %v315, 17
        %v319 = vpop.permute.xlu0 %318
        %320 = vrot.lane.b32.xlu0 %v308, 17
        %v321 = vpop.permute.xlu0 %320
        %vm322 = vcmask 138240
        %v323 = vsel %vm322, %v317, %v319
        %v324 = vsel %vm322, %v319, %v321
        %v327 = vsel %vm311, %v323, 0.0
        %v328 = vsel %vm312, %v324, 0.0
        %v329 = vld [vmem:[#allocation7] sm:$0xf]
        %s330 = scalar_lea.vmem [#allocation7], 4
        %v331 = vld [vmem:[%s330] sm:$0xf]
        %332 = vrot.lane.b32.xlu0 %v307, 16
        %v333 = vpop.permute.xlu0 %332
        %334 = vrot.lane.b32.xlu0 %v315, 16
        %v335 = vpop.permute.xlu0 %334
        %336 = vrot.lane.b32.xlu0 %v308, 16
        %v337 = vpop.permute.xlu0 %336
        %vm338 = vcmask 130048
        %v339 = vsel %vm338, %v333, %v335
        %v340 = vsel %vm338, %v335, %v337
        %vm341 = vcmask 31744
        %v343 = vsel %vm341, %v331, 0
        %vm345 = vcmask 1043456
        %v346 = vsel %vm345, %v339, 0
        %v348 = vsel %vm345, %v340, 0
        %350 = vmatprep.subr.mxu0 %v348
        %351 = vmatpush1.msra.mxu0 %v346
        %352 = vmatprep.subr.mxu0 0.0
        %353 = vmatpush1.msra.mxu0 0.0
        %354 = vmatprep.subr.mxu0 0.0
        %355 = vmatpush1.msra.mxu0 0.0
        %356 = vmatprep.subr.mxu0 0.0
        %357 = vmatpush1.msra.mxu0 0.0
        %358 = vmatprep.subr.mxu0 0.0
        %359 = vmatpush1.msra.mxu0 0.0
        %360 = vmatprep.subr.mxu0 0.0
        %361 = vmatpush1.msra.mxu0 0.0
        %362 = vmatprep.subr.mxu0 0.0
        %363 = vmatpush1.msra.mxu0 0.0
        %364 = vmatprep.subr.mxu0 0.0
        %365 = vmatpush1.msra.mxu0 0.0
        %366 = vmatprep.subr.mxu0 0.0
        %367 = vmatpush1.msra.mxu0 0.0
        %368 = vmatprep.subr.mxu0 0.0
        %369 = vmatpush1.msra.mxu0 0.0
        %370 = vmatprep.subr.mxu0 0.0
        %371 = vmatpush1.msra.mxu0 0.0
        %372 = vmatprep.subr.mxu0 0.0
        %373 = vmatpush1.msra.mxu0 0.0
        %374 = vmatprep.subr.mxu0 0.0
        %375 = vmatpush1.msra.mxu0 0.0
        %376 = vmatprep.subr.mxu0 0.0
        %377 = vmatpush1.msra.mxu0 0.0
        %378 = vmatprep.subr.mxu0 0.0
        %379 = vmatpush1.msra.mxu0 0.0
        %380 = vmatprep.subr.mxu0 0.0
        %381 = vmatpush1.msra.mxu0 0.0
        %382 = vmatprep.subr.mxu0 0.0
        %383 = vmatpush1.msra.mxu0 0.0
        %384 = vmatprep.subr.mxu0 0.0
        %385 = vmatpush1.msra.mxu0 0.0
        %386 = vmatprep.subr.mxu0 0.0
        %387 = vmatpush1.msra.mxu0 0.0
        %388 = vmatprep.subr.mxu0 0.0
        %389 = vmatpush1.msra.mxu0 0.0
        %390 = vmatprep.subr.mxu0 0.0
        %391 = vmatpush1.msra.mxu0 0.0
        %392 = vmatprep.subr.mxu0 0.0
        %393 = vmatpush1.msra.mxu0 0.0
        %394 = vmatprep.subr.mxu0 0.0
        %395 = vmatpush1.msra.mxu0 0.0
        %396 = vmatprep.subr.mxu0 0.0
        %397 = vmatpush1.msra.mxu0 0.0
        %398 = vmatprep.subr.mxu0 0.0
        %399 = vmatpush1.msra.mxu0 0.0
        %400 = vmatprep.subr.mxu0 0.0
        %401 = vmatpush1.msra.mxu0 0.0
        %402 = vmatprep.subr.mxu0 0.0
        %403 = vmatpush1.msra.mxu0 0.0
        %404 = vmatprep.subr.mxu0 0.0
        %405 = vmatpush1.msra.mxu0 0.0
        %406 = vmatprep.subr.mxu0 0.0
        %407 = vmatpush1.msra.mxu0 0.0
        %408 = vmatprep.subr.mxu0 0.0
        %409 = vmatpush1.msra.mxu0 0.0
        %410 = vmatprep.subr.mxu0 0.0
        %411 = vmatpush1.msra.mxu0 0.0
        %412 = vmatprep.subr.mxu0 0.0
        %413 = vmatpush1.msra.mxu0 0.0
        %414 = vmatprep.mubr.f32.mxu0 0.0
        %415 = vmatmul.mubr.f32.gmra.mrb[0].mxu0 %v343
        %v416 = vpop.f32.mrb[0].mxu0
        %v417 = vadd.f32 0.0, %v416
        %v418 = vpop.f32.mrb[0].mxu0
        %v419 = vadd.f32 0.0, %v418
        %420 = vdwg.mxu0
        %v422 = vsel %vm341, %v329, 0
        %v425 = vsel %vm345, %v327, 0
        %v428 = vsel %vm345, %v328, 0
        %430 = vmatprep.subr.mxu0 %v428
        %431 = vmatpush1.msra.mxu0 %v425
        %432 = vmatprep.subr.mxu0 0.0
        %433 = vmatpush1.msra.mxu0 0.0
        %434 = vmatprep.subr.mxu0 0.0
        %435 = vmatpush1.msra.mxu0 0.0
        %436 = vmatprep.subr.mxu0 0.0
        %437 = vmatpush1.msra.mxu0 0.0
        %438 = vmatprep.subr.mxu0 0.0
        %439 = vmatpush1.msra.mxu0 0.0
        %440 = vmatprep.subr.mxu0 0.0
        %441 = vmatpush1.msra.mxu0 0.0
        %442 = vmatprep.subr.mxu0 0.0
        %443 = vmatpush1.msra.mxu0 0.0
        %444 = vmatprep.subr.mxu0 0.0
        %445 = vmatpush1.msra.mxu0 0.0
        %446 = vmatprep.subr.mxu0 0.0
        %447 = vmatpush1.msra.mxu0 0.0
        %448 = vmatprep.subr.mxu0 0.0
        %449 = vmatpush1.msra.mxu0 0.0
        %450 = vmatprep.subr.mxu0 0.0
        %451 = vmatpush1.msra.mxu0 0.0
        %452 = vmatprep.subr.mxu0 0.0
        %453 = vmatpush1.msra.mxu0 0.0
        %454 = vmatprep.subr.mxu0 0.0
        %455 = vmatpush1.msra.mxu0 0.0
        %456 = vmatprep.subr.mxu0 0.0
        %457 = vmatpush1.msra.mxu0 0.0
        %458 = vmatprep.subr.mxu0 0.0
        %459 = vmatpush1.msra.mxu0 0.0
        %460 = vmatprep.subr.mxu0 0.0
        %461 = vmatpush1.msra.mxu0 0.0
        %462 = vmatprep.subr.mxu0 0.0
        %463 = vmatpush1.msra.mxu0 0.0
        %464 = vmatprep.subr.mxu0 0.0
        %465 = vmatpush1.msra.mxu0 0.0
        %466 = vmatprep.subr.mxu0 0.0
        %467 = vmatpush1.msra.mxu0 0.0
        %468 = vmatprep.subr.mxu0 0.0
        %469 = vmatpush1.msra.mxu0 0.0
        %470 = vmatprep.subr.mxu0 0.0
        %471 = vmatpush1.msra.mxu0 0.0
        %472 = vmatprep.subr.mxu0 0.0
        %473 = vmatpush1.msra.mxu0 0.0
        %474 = vmatprep.subr.mxu0 0.0
        %475 = vmatpush1.msra.mxu0 0.0
        %476 = vmatprep.subr.mxu0 0.0
        %477 = vmatpush1.msra.mxu0 0.0
        %478 = vmatprep.subr.mxu0 0.0
        %479 = vmatpush1.msra.mxu0 0.0
        %480 = vmatprep.subr.mxu0 0.0
        %481 = vmatpush1.msra.mxu0 0.0
        %482 = vmatprep.subr.mxu0 0.0
        %483 = vmatpush1.msra.mxu0 0.0
        %484 = vmatprep.subr.mxu0 0.0
        %485 = vmatpush1.msra.mxu0 0.0
        %486 = vmatprep.subr.mxu0 0.0
        %487 = vmatpush1.msra.mxu0 0.0
        %488 = vmatprep.subr.mxu0 0.0
        %489 = vmatpush1.msra.mxu0 0.0
        %490 = vmatprep.subr.mxu0 0.0
        %491 = vmatpush1.msra.mxu0 0.0
        %492 = vmatprep.subr.mxu0 0.0
        %493 = vmatpush1.msra.mxu0 0.0
        %494 = vmatprep.mubr.f32.mxu0 0.0
        %495 = vmatmul.mubr.f32.gmra.mrb[0].mxu0 %v422
        %v496 = vpop.f32.mrb[0].mxu0
        %v497 = vadd.f32 %v417, %v496
        %v498 = vpop.f32.mrb[0].mxu0
        %v499 = vadd.f32 %v419, %v498
        %500 = vdwg.mxu0
        %v501 = vld [vmem:[#allocation2] sm:$0xff]
        %v502 = vld [vmem:[#allocation2 + $0x8] sm:$0xf]
        %v503 = vsel %vm305, 1, 0
        %v504 = vsel %vm306, 1, 0
        %vm505 = vcmp.eq.s32.totalorder %v503, 1
        %vm506 = vcmp.eq.s32.totalorder %v504, 1
        %v509 = vcombine.high %v501, %v501
        %510 = vrot.lane.b32.xlu0 %v501, 15
        %v511 = vpop.permute.xlu0 %510
        %512 = vrot.lane.b32.xlu0 %v509, 15
        %v513 = vpop.permute.xlu0 %512
        %514 = vrot.lane.b32.xlu0 %v502, 15
        %v515 = vpop.permute.xlu0 %514
        %vm516 = vcmask 121856
        %v517 = vsel %vm516, %v511, %v513
        %v518 = vsel %vm516, %v513, %v515
        %v521 = vsel %vm505, %v517, 0.0
        %v522 = vsel %vm506, %v518, 0.0
        %s523 = scalar_lea.vmem [#allocation7], 8
        %v524 = vld [vmem:[%s523] sm:$0xf]
        %v526 = vsel %vm341, %v524, 0
        %v529 = vsel %vm345, %v521, 0
        %v532 = vsel %vm345, %v522, 0
        %534 = vmatprep.subr.mxu0 %v532
        %535 = vmatpush1.msra.mxu0 %v529
        %536 = vmatprep.subr.mxu0 0.0
        %537 = vmatpush1.msra.mxu0 0.0
        %538 = vmatprep.subr.mxu0 0.0
        %539 = vmatpush1.msra.mxu0 0.0
        %540 = vmatprep.subr.mxu0 0.0
        %541 = vmatpush1.msra.mxu0 0.0
        %542 = vmatprep.subr.mxu0 0.0
        %543 = vmatpush1.msra.mxu0 0.0
        %544 = vmatprep.subr.mxu0 0.0
        %545 = vmatpush1.msra.mxu0 0.0
        %546 = vmatprep.subr.mxu0 0.0
        %547 = vmatpush1.msra.mxu0 0.0
        %548 = vmatprep.subr.mxu0 0.0
        %549 = vmatpush1.msra.mxu0 0.0
        %550 = vmatprep.subr.mxu0 0.0
        %551 = vmatpush1.msra.mxu0 0.0
        %552 = vmatprep.subr.mxu0 0.0
        %553 = vmatpush1.msra.mxu0 0.0
        %554 = vmatprep.subr.mxu0 0.0
        %555 = vmatpush1.msra.mxu0 0.0
        %556 = vmatprep.subr.mxu0 0.0
        %557 = vmatpush1.msra.mxu0 0.0
        %558 = vmatprep.subr.mxu0 0.0
        %559 = vmatpush1.msra.mxu0 0.0
        %560 = vmatprep.subr.mxu0 0.0
        %561 = vmatpush1.msra.mxu0 0.0
        %562 = vmatprep.subr.mxu0 0.0
        %563 = vmatpush1.msra.mxu0 0.0
        %564 = vmatprep.subr.mxu0 0.0
        %565 = vmatpush1.msra.mxu0 0.0
        %566 = vmatprep.subr.mxu0 0.0
        %567 = vmatpush1.msra.mxu0 0.0
        %568 = vmatprep.subr.mxu0 0.0
        %569 = vmatpush1.msra.mxu0 0.0
        %570 = vmatprep.subr.mxu0 0.0
        %571 = vmatpush1.msra.mxu0 0.0
        %572 = vmatprep.subr.mxu0 0.0
        %573 = vmatpush1.msra.mxu0 0.0
        %574 = vmatprep.subr.mxu0 0.0
        %575 = vmatpush1.msra.mxu0 0.0
        %576 = vmatprep.subr.mxu0 0.0
        %577 = vmatpush1.msra.mxu0 0.0
        %578 = vmatprep.subr.mxu0 0.0
        %579 = vmatpush1.msra.mxu0 0.0
        %580 = vmatprep.subr.mxu0 0.0
        %581 = vmatpush1.msra.mxu0 0.0
        %582 = vmatprep.subr.mxu0 0.0
        %583 = vmatpush1.msra.mxu0 0.0
        %584 = vmatprep.subr.mxu0 0.0
        %585 = vmatpush1.msra.mxu0 0.0
        %586 = vmatprep.subr.mxu0 0.0
        %587 = vmatpush1.msra.mxu0 0.0
        %588 = vmatprep.subr.mxu0 0.0
        %589 = vmatpush1.msra.mxu0 0.0
        %590 = vmatprep.subr.mxu0 0.0
        %591 = vmatpush1.msra.mxu0 0.0
        %592 = vmatprep.subr.mxu0 0.0
        %593 = vmatpush1.msra.mxu0 0.0
        %594 = vmatprep.subr.mxu0 0.0
        %595 = vmatpush1.msra.mxu0 0.0
        %596 = vmatprep.subr.mxu0 0.0
        %597 = vmatpush1.msra.mxu0 0.0
        %598 = vmatprep.mubr.f32.mxu0 0.0
        %599 = vmatmul.mubr.f32.gmra.mrb[0].mxu0 %v526
        %v600 = vpop.f32.mrb[0].mxu0
        %v601 = vadd.f32 0.0, %v600
        %v602 = vpop.f32.mrb[0].mxu0
        %v603 = vadd.f32 0.0, %v602
        %604 = vdwg.mxu0
        %v605 = vadd.f32 %v497, %v601
        %v606 = vadd.f32 %v499, %v603
        %v607 = vld [vmem:[#allocation2] sm:$0xff]
        %v608 = vld [vmem:[#allocation2 + $0x8] sm:$0xf]
        %v611 = vcombine.high %v607, %v607
        %612 = vrot.lane.b32.xlu0 %v607, 1
        %v613 = vpop.permute.xlu0 %612
        %614 = vrot.lane.b32.xlu0 %v611, 1
        %v615 = vpop.permute.xlu0 %614
        %616 = vrot.lane.b32.xlu0 %v608, 1
        %v617 = vpop.permute.xlu0 %616
        %vm618 = vcmask 7168
        %v619 = vsel %vm618, %v613, %v615
        %v620 = vsel %vm618, %v615, %v617
        %v623 = vsel %vm311, %v619, 0.0
        %v624 = vsel %vm312, %v620, 0.0
        %s625 = scalar_lea.vmem [#allocation7], 12
        %v626 = vld [vmem:[%s625] sm:$0xf]
        %v628 = vsel %vm341, %v626, 0
        %v631 = vsel %vm345, %v623, 0
        %v634 = vsel %vm345, %v624, 0
        %636 = vmatprep.subr.mxu0 %v634
        %637 = vmatpush1.msra.mxu0 %v631
        %638 = vmatprep.subr.mxu0 0.0
        %639 = vmatpush1.msra.mxu0 0.0
        %640 = vmatprep.subr.mxu0 0.0
        %641 = vmatpush1.msra.mxu0 0.0
        %642 = vmatprep.subr.mxu0 0.0
        %643 = vmatpush1.msra.mxu0 0.0
        %644 = vmatprep.subr.mxu0 0.0
        %645 = vmatpush1.msra.mxu0 0.0
        %646 = vmatprep.subr.mxu0 0.0
        %647 = vmatpush1.msra.mxu0 0.0
        %648 = vmatprep.subr.mxu0 0.0
        %649 = vmatpush1.msra.mxu0 0.0
        %650 = vmatprep.subr.mxu0 0.0
        %651 = vmatpush1.msra.mxu0 0.0
        %652 = vmatprep.subr.mxu0 0.0
        %653 = vmatpush1.msra.mxu0 0.0
        %654 = vmatprep.subr.mxu0 0.0
        %655 = vmatpush1.msra.mxu0 0.0
        %656 = vmatprep.subr.mxu0 0.0
        %657 = vmatpush1.msra.mxu0 0.0
        %658 = vmatprep.subr.mxu0 0.0
        %659 = vmatpush1.msra.mxu0 0.0
        %660 = vmatprep.subr.mxu0 0.0
        %661 = vmatpush1.msra.mxu0 0.0
        %662 = vmatprep.subr.mxu0 0.0
        %663 = vmatpush1.msra.mxu0 0.0
        %664 = vmatprep.subr.mxu0 0.0
        %665 = vmatpush1.msra.mxu0 0.0
        %666 = vmatprep.subr.mxu0 0.0
        %667 = vmatpush1.msra.mxu0 0.0
        %668 = vmatprep.subr.mxu0 0.0
        %669 = vmatpush1.msra.mxu0 0.0
        %670 = vmatprep.subr.mxu0 0.0
        %671 = vmatpush1.msra.mxu0 0.0
        %672 = vmatprep.subr.mxu0 0.0
        %673 = vmatpush1.msra.mxu0 0.0
        %674 = vmatprep.subr.mxu0 0.0
        %675 = vmatpush1.msra.mxu0 0.0
        %676 = vmatprep.subr.mxu0 0.0
        %677 = vmatpush1.msra.mxu0 0.0
        %678 = vmatprep.subr.mxu0 0.0
        %679 = vmatpush1.msra.mxu0 0.0
        %680 = vmatprep.subr.mxu0 0.0
        %681 = vmatpush1.msra.mxu0 0.0
        %682 = vmatprep.subr.mxu0 0.0
        %683 = vmatpush1.msra.mxu0 0.0
        %684 = vmatprep.subr.mxu0 0.0
        %685 = vmatpush1.msra.mxu0 0.0
        %686 = vmatprep.subr.mxu0 0.0
        %687 = vmatpush1.msra.mxu0 0.0
        %688 = vmatprep.subr.mxu0 0.0
        %689 = vmatpush1.msra.mxu0 0.0
        %690 = vmatprep.subr.mxu0 0.0
        %691 = vmatpush1.msra.mxu0 0.0
        %692 = vmatprep.subr.mxu0 0.0
        %693 = vmatpush1.msra.mxu0 0.0
        %694 = vmatprep.subr.mxu0 0.0
        %695 = vmatpush1.msra.mxu0 0.0
        %696 = vmatprep.subr.mxu0 0.0
        %697 = vmatpush1.msra.mxu0 0.0
        %698 = vmatprep.subr.mxu0 0.0
        %699 = vmatpush1.msra.mxu0 0.0
        %700 = vmatprep.mubr.f32.mxu0 0.0
        %701 = vmatmul.mubr.f32.gmra.mrb[0].mxu0 %v628
        %v702 = vpop.f32.mrb[0].mxu0
        %v703 = vadd.f32 0.0, %v702
        %v704 = vpop.f32.mrb[0].mxu0
        %v705 = vadd.f32 0.0, %v704
        %706 = vdwg.mxu0
        %v707 = vadd.f32 %v605, %v703
        %v708 = vadd.f32 %v606, %v705
        %v709 = vld [vmem:[#allocation2 + $0x4] sm:$0xff]
        %s710 = scalar_lea.vmem [#allocation7], 16
        %v711 = vld [vmem:[%s710] sm:$0xf]
        %v713 = vcombine.high %v709, %v709
        %v715 = vsel %vm341, %v711, 0
        %v717 = vsel %vm345, %v709, 0
        %v719 = vsel %vm345, %v713, 0
        %721 = vmatprep.subr.mxu0 %v719
        %722 = vmatpush1.msra.mxu0 %v717
        %723 = vmatprep.subr.mxu0 0.0
        %724 = vmatpush1.msra.mxu0 0.0
        %725 = vmatprep.subr.mxu0 0.0
        %726 = vmatpush1.msra.mxu0 0.0
        %727 = vmatprep.subr.mxu0 0.0
        %728 = vmatpush1.msra.mxu0 0.0
        %729 = vmatprep.subr.mxu0 0.0
        %730 = vmatpush1.msra.mxu0 0.0
        %731 = vmatprep.subr.mxu0 0.0
        %732 = vmatpush1.msra.mxu0 0.0
        %733 = vmatprep.subr.mxu0 0.0
        %734 = vmatpush1.msra.mxu0 0.0
        %735 = vmatprep.subr.mxu0 0.0
        %736 = vmatpush1.msra.mxu0 0.0
        %737 = vmatprep.subr.mxu0 0.0
        %738 = vmatpush1.msra.mxu0 0.0
        %739 = vmatprep.subr.mxu0 0.0
        %740 = vmatpush1.msra.mxu0 0.0
        %741 = vmatprep.subr.mxu0 0.0
        %742 = vmatpush1.msra.mxu0 0.0
        %743 = vmatprep.subr.mxu0 0.0
        %744 = vmatpush1.msra.mxu0 0.0
        %745 = vmatprep.subr.mxu0 0.0
        %746 = vmatpush1.msra.mxu0 0.0
        %747 = vmatprep.subr.mxu0 0.0
        %748 = vmatpush1.msra.mxu0 0.0
        %749 = vmatprep.subr.mxu0 0.0
        %750 = vmatpush1.msra.mxu0 0.0
        %751 = vmatprep.subr.mxu0 0.0
        %752 = vmatpush1.msra.mxu0 0.0
        %753 = vmatprep.subr.mxu0 0.0
        %754 = vmatpush1.msra.mxu0 0.0
        %755 = vmatprep.subr.mxu0 0.0
        %756 = vmatpush1.msra.mxu0 0.0
        %757 = vmatprep.subr.mxu0 0.0
        %758 = vmatpush1.msra.mxu0 0.0
        %759 = vmatprep.subr.mxu0 0.0
        %760 = vmatpush1.msra.mxu0 0.0
        %761 = vmatprep.subr.mxu0 0.0
        %762 = vmatpush1.msra.mxu0 0.0
        %763 = vmatprep.subr.mxu0 0.0
        %764 = vmatpush1.msra.mxu0 0.0
        %765 = vmatprep.subr.mxu0 0.0
        %766 = vmatpush1.msra.mxu0 0.0
        %767 = vmatprep.subr.mxu0 0.0
        %768 = vmatpush1.msra.mxu0 0.0
        %769 = vmatprep.subr.mxu0 0.0
        %770 = vmatpush1.msra.mxu0 0.0
        %771 = vmatprep.subr.mxu0 0.0
        %772 = vmatpush1.msra.mxu0 0.0
        %773 = vmatprep.subr.mxu0 0.0
        %774 = vmatpush1.msra.mxu0 0.0
        %775 = vmatprep.subr.mxu0 0.0
        %776 = vmatpush1.msra.mxu0 0.0
        %777 = vmatprep.subr.mxu0 0.0
        %778 = vmatpush1.msra.mxu0 0.0
        %779 = vmatprep.subr.mxu0 0.0
        %780 = vmatpush1.msra.mxu0 0.0
        %781 = vmatprep.subr.mxu0 0.0
        %782 = vmatpush1.msra.mxu0 0.0
        %783 = vmatprep.subr.mxu0 0.0
        %784 = vmatpush1.msra.mxu0 0.0
        %785 = vmatprep.mubr.f32.mxu0 0.0
        %786 = vmatmul.mubr.f32.gmra.mrb[0].mxu0 %v715
        %v787 = vpop.f32.mrb[0].mxu0
        %v788 = vadd.f32 0.0, %v787
        %v789 = vpop.f32.mrb[0].mxu0
        %v790 = vadd.f32 0.0, %v789
        %791 = vdwg.mxu0
        %v792 = vadd.f32 %v707, %v788
        %v793 = vadd.f32 %v708, %v790
        %v794 = vld [vmem:[#allocation2 + $0x4] sm:$0xff]
        %v795 = vld [vmem:[#allocation2 + $0xc] sm:$0xf]
        %v798 = vcombine.high %v794, %v794
        %799 = vrot.lane.b32.xlu0 %v794, 127
        %v800 = vpop.permute.xlu0 %799
        %801 = vrot.lane.b32.xlu0 %v798, 127
        %v802 = vpop.permute.xlu0 %801
        %803 = vrot.lane.b32.xlu0 %v795, 127
        %v804 = vpop.permute.xlu0 %803
        %vm805 = vcmask 1039360
        %v806 = vsel %vm805, %v800, %v802
        %v807 = vsel %vm805, %v802, %v804
        %v810 = vsel %vm505, %v806, 0.0
        %v811 = vsel %vm506, %v807, 0.0
        %s812 = scalar_lea.vmem [#allocation7], 20
        %v813 = vld [vmem:[%s812] sm:$0xf]
        %v815 = vsel %vm341, %v813, 0
        %v818 = vsel %vm345, %v810, 0
        %v821 = vsel %vm345, %v811, 0
        %823 = vmatprep.subr.mxu0 %v821
        %824 = vmatpush1.msra.mxu0 %v818
        %825 = vmatprep.subr.mxu0 0.0
        %826 = vmatpush1.msra.mxu0 0.0
        %827 = vmatprep.subr.mxu0 0.0
        %828 = vmatpush1.msra.mxu0 0.0
        %829 = vmatprep.subr.mxu0 0.0
        %830 = vmatpush1.msra.mxu0 0.0
        %831 = vmatprep.subr.mxu0 0.0
        %832 = vmatpush1.msra.mxu0 0.0
        %833 = vmatprep.subr.mxu0 0.0
        %834 = vmatpush1.msra.mxu0 0.0
        %835 = vmatprep.subr.mxu0 0.0
        %836 = vmatpush1.msra.mxu0 0.0
        %837 = vmatprep.subr.mxu0 0.0
        %838 = vmatpush1.msra.mxu0 0.0
        %839 = vmatprep.subr.mxu0 0.0
        %840 = vmatpush1.msra.mxu0 0.0
        %841 = vmatprep.subr.mxu0 0.0
        %842 = vmatpush1.msra.mxu0 0.0
        %843 = vmatprep.subr.mxu0 0.0
        %844 = vmatpush1.msra.mxu0 0.0
        %845 = vmatprep.subr.mxu0 0.0
        %846 = vmatpush1.msra.mxu0 0.0
        %847 = vmatprep.subr.mxu0 0.0
        %848 = vmatpush1.msra.mxu0 0.0
        %849 = vmatprep.subr.mxu0 0.0
        %850 = vmatpush1.msra.mxu0 0.0
        %851 = vmatprep.subr.mxu0 0.0
        %852 = vmatpush1.msra.mxu0 0.0
        %853 = vmatprep.subr.mxu0 0.0
        %854 = vmatpush1.msra.mxu0 0.0
        %855 = vmatprep.subr.mxu0 0.0
        %856 = vmatpush1.msra.mxu0 0.0
        %857 = vmatprep.subr.mxu0 0.0
        %858 = vmatpush1.msra.mxu0 0.0
        %859 = vmatprep.subr.mxu0 0.0
        %860 = vmatpush1.msra.mxu0 0.0
        %861 = vmatprep.subr.mxu0 0.0
        %862 = vmatpush1.msra.mxu0 0.0
        %863 = vmatprep.subr.mxu0 0.0
        %864 = vmatpush1.msra.mxu0 0.0
        %865 = vmatprep.subr.mxu0 0.0
        %866 = vmatpush1.msra.mxu0 0.0
        %867 = vmatprep.subr.mxu0 0.0
        %868 = vmatpush1.msra.mxu0 0.0
        %869 = vmatprep.subr.mxu0 0.0
        %870 = vmatpush1.msra.mxu0 0.0
        %871 = vmatprep.subr.mxu0 0.0
        %872 = vmatpush1.msra.mxu0 0.0
        %873 = vmatprep.subr.mxu0 0.0
        %874 = vmatpush1.msra.mxu0 0.0
        %875 = vmatprep.subr.mxu0 0.0
        %876 = vmatpush1.msra.mxu0 0.0
        %877 = vmatprep.subr.mxu0 0.0
        %878 = vmatpush1.msra.mxu0 0.0
        %879 = vmatprep.subr.mxu0 0.0
        %880 = vmatpush1.msra.mxu0 0.0
        %881 = vmatprep.subr.mxu0 0.0
        %882 = vmatpush1.msra.mxu0 0.0
        %883 = vmatprep.subr.mxu0 0.0
        %884 = vmatpush1.msra.mxu0 0.0
        %885 = vmatprep.subr.mxu0 0.0
        %886 = vmatpush1.msra.mxu0 0.0
        %887 = vmatprep.mubr.f32.mxu0 0.0
        %888 = vmatmul.mubr.f32.gmra.mrb[0].mxu0 %v815
        %v889 = vpop.f32.mrb[0].mxu0
        %v890 = vadd.f32 0.0, %v889
        %v891 = vpop.f32.mrb[0].mxu0
        %v892 = vadd.f32 0.0, %v891
        %893 = vdwg.mxu0
        %v894 = vadd.f32 %v792, %v890
        %v895 = vadd.f32 %v793, %v892
        %v896 = vld [vmem:[#allocation2 + $0x4] sm:$0xff]
        %v897 = vld [vmem:[#allocation2 + $0xc] sm:$0xf]
        %v900 = vcombine.high %v896, %v896
        %901 = vrot.lane.b32.xlu0 %v896, 113
        %v902 = vpop.permute.xlu0 %901
        %903 = vrot.lane.b32.xlu0 %v900, 113
        %v904 = vpop.permute.xlu0 %903
        %905 = vrot.lane.b32.xlu0 %v897, 113
        %v906 = vpop.permute.xlu0 %905
        %vm907 = vcmask 924672
        %v908 = vsel %vm907, %v902, %v904
        %v909 = vsel %vm907, %v904, %v906
        %v912 = vsel %vm311, %v908, 0.0
        %v913 = vsel %vm312, %v909, 0.0
        %s914 = scalar_lea.vmem [#allocation7], 24
        %v915 = vld [vmem:[%s914] sm:$0xf]
        %v917 = vsel %vm341, %v915, 0
        %v920 = vsel %vm345, %v912, 0
        %v923 = vsel %vm345, %v913, 0
        %925 = vmatprep.subr.mxu0 %v923
        %926 = vmatpush1.msra.mxu0 %v920
        %927 = vmatprep.subr.mxu0 0.0
        %928 = vmatpush1.msra.mxu0 0.0
        %929 = vmatprep.subr.mxu0 0.0
        %930 = vmatpush1.msra.mxu0 0.0
        %931 = vmatprep.subr.mxu0 0.0
        %932 = vmatpush1.msra.mxu0 0.0
        %933 = vmatprep.subr.mxu0 0.0
        %934 = vmatpush1.msra.mxu0 0.0
        %935 = vmatprep.subr.mxu0 0.0
        %936 = vmatpush1.msra.mxu0 0.0
        %937 = vmatprep.subr.mxu0 0.0
        %938 = vmatpush1.msra.mxu0 0.0
        %939 = vmatprep.subr.mxu0 0.0
        %940 = vmatpush1.msra.mxu0 0.0
        %941 = vmatprep.subr.mxu0 0.0
        %942 = vmatpush1.msra.mxu0 0.0
        %943 = vmatprep.subr.mxu0 0.0
        %944 = vmatpush1.msra.mxu0 0.0
        %945 = vmatprep.subr.mxu0 0.0
        %946 = vmatpush1.msra.mxu0 0.0
        %947 = vmatprep.subr.mxu0 0.0
        %948 = vmatpush1.msra.mxu0 0.0
        %949 = vmatprep.subr.mxu0 0.0
        %950 = vmatpush1.msra.mxu0 0.0
        %951 = vmatprep.subr.mxu0 0.0
        %952 = vmatpush1.msra.mxu0 0.0
        %953 = vmatprep.subr.mxu0 0.0
        %954 = vmatpush1.msra.mxu0 0.0
        %955 = vmatprep.subr.mxu0 0.0
        %956 = vmatpush1.msra.mxu0 0.0
        %957 = vmatprep.subr.mxu0 0.0
        %958 = vmatpush1.msra.mxu0 0.0
        %959 = vmatprep.subr.mxu0 0.0
        %960 = vmatpush1.msra.mxu0 0.0
        %961 = vmatprep.subr.mxu0 0.0
        %962 = vmatpush1.msra.mxu0 0.0
        %963 = vmatprep.subr.mxu0 0.0
        %964 = vmatpush1.msra.mxu0 0.0
        %965 = vmatprep.subr.mxu0 0.0
        %966 = vmatpush1.msra.mxu0 0.0
        %967 = vmatprep.subr.mxu0 0.0
        %968 = vmatpush1.msra.mxu0 0.0
        %969 = vmatprep.subr.mxu0 0.0
        %970 = vmatpush1.msra.mxu0 0.0
        %971 = vmatprep.subr.mxu0 0.0
        %972 = vmatpush1.msra.mxu0 0.0
        %973 = vmatprep.subr.mxu0 0.0
        %974 = vmatpush1.msra.mxu0 0.0
        %975 = vmatprep.subr.mxu0 0.0
        %976 = vmatpush1.msra.mxu0 0.0
        %977 = vmatprep.subr.mxu0 0.0
        %978 = vmatpush1.msra.mxu0 0.0
        %979 = vmatprep.subr.mxu0 0.0
        %980 = vmatpush1.msra.mxu0 0.0
        %981 = vmatprep.subr.mxu0 0.0
        %982 = vmatpush1.msra.mxu0 0.0
        %983 = vmatprep.subr.mxu0 0.0
        %984 = vmatpush1.msra.mxu0 0.0
        %985 = vmatprep.subr.mxu0 0.0
        %986 = vmatpush1.msra.mxu0 0.0
        %987 = vmatprep.subr.mxu0 0.0
        %988 = vmatpush1.msra.mxu0 0.0
        %989 = vmatprep.mubr.f32.mxu0 0.0
        %990 = vmatmul.mubr.f32.gmra.mrb[0].mxu0 %v917
        %v991 = vpop.f32.mrb[0].mxu0
        %v992 = vadd.f32 0.0, %v991
        %v993 = vpop.f32.mrb[0].mxu0
        %v994 = vadd.f32 0.0, %v993
        %995 = vdwg.mxu0
        %v996 = vadd.f32 %v894, %v992
        %v997 = vadd.f32 %v895, %v994
        %v998 = vld [vmem:[#allocation2 + $0x4] sm:$0xff]
        %v999 = vld [vmem:[#allocation2 + $0xc] sm:$0xf]
        %s1000 = scalar_lea.vmem [#allocation7], 28
        %v1001 = vld [vmem:[%s1000] sm:$0xf]
        %v1004 = vcombine.high %v998, %v998
        %1005 = vrot.lane.b32.xlu0 %v998, 112
        %v1006 = vpop.permute.xlu0 %1005
        %1007 = vrot.lane.b32.xlu0 %v1004, 112
        %v1008 = vpop.permute.xlu0 %1007
        %1009 = vrot.lane.b32.xlu0 %v999, 112
        %v1010 = vpop.permute.xlu0 %1009
        %vm1011 = vcmask 916480
        %v1012 = vsel %vm1011, %v1006, %v1008
        %v1013 = vsel %vm1011, %v1008, %v1010
        %v1015 = vsel %vm341, %v1001, 0
        %v1017 = vsel %vm345, %v1012, 0
        %v1019 = vsel %vm345, %v1013, 0
        %1021 = vmatprep.subr.mxu0 %v1019
        %1022 = vmatpush1.msra.mxu0 %v1017
        %1023 = vmatprep.subr.mxu0 0.0
        %1024 = vmatpush1.msra.mxu0 0.0
        %1025 = vmatprep.subr.mxu0 0.0
        %1026 = vmatpush1.msra.mxu0 0.0
        %1027 = vmatprep.subr.mxu0 0.0
        %1028 = vmatpush1.msra.mxu0 0.0
        %1029 = vmatprep.subr.mxu0 0.0
        %1030 = vmatpush1.msra.mxu0 0.0
        %1031 = vmatprep.subr.mxu0 0.0
        %1032 = vmatpush1.msra.mxu0 0.0
        %1033 = vmatprep.subr.mxu0 0.0
        %1034 = vmatpush1.msra.mxu0 0.0
        %1035 = vmatprep.subr.mxu0 0.0
        %1036 = vmatpush1.msra.mxu0 0.0
        %1037 = vmatprep.subr.mxu0 0.0
        %1038 = vmatpush1.msra.mxu0 0.0
        %1039 = vmatprep.subr.mxu0 0.0
        %1040 = vmatpush1.msra.mxu0 0.0
        %1041 = vmatprep.subr.mxu0 0.0
        %1042 = vmatpush1.msra.mxu0 0.0
        %1043 = vmatprep.subr.mxu0 0.0
        %1044 = vmatpush1.msra.mxu0 0.0
        %1045 = vmatprep.subr.mxu0 0.0
        %1046 = vmatpush1.msra.mxu0 0.0
        %1047 = vmatprep.subr.mxu0 0.0
        %1048 = vmatpush1.msra.mxu0 0.0
        %1049 = vmatprep.subr.mxu0 0.0
        %1050 = vmatpush1.msra.mxu0 0.0
        %1051 = vmatprep.subr.mxu0 0.0
        %1052 = vmatpush1.msra.mxu0 0.0
        %1053 = vmatprep.subr.mxu0 0.0
        %1054 = vmatpush1.msra.mxu0 0.0
        %1055 = vmatprep.subr.mxu0 0.0
        %1056 = vmatpush1.msra.mxu0 0.0
        %1057 = vmatprep.subr.mxu0 0.0
        %1058 = vmatpush1.msra.mxu0 0.0
        %1059 = vmatprep.subr.mxu0 0.0
        %1060 = vmatpush1.msra.mxu0 0.0
        %1061 = vmatprep.subr.mxu0 0.0
        %1062 = vmatpush1.msra.mxu0 0.0
        %1063 = vmatprep.subr.mxu0 0.0
        %1064 = vmatpush1.msra.mxu0 0.0
        %1065 = vmatprep.subr.mxu0 0.0
        %1066 = vmatpush1.msra.mxu0 0.0
        %1067 = vmatprep.subr.mxu0 0.0
        %1068 = vmatpush1.msra.mxu0 0.0
        %1069 = vmatprep.subr.mxu0 0.0
        %1070 = vmatpush1.msra.mxu0 0.0
        %1071 = vmatprep.subr.mxu0 0.0
        %1072 = vmatpush1.msra.mxu0 0.0
        %1073 = vmatprep.subr.mxu0 0.0
        %1074 = vmatpush1.msra.mxu0 0.0
        %1075 = vmatprep.subr.mxu0 0.0
        %1076 = vmatpush1.msra.mxu0 0.0
        %1077 = vmatprep.subr.mxu0 0.0
        %1078 = vmatpush1.msra.mxu0 0.0
        %1079 = vmatprep.subr.mxu0 0.0
        %1080 = vmatpush1.msra.mxu0 0.0
        %1081 = vmatprep.subr.mxu0 0.0
        %1082 = vmatpush1.msra.mxu0 0.0
        %1083 = vmatprep.subr.mxu0 0.0
        %1084 = vmatpush1.msra.mxu0 0.0
        %1085 = vmatprep.mubr.f32.mxu0 0.0
        %1086 = vmatmul.mubr.f32.gmra.mrb[0].mxu0 %v1015
        %v1087 = vpop.f32.mrb[0].mxu0
        %v1088 = vadd.f32 0.0, %v1087
        %v1089 = vpop.f32.mrb[0].mxu0
        %v1090 = vadd.f32 0.0, %v1089
        %1091 = vdwg.mxu0
        %v1092 = vadd.f32 %v996, %v1088
        %v1093 = vadd.f32 %v997, %v1090
        %v1094 = vld [vmem:[#allocation2 + $0x4] sm:$0xff]
        %v1095 = vld [vmem:[#allocation2 + $0xc] sm:$0xf]
        %v1098 = vcombine.high %v1094, %v1094
        %1099 = vrot.lane.b32.xlu0 %v1094, 111
        %v1100 = vpop.permute.xlu0 %1099
        %1101 = vrot.lane.b32.xlu0 %v1098, 111
        %v1102 = vpop.permute.xlu0 %1101
        %1103 = vrot.lane.b32.xlu0 %v1095, 111
        %v1104 = vpop.permute.xlu0 %1103
        %vm1105 = vcmask 908288
        %v1106 = vsel %vm1105, %v1100, %v1102
        %v1107 = vsel %vm1105, %v1102, %v1104
        %v1110 = vsel %vm505, %v1106, 0.0
        %v1111 = vsel %vm506, %v1107, 0.0
        %s1112 = scalar_lea.vmem [#allocation7], 32
        %v1113 = vld [vmem:[%s1112] sm:$0xf]
        %v1115 = vsel %vm341, %v1113, 0
        %v1118 = vsel %vm345, %v1110, 0
        %v1121 = vsel %vm345, %v1111, 0
        %1123 = vmatprep.subr.mxu0 %v1121
        %1124 = vmatpush1.msra.mxu0 %v1118
        %1125 = vmatprep.subr.mxu0 0.0
        %1126 = vmatpush1.msra.mxu0 0.0
        %1127 = vmatprep.subr.mxu0 0.0
        %1128 = vmatpush1.msra.mxu0 0.0
        %1129 = vmatprep.subr.mxu0 0.0
        %1130 = vmatpush1.msra.mxu0 0.0
        %1131 = vmatprep.subr.mxu0 0.0
        %1132 = vmatpush1.msra.mxu0 0.0
        %1133 = vmatprep.subr.mxu0 0.0
        %1134 = vmatpush1.msra.mxu0 0.0
        %1135 = vmatprep.subr.mxu0 0.0
        %1136 = vmatpush1.msra.mxu0 0.0
        %1137 = vmatprep.subr.mxu0 0.0
        %1138 = vmatpush1.msra.mxu0 0.0
        %1139 = vmatprep.subr.mxu0 0.0
        %1140 = vmatpush1.msra.mxu0 0.0
        %1141 = vmatprep.subr.mxu0 0.0
        %1142 = vmatpush1.msra.mxu0 0.0
        %1143 = vmatprep.subr.mxu0 0.0
        %1144 = vmatpush1.msra.mxu0 0.0
        %1145 = vmatprep.subr.mxu0 0.0
        %1146 = vmatpush1.msra.mxu0 0.0
        %1147 = vmatprep.subr.mxu0 0.0
        %1148 = vmatpush1.msra.mxu0 0.0
        %1149 = vmatprep.subr.mxu0 0.0
        %1150 = vmatpush1.msra.mxu0 0.0
        %1151 = vmatprep.subr.mxu0 0.0
        %1152 = vmatpush1.msra.mxu0 0.0
        %1153 = vmatprep.subr.mxu0 0.0
        %1154 = vmatpush1.msra.mxu0 0.0
        %1155 = vmatprep.subr.mxu0 0.0
        %1156 = vmatpush1.msra.mxu0 0.0
        %1157 = vmatprep.subr.mxu0 0.0
        %1158 = vmatpush1.msra.mxu0 0.0
        %1159 = vmatprep.subr.mxu0 0.0
        %1160 = vmatpush1.msra.mxu0 0.0
        %1161 = vmatprep.subr.mxu0 0.0
        %1162 = vmatpush1.msra.mxu0 0.0
        %1163 = vmatprep.subr.mxu0 0.0
        %1164 = vmatpush1.msra.mxu0 0.0
        %1165 = vmatprep.subr.mxu0 0.0
        %1166 = vmatpush1.msra.mxu0 0.0
        %1167 = vmatprep.subr.mxu0 0.0
        %1168 = vmatpush1.msra.mxu0 0.0
        %1169 = vmatprep.subr.mxu0 0.0
        %1170 = vmatpush1.msra.mxu0 0.0
        %1171 = vmatprep.subr.mxu0 0.0
        %1172 = vmatpush1.msra.mxu0 0.0
        %1173 = vmatprep.subr.mxu0 0.0
        %1174 = vmatpush1.msra.mxu0 0.0
        %1175 = vmatprep.subr.mxu0 0.0
        %1176 = vmatpush1.msra.mxu0 0.0
        %1177 = vmatprep.subr.mxu0 0.0
        %1178 = vmatpush1.msra.mxu0 0.0
        %1179 = vmatprep.subr.mxu0 0.0
        %1180 = vmatpush1.msra.mxu0 0.0
        %1181 = vmatprep.subr.mxu0 0.0
        %1182 = vmatpush1.msra.mxu0 0.0
        %1183 = vmatprep.subr.mxu0 0.0
        %1184 = vmatpush1.msra.mxu0 0.0
        %1185 = vmatprep.subr.mxu0 0.0
        %1186 = vmatpush1.msra.mxu0 0.0
        %1187 = vmatprep.mubr.f32.mxu0 0.0
        %1188 = vmatmul.mubr.f32.gmra.mrb[0].mxu0 %v1115
        %v1189 = vpop.f32.mrb[0].mxu0
        %v1190 = vadd.f32 0.0, %v1189
        %v1191 = vpop.f32.mrb[0].mxu0
        %v1192 = vadd.f32 0.0, %v1191
        %1193 = vdwg.mxu0
        %v1194 = vadd.f32 %v1092, %v1190
        %v1195 = vadd.f32 %v1093, %v1192
        %v1196 = vld [vmem:[%s2] sm:$0xf]
        %1198 = vset.pattern.permute.xlu0 0
        %1199 = vperm.xlu0 %1198, %v1196
        %v1200 = vpop.permute.xlu0 %1199
        %v1202 = vadd.f32 %v1194, %v1200
        %v1203 = vadd.f32 %v1195, %v1200
        %v1204 = vmax.f32 %v1202, 0.0
        %v1205 = vmax.f32 %v1203, 0.0
        %v1208 = vcombine.low %v1204, %v1205
        %1210 = vst [vmem:[#allocation3 + $0x4] sm:$0xff] %v1208
        %v1211 = vld [vmem:[#allocation3] sm:$0xff]
        %v1212 = vld [vmem:[#allocation3 + $0x8] sm:$0xf]
        %v1215 = vcombine.high %v1211, %v1211
        %1216 = vrot.lane.b32.xlu0 %v1211, 17
        %v1217 = vpop.permute.xlu0 %1216
        %1218 = vrot.lane.b32.xlu0 %v1215, 17
        %v1219 = vpop.permute.xlu0 %1218
        %1220 = vrot.lane.b32.xlu0 %v1212, 17
        %v1221 = vpop.permute.xlu0 %1220
        %v1222 = vsel %vm322, %v1217, %v1219
        %v1223 = vsel %vm322, %v1219, %v1221
        %v1226 = vsel %vm311, %v1222, 0.0
        %v1227 = vsel %vm312, %v1223, 0.0
        %v1228 = vld [vmem:[#allocation9] sm:$0xf]
        %s1229 = scalar_lea.vmem [#allocation9], 4
        %v1230 = vld [vmem:[%s1229] sm:$0xf]
        %1231 = vrot.lane.b32.xlu0 %v1211, 16
        %v1232 = vpop.permute.xlu0 %1231
        %1233 = vrot.lane.b32.xlu0 %v1215, 16
        %v1234 = vpop.permute.xlu0 %1233
        %1235 = vrot.lane.b32.xlu0 %v1212, 16
        %v1236 = vpop.permute.xlu0 %1235
        %v1237 = vsel %vm338, %v1232, %v1234
        %v1238 = vsel %vm338, %v1234, %v1236
        %v1240 = vsel %vm341, %v1230, 0
        %v1242 = vsel %vm345, %v1237, 0
        %v1244 = vsel %vm345, %v1238, 0
        %1246 = vmatprep.subr.mxu0 %v1244
        %1247 = vmatpush1.msra.mxu0 %v1242
        %1248 = vmatprep.subr.mxu0 0.0
        %1249 = vmatpush1.msra.mxu0 0.0
        %1250 = vmatprep.subr.mxu0 0.0
        %1251 = vmatpush1.msra.mxu0 0.0
        %1252 = vmatprep.subr.mxu0 0.0
        %1253 = vmatpush1.msra.mxu0 0.0
        %1254 = vmatprep.subr.mxu0 0.0
        %1255 = vmatpush1.msra.mxu0 0.0
        %1256 = vmatprep.subr.mxu0 0.0
        %1257 = vmatpush1.msra.mxu0 0.0
        %1258 = vmatprep.subr.mxu0 0.0
        %1259 = vmatpush1.msra.mxu0 0.0
        %1260 = vmatprep.subr.mxu0 0.0
        %1261 = vmatpush1.msra.mxu0 0.0
        %1262 = vmatprep.subr.mxu0 0.0
        %1263 = vmatpush1.msra.mxu0 0.0
        %1264 = vmatprep.subr.mxu0 0.0
        %1265 = vmatpush1.msra.mxu0 0.0
        %1266 = vmatprep.subr.mxu0 0.0
        %1267 = vmatpush1.msra.mxu0 0.0
        %1268 = vmatprep.subr.mxu0 0.0
        %1269 = vmatpush1.msra.mxu0 0.0
        %1270 = vmatprep.subr.mxu0 0.0
        %1271 = vmatpush1.msra.mxu0 0.0
        %1272 = vmatprep.subr.mxu0 0.0
        %1273 = vmatpush1.msra.mxu0 0.0
        %1274 = vmatprep.subr.mxu0 0.0
        %1275 = vmatpush1.msra.mxu0 0.0
        %1276 = vmatprep.subr.mxu0 0.0
        %1277 = vmatpush1.msra.mxu0 0.0
        %1278 = vmatprep.subr.mxu0 0.0
        %1279 = vmatpush1.msra.mxu0 0.0
        %1280 = vmatprep.subr.mxu0 0.0
        %1281 = vmatpush1.msra.mxu0 0.0
        %1282 = vmatprep.subr.mxu0 0.0
        %1283 = vmatpush1.msra.mxu0 0.0
        %1284 = vmatprep.subr.mxu0 0.0
        %1285 = vmatpush1.msra.mxu0 0.0
        %1286 = vmatprep.subr.mxu0 0.0
        %1287 = vmatpush1.msra.mxu0 0.0
        %1288 = vmatprep.subr.mxu0 0.0
        %1289 = vmatpush1.msra.mxu0 0.0
        %1290 = vmatprep.subr.mxu0 0.0
        %1291 = vmatpush1.msra.mxu0 0.0
        %1292 = vmatprep.subr.mxu0 0.0
        %1293 = vmatpush1.msra.mxu0 0.0
        %1294 = vmatprep.subr.mxu0 0.0
        %1295 = vmatpush1.msra.mxu0 0.0
        %1296 = vmatprep.subr.mxu0 0.0
        %1297 = vmatpush1.msra.mxu0 0.0
        %1298 = vmatprep.subr.mxu0 0.0
        %1299 = vmatpush1.msra.mxu0 0.0
        %1300 = vmatprep.subr.mxu0 0.0
        %1301 = vmatpush1.msra.mxu0 0.0
        %1302 = vmatprep.subr.mxu0 0.0
        %1303 = vmatpush1.msra.mxu0 0.0
        %1304 = vmatprep.subr.mxu0 0.0
        %1305 = vmatpush1.msra.mxu0 0.0
        %1306 = vmatprep.subr.mxu0 0.0
        %1307 = vmatpush1.msra.mxu0 0.0
        %1308 = vmatprep.subr.mxu0 0.0
        %1309 = vmatpush1.msra.mxu0 0.0
        %1310 = vmatprep.mubr.f32.mxu0 0.0
        %1311 = vmatmul.mubr.f32.gmra.mrb[0].mxu0 %v1240
        %v1312 = vpop.f32.mrb[0].mxu0
        %v1313 = vadd.f32 0.0, %v1312
        %v1314 = vpop.f32.mrb[0].mxu0
        %v1315 = vadd.f32 0.0, %v1314
        %1316 = vdwg.mxu0
        %v1318 = vsel %vm341, %v1228, 0
        %v1321 = vsel %vm345, %v1226, 0
        %v1324 = vsel %vm345, %v1227, 0
        %1326 = vmatprep.subr.mxu0 %v1324
        %1327 = vmatpush1.msra.mxu0 %v1321
        %1328 = vmatprep.subr.mxu0 0.0
        %1329 = vmatpush1.msra.mxu0 0.0
        %1330 = vmatprep.subr.mxu0 0.0
        %1331 = vmatpush1.msra.mxu0 0.0
        %1332 = vmatprep.subr.mxu0 0.0
        %1333 = vmatpush1.msra.mxu0 0.0
        %1334 = vmatprep.subr.mxu0 0.0
        %1335 = vmatpush1.msra.mxu0 0.0
        %1336 = vmatprep.subr.mxu0 0.0
        %1337 = vmatpush1.msra.mxu0 0.0
        %1338 = vmatprep.subr.mxu0 0.0
        %1339 = vmatpush1.msra.mxu0 0.0
        %1340 = vmatprep.subr.mxu0 0.0
        %1341 = vmatpush1.msra.mxu0 0.0
        %1342 = vmatprep.subr.mxu0 0.0
        %1343 = vmatpush1.msra.mxu0 0.0
        %1344 = vmatprep.subr.mxu0 0.0
        %1345 = vmatpush1.msra.mxu0 0.0
        %1346 = vmatprep.subr.mxu0 0.0
        %1347 = vmatpush1.msra.mxu0 0.0
        %1348 = vmatprep.subr.mxu0 0.0
        %1349 = vmatpush1.msra.mxu0 0.0
        %1350 = vmatprep.subr.mxu0 0.0
        %1351 = vmatpush1.msra.mxu0 0.0
        %1352 = vmatprep.subr.mxu0 0.0
        %1353 = vmatpush1.msra.mxu0 0.0
        %1354 = vmatprep.subr.mxu0 0.0
        %1355 = vmatpush1.msra.mxu0 0.0
        %1356 = vmatprep.subr.mxu0 0.0
        %1357 = vmatpush1.msra.mxu0 0.0
        %1358 = vmatprep.subr.mxu0 0.0
        %1359 = vmatpush1.msra.mxu0 0.0
        %1360 = vmatprep.subr.mxu0 0.0
        %1361 = vmatpush1.msra.mxu0 0.0
        %1362 = vmatprep.subr.mxu0 0.0
        %1363 = vmatpush1.msra.mxu0 0.0
        %1364 = vmatprep.subr.mxu0 0.0
        %1365 = vmatpush1.msra.mxu0 0.0
        %1366 = vmatprep.subr.mxu0 0.0
        %1367 = vmatpush1.msra.mxu0 0.0
        %1368 = vmatprep.subr.mxu0 0.0
        %1369 = vmatpush1.msra.mxu0 0.0
        %1370 = vmatprep.subr.mxu0 0.0
        %1371 = vmatpush1.msra.mxu0 0.0
        %1372 = vmatprep.subr.mxu0 0.0
        %1373 = vmatpush1.msra.mxu0 0.0
        %1374 = vmatprep.subr.mxu0 0.0
        %1375 = vmatpush1.msra.mxu0 0.0
        %1376 = vmatprep.subr.mxu0 0.0
        %1377 = vmatpush1.msra.mxu0 0.0
        %1378 = vmatprep.subr.mxu0 0.0
        %1379 = vmatpush1.msra.mxu0 0.0
        %1380 = vmatprep.subr.mxu0 0.0
        %1381 = vmatpush1.msra.mxu0 0.0
        %1382 = vmatprep.subr.mxu0 0.0
        %1383 = vmatpush1.msra.mxu0 0.0
        %1384 = vmatprep.subr.mxu0 0.0
        %1385 = vmatpush1.msra.mxu0 0.0
        %1386 = vmatprep.subr.mxu0 0.0
        %1387 = vmatpush1.msra.mxu0 0.0
        %1388 = vmatprep.subr.mxu0 0.0
        %1389 = vmatpush1.msra.mxu0 0.0
        %1390 = vmatprep.mubr.f32.mxu0 0.0
        %1391 = vmatmul.mubr.f32.gmra.mrb[0].mxu0 %v1318
        %v1392 = vpop.f32.mrb[0].mxu0
        %v1393 = vadd.f32 %v1313, %v1392
        %v1394 = vpop.f32.mrb[0].mxu0
        %v1395 = vadd.f32 %v1315, %v1394
        %1396 = vdwg.mxu0
        %v1397 = vld [vmem:[#allocation3] sm:$0xff]
        %v1398 = vld [vmem:[#allocation3 + $0x8] sm:$0xf]
        %v1401 = vcombine.high %v1397, %v1397
        %1402 = vrot.lane.b32.xlu0 %v1397, 15
        %v1403 = vpop.permute.xlu0 %1402
        %1404 = vrot.lane.b32.xlu0 %v1401, 15
        %v1405 = vpop.permute.xlu0 %1404
        %1406 = vrot.lane.b32.xlu0 %v1398, 15
        %v1407 = vpop.permute.xlu0 %1406
        %v1408 = vsel %vm516, %v1403, %v1405
        %v1409 = vsel %vm516, %v1405, %v1407
        %v1412 = vsel %vm505, %v1408, 0.0
        %v1413 = vsel %vm506, %v1409, 0.0
        %s1414 = scalar_lea.vmem [#allocation9], 8
        %v1415 = vld [vmem:[%s1414] sm:$0xf]
        %v1417 = vsel %vm341, %v1415, 0
        %v1420 = vsel %vm345, %v1412, 0
        %v1423 = vsel %vm345, %v1413, 0
        %1425 = vmatprep.subr.mxu0 %v1423
        %1426 = vmatpush1.msra.mxu0 %v1420
        %1427 = vmatprep.subr.mxu0 0.0
        %1428 = vmatpush1.msra.mxu0 0.0
        %1429 = vmatprep.subr.mxu0 0.0
        %1430 = vmatpush1.msra.mxu0 0.0
        %1431 = vmatprep.subr.mxu0 0.0
        %1432 = vmatpush1.msra.mxu0 0.0
        %1433 = vmatprep.subr.mxu0 0.0
        %1434 = vmatpush1.msra.mxu0 0.0
        %1435 = vmatprep.subr.mxu0 0.0
        %1436 = vmatpush1.msra.mxu0 0.0
        %1437 = vmatprep.subr.mxu0 0.0
        %1438 = vmatpush1.msra.mxu0 0.0
        %1439 = vmatprep.subr.mxu0 0.0
        %1440 = vmatpush1.msra.mxu0 0.0
        %1441 = vmatprep.subr.mxu0 0.0
        %1442 = vmatpush1.msra.mxu0 0.0
        %1443 = vmatprep.subr.mxu0 0.0
        %1444 = vmatpush1.msra.mxu0 0.0
        %1445 = vmatprep.subr.mxu0 0.0
        %1446 = vmatpush1.msra.mxu0 0.0
        %1447 = vmatprep.subr.mxu0 0.0
        %1448 = vmatpush1.msra.mxu0 0.0
        %1449 = vmatprep.subr.mxu0 0.0
        %1450 = vmatpush1.msra.mxu0 0.0
        %1451 = vmatprep.subr.mxu0 0.0
        %1452 = vmatpush1.msra.mxu0 0.0
        %1453 = vmatprep.subr.mxu0 0.0
        %1454 = vmatpush1.msra.mxu0 0.0
        %1455 = vmatprep.subr.mxu0 0.0
        %1456 = vmatpush1.msra.mxu0 0.0
        %1457 = vmatprep.subr.mxu0 0.0
        %1458 = vmatpush1.msra.mxu0 0.0
        %1459 = vmatprep.subr.mxu0 0.0
        %1460 = vmatpush1.msra.mxu0 0.0
        %1461 = vmatprep.subr.mxu0 0.0
        %1462 = vmatpush1.msra.mxu0 0.0
        %1463 = vmatprep.subr.mxu0 0.0
        %1464 = vmatpush1.msra.mxu0 0.0
        %1465 = vmatprep.subr.mxu0 0.0
        %1466 = vmatpush1.msra.mxu0 0.0
        %1467 = vmatprep.subr.mxu0 0.0
        %1468 = vmatpush1.msra.mxu0 0.0
        %1469 = vmatprep.subr.mxu0 0.0
        %1470 = vmatpush1.msra.mxu0 0.0
        %1471 = vmatprep.subr.mxu0 0.0
        %1472 = vmatpush1.msra.mxu0 0.0
        %1473 = vmatprep.subr.mxu0 0.0
        %1474 = vmatpush1.msra.mxu0 0.0
        %1475 = vmatprep.subr.mxu0 0.0
        %1476 = vmatpush1.msra.mxu0 0.0
        %1477 = vmatprep.subr.mxu0 0.0
        %1478 = vmatpush1.msra.mxu0 0.0
        %1479 = vmatprep.subr.mxu0 0.0
        %1480 = vmatpush1.msra.mxu0 0.0
        %1481 = vmatprep.subr.mxu0 0.0
        %1482 = vmatpush1.msra.mxu0 0.0
        %1483 = vmatprep.subr.mxu0 0.0
        %1484 = vmatpush1.msra.mxu0 0.0
        %1485 = vmatprep.subr.mxu0 0.0
        %1486 = vmatpush1.msra.mxu0 0.0
        %1487 = vmatprep.subr.mxu0 0.0
        %1488 = vmatpush1.msra.mxu0 0.0
        %1489 = vmatprep.mubr.f32.mxu0 0.0
        %1490 = vmatmul.mubr.f32.gmra.mrb[0].mxu0 %v1417
        %v1491 = vpop.f32.mrb[0].mxu0
        %v1492 = vadd.f32 0.0, %v1491
        %v1493 = vpop.f32.mrb[0].mxu0
        %v1494 = vadd.f32 0.0, %v1493
        %1495 = vdwg.mxu0
        %v1496 = vadd.f32 %v1393, %v1492
        %v1497 = vadd.f32 %v1395, %v1494
        %v1498 = vld [vmem:[#allocation3] sm:$0xff]
        %v1499 = vld [vmem:[#allocation3 + $0x8] sm:$0xf]
        %v1502 = vcombine.high %v1498, %v1498
        %1503 = vrot.lane.b32.xlu0 %v1498, 1
        %v1504 = vpop.permute.xlu0 %1503
        %1505 = vrot.lane.b32.xlu0 %v1502, 1
        %v1506 = vpop.permute.xlu0 %1505
        %1507 = vrot.lane.b32.xlu0 %v1499, 1
        %v1508 = vpop.permute.xlu0 %1507
        %v1509 = vsel %vm618, %v1504, %v1506
        %v1510 = vsel %vm618, %v1506, %v1508
        %v1513 = vsel %vm311, %v1509, 0.0
        %v1514 = vsel %vm312, %v1510, 0.0
        %s1515 = scalar_lea.vmem [#allocation9], 12
        %v1516 = vld [vmem:[%s1515] sm:$0xf]
        %v1518 = vsel %vm341, %v1516, 0
        %v1521 = vsel %vm345, %v1513, 0
        %v1524 = vsel %vm345, %v1514, 0
        %1526 = vmatprep.subr.mxu0 %v1524
        %1527 = vmatpush1.msra.mxu0 %v1521
        %1528 = vmatprep.subr.mxu0 0.0
        %1529 = vmatpush1.msra.mxu0 0.0
        %1530 = vmatprep.subr.mxu0 0.0
        %1531 = vmatpush1.msra.mxu0 0.0
        %1532 = vmatprep.subr.mxu0 0.0
        %1533 = vmatpush1.msra.mxu0 0.0
        %1534 = vmatprep.subr.mxu0 0.0
        %1535 = vmatpush1.msra.mxu0 0.0
        %1536 = vmatprep.subr.mxu0 0.0
        %1537 = vmatpush1.msra.mxu0 0.0
        %1538 = vmatprep.subr.mxu0 0.0
        %1539 = vmatpush1.msra.mxu0 0.0
        %1540 = vmatprep.subr.mxu0 0.0
        %1541 = vmatpush1.msra.mxu0 0.0
        %1542 = vmatprep.subr.mxu0 0.0
        %1543 = vmatpush1.msra.mxu0 0.0
        %1544 = vmatprep.subr.mxu0 0.0
        %1545 = vmatpush1.msra.mxu0 0.0
        %1546 = vmatprep.subr.mxu0 0.0
        %1547 = vmatpush1.msra.mxu0 0.0
        %1548 = vmatprep.subr.mxu0 0.0
        %1549 = vmatpush1.msra.mxu0 0.0
        %1550 = vmatprep.subr.mxu0 0.0
        %1551 = vmatpush1.msra.mxu0 0.0
        %1552 = vmatprep.subr.mxu0 0.0
        %1553 = vmatpush1.msra.mxu0 0.0
        %1554 = vmatprep.subr.mxu0 0.0
        %1555 = vmatpush1.msra.mxu0 0.0
        %1556 = vmatprep.subr.mxu0 0.0
        %1557 = vmatpush1.msra.mxu0 0.0
        %1558 = vmatprep.subr.mxu0 0.0
        %1559 = vmatpush1.msra.mxu0 0.0
        %1560 = vmatprep.subr.mxu0 0.0
        %1561 = vmatpush1.msra.mxu0 0.0
        %1562 = vmatprep.subr.mxu0 0.0
        %1563 = vmatpush1.msra.mxu0 0.0
        %1564 = vmatprep.subr.mxu0 0.0
        %1565 = vmatpush1.msra.mxu0 0.0
        %1566 = vmatprep.subr.mxu0 0.0
        %1567 = vmatpush1.msra.mxu0 0.0
        %1568 = vmatprep.subr.mxu0 0.0
        %1569 = vmatpush1.msra.mxu0 0.0
        %1570 = vmatprep.subr.mxu0 0.0
        %1571 = vmatpush1.msra.mxu0 0.0
        %1572 = vmatprep.subr.mxu0 0.0
        %1573 = vmatpush1.msra.mxu0 0.0
        %1574 = vmatprep.subr.mxu0 0.0
        %1575 = vmatpush1.msra.mxu0 0.0
        %1576 = vmatprep.subr.mxu0 0.0
        %1577 = vmatpush1.msra.mxu0 0.0
        %1578 = vmatprep.subr.mxu0 0.0
        %1579 = vmatpush1.msra.mxu0 0.0
        %1580 = vmatprep.subr.mxu0 0.0
        %1581 = vmatpush1.msra.mxu0 0.0
        %1582 = vmatprep.subr.mxu0 0.0
        %1583 = vmatpush1.msra.mxu0 0.0
        %1584 = vmatprep.subr.mxu0 0.0
        %1585 = vmatpush1.msra.mxu0 0.0
        %1586 = vmatprep.subr.mxu0 0.0
        %1587 = vmatpush1.msra.mxu0 0.0
        %1588 = vmatprep.subr.mxu0 0.0
        %1589 = vmatpush1.msra.mxu0 0.0
        %1590 = vmatprep.mubr.f32.mxu0 0.0
        %1591 = vmatmul.mubr.f32.gmra.mrb[0].mxu0 %v1518
        %v1592 = vpop.f32.mrb[0].mxu0
        %v1593 = vadd.f32 0.0, %v1592
        %v1594 = vpop.f32.mrb[0].mxu0
        %v1595 = vadd.f32 0.0, %v1594
        %1596 = vdwg.mxu0
        %v1597 = vadd.f32 %v1496, %v1593
        %v1598 = vadd.f32 %v1497, %v1595
        %v1599 = vld [vmem:[#allocation3 + $0x4] sm:$0xff]
        %s1600 = scalar_lea.vmem [#allocation9], 16
        %v1601 = vld [vmem:[%s1600] sm:$0xf]
        %v1603 = vcombine.high %v1599, %v1599
        %v1605 = vsel %vm341, %v1601, 0
        %v1607 = vsel %vm345, %v1599, 0
        %v1609 = vsel %vm345, %v1603, 0
        %1611 = vmatprep.subr.mxu0 %v1609
        %1612 = vmatpush1.msra.mxu0 %v1607
        %1613 = vmatprep.subr.mxu0 0.0
        %1614 = vmatpush1.msra.mxu0 0.0
        %1615 = vmatprep.subr.mxu0 0.0
        %1616 = vmatpush1.msra.mxu0 0.0
        %1617 = vmatprep.subr.mxu0 0.0
        %1618 = vmatpush1.msra.mxu0 0.0
        %1619 = vmatprep.subr.mxu0 0.0
        %1620 = vmatpush1.msra.mxu0 0.0
        %1621 = vmatprep.subr.mxu0 0.0
        %1622 = vmatpush1.msra.mxu0 0.0
        %1623 = vmatprep.subr.mxu0 0.0
        %1624 = vmatpush1.msra.mxu0 0.0
        %1625 = vmatprep.subr.mxu0 0.0
        %1626 = vmatpush1.msra.mxu0 0.0
        %1627 = vmatprep.subr.mxu0 0.0
        %1628 = vmatpush1.msra.mxu0 0.0
        %1629 = vmatprep.subr.mxu0 0.0
        %1630 = vmatpush1.msra.mxu0 0.0
        %1631 = vmatprep.subr.mxu0 0.0
        %1632 = vmatpush1.msra.mxu0 0.0
        %1633 = vmatprep.subr.mxu0 0.0
        %1634 = vmatpush1.msra.mxu0 0.0
        %1635 = vmatprep.subr.mxu0 0.0
        %1636 = vmatpush1.msra.mxu0 0.0
        %1637 = vmatprep.subr.mxu0 0.0
        %1638 = vmatpush1.msra.mxu0 0.0
        %1639 = vmatprep.subr.mxu0 0.0
        %1640 = vmatpush1.msra.mxu0 0.0
        %1641 = vmatprep.subr.mxu0 0.0
        %1642 = vmatpush1.msra.mxu0 0.0
        %1643 = vmatprep.subr.mxu0 0.0
        %1644 = vmatpush1.msra.mxu0 0.0
        %1645 = vmatprep.subr.mxu0 0.0
        %1646 = vmatpush1.msra.mxu0 0.0
        %1647 = vmatprep.subr.mxu0 0.0
        %1648 = vmatpush1.msra.mxu0 0.0
        %1649 = vmatprep.subr.mxu0 0.0
        %1650 = vmatpush1.msra.mxu0 0.0
        %1651 = vmatprep.subr.mxu0 0.0
        %1652 = vmatpush1.msra.mxu0 0.0
        %1653 = vmatprep.subr.mxu0 0.0
        %1654 = vmatpush1.msra.mxu0 0.0
        %1655 = vmatprep.subr.mxu0 0.0
        %1656 = vmatpush1.msra.mxu0 0.0
        %1657 = vmatprep.subr.mxu0 0.0
        %1658 = vmatpush1.msra.mxu0 0.0
        %1659 = vmatprep.subr.mxu0 0.0
        %1660 = vmatpush1.msra.mxu0 0.0
        %1661 = vmatprep.subr.mxu0 0.0
        %1662 = vmatpush1.msra.mxu0 0.0
        %1663 = vmatprep.subr.mxu0 0.0
        %1664 = vmatpush1.msra.mxu0 0.0
        %1665 = vmatprep.subr.mxu0 0.0
        %1666 = vmatpush1.msra.mxu0 0.0
        %1667 = vmatprep.subr.mxu0 0.0
        %1668 = vmatpush1.msra.mxu0 0.0
        %1669 = vmatprep.subr.mxu0 0.0
        %1670 = vmatpush1.msra.mxu0 0.0
        %1671 = vmatprep.subr.mxu0 0.0
        %1672 = vmatpush1.msra.mxu0 0.0
        %1673 = vmatprep.subr.mxu0 0.0
        %1674 = vmatpush1.msra.mxu0 0.0
        %1675 = vmatprep.mubr.f32.mxu0 0.0
        %1676 = vmatmul.mubr.f32.gmra.mrb[0].mxu0 %v1605
        %v1677 = vpop.f32.mrb[0].mxu0
        %v1678 = vadd.f32 0.0, %v1677
        %v1679 = vpop.f32.mrb[0].mxu0
        %v1680 = vadd.f32 0.0, %v1679
        %1681 = vdwg.mxu0
        %v1682 = vadd.f32 %v1597, %v1678
        %v1683 = vadd.f32 %v1598, %v1680
        %v1684 = vld [vmem:[#allocation3 + $0x4] sm:$0xff]
        %v1685 = vld [vmem:[#allocation3 + $0xc] sm:$0xf]
        %v1688 = vcombine.high %v1684, %v1684
        %1689 = vrot.lane.b32.xlu0 %v1684, 127
        %v1690 = vpop.permute.xlu0 %1689
        %1691 = vrot.lane.b32.xlu0 %v1688, 127
        %v1692 = vpop.permute.xlu0 %1691
        %1693 = vrot.lane.b32.xlu0 %v1685, 127
        %v1694 = vpop.permute.xlu0 %1693
        %v1695 = vsel %vm805, %v1690, %v1692
        %v1696 = vsel %vm805, %v1692, %v1694
        %v1699 = vsel %vm505, %v1695, 0.0
        %v1700 = vsel %vm506, %v1696, 0.0
        %s1701 = scalar_lea.vmem [#allocation9], 20
        %v1702 = vld [vmem:[%s1701] sm:$0xf]
        %v1704 = vsel %vm341, %v1702, 0
        %v1707 = vsel %vm345, %v1699, 0
        %v1710 = vsel %vm345, %v1700, 0
        %1712 = vmatprep.subr.mxu0 %v1710
        %1713 = vmatpush1.msra.mxu0 %v1707
        %1714 = vmatprep.subr.mxu0 0.0
        %1715 = vmatpush1.msra.mxu0 0.0
        %1716 = vmatprep.subr.mxu0 0.0
        %1717 = vmatpush1.msra.mxu0 0.0
        %1718 = vmatprep.subr.mxu0 0.0
        %1719 = vmatpush1.msra.mxu0 0.0
        %1720 = vmatprep.subr.mxu0 0.0
        %1721 = vmatpush1.msra.mxu0 0.0
        %1722 = vmatprep.subr.mxu0 0.0
        %1723 = vmatpush1.msra.mxu0 0.0
        %1724 = vmatprep.subr.mxu0 0.0
        %1725 = vmatpush1.msra.mxu0 0.0
        %1726 = vmatprep.subr.mxu0 0.0
        %1727 = vmatpush1.msra.mxu0 0.0
        %1728 = vmatprep.subr.mxu0 0.0
        %1729 = vmatpush1.msra.mxu0 0.0
        %1730 = vmatprep.subr.mxu0 0.0
        %1731 = vmatpush1.msra.mxu0 0.0
        %1732 = vmatprep.subr.mxu0 0.0
        %1733 = vmatpush1.msra.mxu0 0.0
        %1734 = vmatprep.subr.mxu0 0.0
        %1735 = vmatpush1.msra.mxu0 0.0
        %1736 = vmatprep.subr.mxu0 0.0
        %1737 = vmatpush1.msra.mxu0 0.0
        %1738 = vmatprep.subr.mxu0 0.0
        %1739 = vmatpush1.msra.mxu0 0.0
        %1740 = vmatprep.subr.mxu0 0.0
        %1741 = vmatpush1.msra.mxu0 0.0
        %1742 = vmatprep.subr.mxu0 0.0
        %1743 = vmatpush1.msra.mxu0 0.0
        %1744 = vmatprep.subr.mxu0 0.0
        %1745 = vmatpush1.msra.mxu0 0.0
        %1746 = vmatprep.subr.mxu0 0.0
        %1747 = vmatpush1.msra.mxu0 0.0
        %1748 = vmatprep.subr.mxu0 0.0
        %1749 = vmatpush1.msra.mxu0 0.0
        %1750 = vmatprep.subr.mxu0 0.0
        %1751 = vmatpush1.msra.mxu0 0.0
        %1752 = vmatprep.subr.mxu0 0.0
        %1753 = vmatpush1.msra.mxu0 0.0
        %1754 = vmatprep.subr.mxu0 0.0
        %1755 = vmatpush1.msra.mxu0 0.0
        %1756 = vmatprep.subr.mxu0 0.0
        %1757 = vmatpush1.msra.mxu0 0.0
        %1758 = vmatprep.subr.mxu0 0.0
        %1759 = vmatpush1.msra.mxu0 0.0
        %1760 = vmatprep.subr.mxu0 0.0
        %1761 = vmatpush1.msra.mxu0 0.0
        %1762 = vmatprep.subr.mxu0 0.0
        %1763 = vmatpush1.msra.mxu0 0.0
        %1764 = vmatprep.subr.mxu0 0.0
        %1765 = vmatpush1.msra.mxu0 0.0
        %1766 = vmatprep.subr.mxu0 0.0
        %1767 = vmatpush1.msra.mxu0 0.0
        %1768 = vmatprep.subr.mxu0 0.0
        %1769 = vmatpush1.msra.mxu0 0.0
        %1770 = vmatprep.subr.mxu0 0.0
        %1771 = vmatpush1.msra.mxu0 0.0
        %1772 = vmatprep.subr.mxu0 0.0
        %1773 = vmatpush1.msra.mxu0 0.0
        %1774 = vmatprep.subr.mxu0 0.0
        %1775 = vmatpush1.msra.mxu0 0.0
        %1776 = vmatprep.mubr.f32.mxu0 0.0
        %1777 = vmatmul.mubr.f32.gmra.mrb[0].mxu0 %v1704
        %v1778 = vpop.f32.mrb[0].mxu0
        %v1779 = vadd.f32 0.0, %v1778
        %v1780 = vpop.f32.mrb[0].mxu0
        %v1781 = vadd.f32 0.0, %v1780
        %1782 = vdwg.mxu0
        %v1783 = vadd.f32 %v1682, %v1779
        %v1784 = vadd.f32 %v1683, %v1781
        %v1785 = vld [vmem:[#allocation3 + $0x4] sm:$0xff]
        %v1786 = vld [vmem:[#allocation3 + $0xc] sm:$0xf]
        %v1789 = vcombine.high %v1785, %v1785
        %1790 = vrot.lane.b32.xlu0 %v1785, 113
        %v1791 = vpop.permute.xlu0 %1790
        %1792 = vrot.lane.b32.xlu0 %v1789, 113
        %v1793 = vpop.permute.xlu0 %1792
        %1794 = vrot.lane.b32.xlu0 %v1786, 113
        %v1795 = vpop.permute.xlu0 %1794
        %v1796 = vsel %vm907, %v1791, %v1793
        %v1797 = vsel %vm907, %v1793, %v1795
        %v1800 = vsel %vm311, %v1796, 0.0
        %v1801 = vsel %vm312, %v1797, 0.0
        %s1802 = scalar_lea.vmem [#allocation9], 24
        %v1803 = vld [vmem:[%s1802] sm:$0xf]
        %v1805 = vsel %vm341, %v1803, 0
        %v1808 = vsel %vm345, %v1800, 0
        %v1811 = vsel %vm345, %v1801, 0
        %1813 = vmatprep.subr.mxu0 %v1811
        %1814 = vmatpush1.msra.mxu0 %v1808
        %1815 = vmatprep.subr.mxu0 0.0
        %1816 = vmatpush1.msra.mxu0 0.0
        %1817 = vmatprep.subr.mxu0 0.0
        %1818 = vmatpush1.msra.mxu0 0.0
        %1819 = vmatprep.subr.mxu0 0.0
        %1820 = vmatpush1.msra.mxu0 0.0
        %1821 = vmatprep.subr.mxu0 0.0
        %1822 = vmatpush1.msra.mxu0 0.0
        %1823 = vmatprep.subr.mxu0 0.0
        %1824 = vmatpush1.msra.mxu0 0.0
        %1825 = vmatprep.subr.mxu0 0.0
        %1826 = vmatpush1.msra.mxu0 0.0
        %1827 = vmatprep.subr.mxu0 0.0
        %1828 = vmatpush1.msra.mxu0 0.0
        %1829 = vmatprep.subr.mxu0 0.0
        %1830 = vmatpush1.msra.mxu0 0.0
        %1831 = vmatprep.subr.mxu0 0.0
        %1832 = vmatpush1.msra.mxu0 0.0
        %1833 = vmatprep.subr.mxu0 0.0
        %1834 = vmatpush1.msra.mxu0 0.0
        %1835 = vmatprep.subr.mxu0 0.0
        %1836 = vmatpush1.msra.mxu0 0.0
        %1837 = vmatprep.subr.mxu0 0.0
        %1838 = vmatpush1.msra.mxu0 0.0
        %1839 = vmatprep.subr.mxu0 0.0
        %1840 = vmatpush1.msra.mxu0 0.0
        %1841 = vmatprep.subr.mxu0 0.0
        %1842 = vmatpush1.msra.mxu0 0.0
        %1843 = vmatprep.subr.mxu0 0.0
        %1844 = vmatpush1.msra.mxu0 0.0
        %1845 = vmatprep.subr.mxu0 0.0
        %1846 = vmatpush1.msra.mxu0 0.0
        %1847 = vmatprep.subr.mxu0 0.0
        %1848 = vmatpush1.msra.mxu0 0.0
        %1849 = vmatprep.subr.mxu0 0.0
        %1850 = vmatpush1.msra.mxu0 0.0
        %1851 = vmatprep.subr.mxu0 0.0
        %1852 = vmatpush1.msra.mxu0 0.0
        %1853 = vmatprep.subr.mxu0 0.0
        %1854 = vmatpush1.msra.mxu0 0.0
        %1855 = vmatprep.subr.mxu0 0.0
        %1856 = vmatpush1.msra.mxu0 0.0
        %1857 = vmatprep.subr.mxu0 0.0
        %1858 = vmatpush1.msra.mxu0 0.0
        %1859 = vmatprep.subr.mxu0 0.0
        %1860 = vmatpush1.msra.mxu0 0.0
        %1861 = vmatprep.subr.mxu0 0.0
        %1862 = vmatpush1.msra.mxu0 0.0
        %1863 = vmatprep.subr.mxu0 0.0
        %1864 = vmatpush1.msra.mxu0 0.0
        %1865 = vmatprep.subr.mxu0 0.0
        %1866 = vmatpush1.msra.mxu0 0.0
        %1867 = vmatprep.subr.mxu0 0.0
        %1868 = vmatpush1.msra.mxu0 0.0
        %1869 = vmatprep.subr.mxu0 0.0
        %1870 = vmatpush1.msra.mxu0 0.0
        %1871 = vmatprep.subr.mxu0 0.0
        %1872 = vmatpush1.msra.mxu0 0.0
        %1873 = vmatprep.subr.mxu0 0.0
        %1874 = vmatpush1.msra.mxu0 0.0
        %1875 = vmatprep.subr.mxu0 0.0
        %1876 = vmatpush1.msra.mxu0 0.0
        %1877 = vmatprep.mubr.f32.mxu0 0.0
        %1878 = vmatmul.mubr.f32.gmra.mrb[0].mxu0 %v1805
        %v1879 = vpop.f32.mrb[0].mxu0
        %v1880 = vadd.f32 0.0, %v1879
        %v1881 = vpop.f32.mrb[0].mxu0
        %v1882 = vadd.f32 0.0, %v1881
        %1883 = vdwg.mxu0
        %v1884 = vadd.f32 %v1783, %v1880
        %v1885 = vadd.f32 %v1784, %v1882
        %v1886 = vld [vmem:[#allocation3 + $0x4] sm:$0xff]
        %v1887 = vld [vmem:[#allocation3 + $0xc] sm:$0xf]
        %s1888 = scalar_lea.vmem [#allocation9], 28
        %v1889 = vld [vmem:[%s1888] sm:$0xf]
        %v1892 = vcombine.high %v1886, %v1886
        %1893 = vrot.lane.b32.xlu0 %v1886, 112
        %v1894 = vpop.permute.xlu0 %1893
        %1895 = vrot.lane.b32.xlu0 %v1892, 112
        %v1896 = vpop.permute.xlu0 %1895
        %1897 = vrot.lane.b32.xlu0 %v1887, 112
        %v1898 = vpop.permute.xlu0 %1897
        %v1899 = vsel %vm1011, %v1894, %v1896
        %v1900 = vsel %vm1011, %v1896, %v1898
        %v1902 = vsel %vm341, %v1889, 0
        %v1904 = vsel %vm345, %v1899, 0
        %v1906 = vsel %vm345, %v1900, 0
        %1908 = vmatprep.subr.mxu0 %v1906
        %1909 = vmatpush1.msra.mxu0 %v1904
        %1910 = vmatprep.subr.mxu0 0.0
        %1911 = vmatpush1.msra.mxu0 0.0
        %1912 = vmatprep.subr.mxu0 0.0
        %1913 = vmatpush1.msra.mxu0 0.0
        %1914 = vmatprep.subr.mxu0 0.0
        %1915 = vmatpush1.msra.mxu0 0.0
        %1916 = vmatprep.subr.mxu0 0.0
        %1917 = vmatpush1.msra.mxu0 0.0
        %1918 = vmatprep.subr.mxu0 0.0
        %1919 = vmatpush1.msra.mxu0 0.0
        %1920 = vmatprep.subr.mxu0 0.0
        %1921 = vmatpush1.msra.mxu0 0.0
        %1922 = vmatprep.subr.mxu0 0.0
        %1923 = vmatpush1.msra.mxu0 0.0
        %1924 = vmatprep.subr.mxu0 0.0
        %1925 = vmatpush1.msra.mxu0 0.0
        %1926 = vmatprep.subr.mxu0 0.0
        %1927 = vmatpush1.msra.mxu0 0.0
        %1928 = vmatprep.subr.mxu0 0.0
        %1929 = vmatpush1.msra.mxu0 0.0
        %1930 = vmatprep.subr.mxu0 0.0
        %1931 = vmatpush1.msra.mxu0 0.0
        %1932 = vmatprep.subr.mxu0 0.0
        %1933 = vmatpush1.msra.mxu0 0.0
        %1934 = vmatprep.subr.mxu0 0.0
        %1935 = vmatpush1.msra.mxu0 0.0
        %1936 = vmatprep.subr.mxu0 0.0
        %1937 = vmatpush1.msra.mxu0 0.0
        %1938 = vmatprep.subr.mxu0 0.0
        %1939 = vmatpush1.msra.mxu0 0.0
        %1940 = vmatprep.subr.mxu0 0.0
        %1941 = vmatpush1.msra.mxu0 0.0
        %1942 = vmatprep.subr.mxu0 0.0
        %1943 = vmatpush1.msra.mxu0 0.0
        %1944 = vmatprep.subr.mxu0 0.0
        %1945 = vmatpush1.msra.mxu0 0.0
        %1946 = vmatprep.subr.mxu0 0.0
        %1947 = vmatpush1.msra.mxu0 0.0
        %1948 = vmatprep.subr.mxu0 0.0
        %1949 = vmatpush1.msra.mxu0 0.0
        %1950 = vmatprep.subr.mxu0 0.0
        %1951 = vmatpush1.msra.mxu0 0.0
        %1952 = vmatprep.subr.mxu0 0.0
        %1953 = vmatpush1.msra.mxu0 0.0
        %1954 = vmatprep.subr.mxu0 0.0
        %1955 = vmatpush1.msra.mxu0 0.0
        %1956 = vmatprep.subr.mxu0 0.0
        %1957 = vmatpush1.msra.mxu0 0.0
        %1958 = vmatprep.subr.mxu0 0.0
        %1959 = vmatpush1.msra.mxu0 0.0
        %1960 = vmatprep.subr.mxu0 0.0
        %1961 = vmatpush1.msra.mxu0 0.0
        %1962 = vmatprep.subr.mxu0 0.0
        %1963 = vmatpush1.msra.mxu0 0.0
        %1964 = vmatprep.subr.mxu0 0.0
        %1965 = vmatpush1.msra.mxu0 0.0
        %1966 = vmatprep.subr.mxu0 0.0
        %1967 = vmatpush1.msra.mxu0 0.0
        %1968 = vmatprep.subr.mxu0 0.0
        %1969 = vmatpush1.msra.mxu0 0.0
        %1970 = vmatprep.subr.mxu0 0.0
        %1971 = vmatpush1.msra.mxu0 0.0
        %1972 = vmatprep.mubr.f32.mxu0 0.0
        %1973 = vmatmul.mubr.f32.gmra.mrb[0].mxu0 %v1902
        %v1974 = vpop.f32.mrb[0].mxu0
        %v1975 = vadd.f32 0.0, %v1974
        %v1976 = vpop.f32.mrb[0].mxu0
        %v1977 = vadd.f32 0.0, %v1976
        %1978 = vdwg.mxu0
        %v1979 = vadd.f32 %v1884, %v1975
        %v1980 = vadd.f32 %v1885, %v1977
        %v1981 = vld [vmem:[#allocation3 + $0x4] sm:$0xff]
        %v1982 = vld [vmem:[#allocation3 + $0xc] sm:$0xf]
        %v1985 = vcombine.high %v1981, %v1981
        %1986 = vrot.lane.b32.xlu0 %v1981, 111
        %v1987 = vpop.permute.xlu0 %1986
        %1988 = vrot.lane.b32.xlu0 %v1985, 111
        %v1989 = vpop.permute.xlu0 %1988
        %1990 = vrot.lane.b32.xlu0 %v1982, 111
        %v1991 = vpop.permute.xlu0 %1990
        %v1992 = vsel %vm1105, %v1987, %v1989
        %v1993 = vsel %vm1105, %v1989, %v1991
        %v1996 = vsel %vm505, %v1992, 0.0
        %v1997 = vsel %vm506, %v1993, 0.0
        %s1998 = scalar_lea.vmem [#allocation9], 32
        %v1999 = vld [vmem:[%s1998] sm:$0xf]
        %v2001 = vsel %vm341, %v1999, 0
        %v2004 = vsel %vm345, %v1996, 0
        %v2007 = vsel %vm345, %v1997, 0
        %2009 = vmatprep.subr.mxu0 %v2007
        %2010 = vmatpush1.msra.mxu0 %v2004
        %2011 = vmatprep.subr.mxu0 0.0
        %2012 = vmatpush1.msra.mxu0 0.0
        %2013 = vmatprep.subr.mxu0 0.0
        %2014 = vmatpush1.msra.mxu0 0.0
        %2015 = vmatprep.subr.mxu0 0.0
        %2016 = vmatpush1.msra.mxu0 0.0
        %2017 = vmatprep.subr.mxu0 0.0
        %2018 = vmatpush1.msra.mxu0 0.0
        %2019 = vmatprep.subr.mxu0 0.0
        %2020 = vmatpush1.msra.mxu0 0.0
        %2021 = vmatprep.subr.mxu0 0.0
        %2022 = vmatpush1.msra.mxu0 0.0
        %2023 = vmatprep.subr.mxu0 0.0
        %2024 = vmatpush1.msra.mxu0 0.0
        %2025 = vmatprep.subr.mxu0 0.0
        %2026 = vmatpush1.msra.mxu0 0.0
        %2027 = vmatprep.subr.mxu0 0.0
        %2028 = vmatpush1.msra.mxu0 0.0
        %2029 = vmatprep.subr.mxu0 0.0
        %2030 = vmatpush1.msra.mxu0 0.0
        %2031 = vmatprep.subr.mxu0 0.0
        %2032 = vmatpush1.msra.mxu0 0.0
        %2033 = vmatprep.subr.mxu0 0.0
        %2034 = vmatpush1.msra.mxu0 0.0
        %2035 = vmatprep.subr.mxu0 0.0
        %2036 = vmatpush1.msra.mxu0 0.0
        %2037 = vmatprep.subr.mxu0 0.0
        %2038 = vmatpush1.msra.mxu0 0.0
        %2039 = vmatprep.subr.mxu0 0.0
        %2040 = vmatpush1.msra.mxu0 0.0
        %2041 = vmatprep.subr.mxu0 0.0
        %2042 = vmatpush1.msra.mxu0 0.0
        %2043 = vmatprep.subr.mxu0 0.0
        %2044 = vmatpush1.msra.mxu0 0.0
        %2045 = vmatprep.subr.mxu0 0.0
        %2046 = vmatpush1.msra.mxu0 0.0
        %2047 = vmatprep.subr.mxu0 0.0
        %2048 = vmatpush1.msra.mxu0 0.0
        %2049 = vmatprep.subr.mxu0 0.0
        %2050 = vmatpush1.msra.mxu0 0.0
        %2051 = vmatprep.subr.mxu0 0.0
        %2052 = vmatpush1.msra.mxu0 0.0
        %2053 = vmatprep.subr.mxu0 0.0
        %2054 = vmatpush1.msra.mxu0 0.0
        %2055 = vmatprep.subr.mxu0 0.0
        %2056 = vmatpush1.msra.mxu0 0.0
        %2057 = vmatprep.subr.mxu0 0.0
        %2058 = vmatpush1.msra.mxu0 0.0
        %2059 = vmatprep.subr.mxu0 0.0
        %2060 = vmatpush1.msra.mxu0 0.0
        %2061 = vmatprep.subr.mxu0 0.0
        %2062 = vmatpush1.msra.mxu0 0.0
        %2063 = vmatprep.subr.mxu0 0.0
        %2064 = vmatpush1.msra.mxu0 0.0
        %2065 = vmatprep.subr.mxu0 0.0
        %2066 = vmatpush1.msra.mxu0 0.0
        %2067 = vmatprep.subr.mxu0 0.0
        %2068 = vmatpush1.msra.mxu0 0.0
        %2069 = vmatprep.subr.mxu0 0.0
        %2070 = vmatpush1.msra.mxu0 0.0
        %2071 = vmatprep.subr.mxu0 0.0
        %2072 = vmatpush1.msra.mxu0 0.0
        %2073 = vmatprep.mubr.f32.mxu0 0.0
        %2074 = vmatmul.mubr.f32.gmra.mrb[0].mxu0 %v2001
        %v2075 = vpop.f32.mrb[0].mxu0
        %v2076 = vadd.f32 0.0, %v2075
        %v2077 = vpop.f32.mrb[0].mxu0
        %v2078 = vadd.f32 0.0, %v2077
        %2079 = vdwg.mxu0
        %v2080 = vadd.f32 %v1979, %v2076
        %v2081 = vadd.f32 %v1980, %v2078
        %v2082 = vld [vmem:[%s4] sm:$0xf]
        %2084 = vset.pattern.permute.xlu0 0
        %2085 = vperm.xlu0 %2084, %v2082
        %v2086 = vpop.permute.xlu0 %2085
        %v2088 = vadd.f32 %v2080, %v2086
        %v2089 = vadd.f32 %v2081, %v2086
        %v2091 = vcombine.high %v274, %v274
        %v2093 = vadd.f32 %v2088, %v274
        %v2094 = vadd.f32 %v2089, %v2091
        %v2095 = vmax.f32 %v2093, 0.0
        %v2096 = vmax.f32 %v2094, 0.0
        %v2099 = vcombine.low %v2095, %v2096
        %2101 = vst [vmem:[%s269] sm:$0xff] %v2099
        %s2102 = sand.u32 %s141, 1
        %s2103 = scalar_lea.sflag [#allocation6], %s2102
        %s2104 = sand.u32 %s141, 1
        %s2105 = smul.addr %s2104, 8
        %s2106 = scalar_lea.vmem [#allocation10], %s2105
        // Predicated region
        $region53: #{tpu_custom_call.1} parent=39 // pred_check
          %p2107 = pneg %p151
        $region54: #{tpu_custom_call.1} parent=39 // pred_check_branch
          %2109 = sbr.rel (%p2107) target = $region56
        $region55: #{tpu_custom_call.1} parent=39 // pred_region
          %s2111 = ssub.s32 128, 128
          %2112 = vsyncadd %s2103, %s2111
          %s2113 = smul.addr %s23, 2
          %s2114 = smul.addr %s2113, 64
          %s2115 = scalar_lea.hbm %s5, %s2114
          %s2117 = sshll.u32 %s2106, 4
          %s2118 = int_to_ptr.vmem [resolvable:$true] %s2117
          %2120 = dma.vmem_to_hbm [thread:$0]  %s2118, 128, %s2115, %s2103
        $region56: #{tpu_custom_call.1} parent=39 // pred_fallthru
          _
      $region40: #{tpu_custom_call.1} parent=5 // pred_fallthru
        _
      %p2121 = scmp.le.s32.totalorder 2, %s18
      // Predicated region
      $region57: #{tpu_custom_call.1} parent=5 // pred_check
        %p2122 = pneg %p2121
      $region58: #{tpu_custom_call.1} parent=5 // pred_check_branch
        %2124 = sbr.rel (%p2122) target = $region60
      $region59: #{tpu_custom_call.1} parent=5 // pred_region
        %s2125 = ssub.s32 %s18, 2
        // Predicated region
        $region61: #{tpu_custom_call.1} parent=59 // pred_check
          %p2126 = pneg %p157
        $region62: #{tpu_custom_call.1} parent=59 // pred_check_branch
          %2128 = sbr.rel (%p2126) target = $region64
        $region63: #{tpu_custom_call.1} parent=59 // pred_region
          %s2129 = sand.u32 %s142, 1
          %s2130 = scalar_lea.sflag [#allocation6], %s2129
          %s2131 = sand.u32 %s142, 1
          %s2132 = smul.addr %s2131, 8
          %s2133 = scalar_lea.vmem [#allocation10], %s2132
          %2134 = dma.done %s2130, 128
        $region64: #{tpu_custom_call.1} parent=59 // pred_fallthru
          _
      $region60: #{tpu_custom_call.1} parent=5 // pred_fallthru
        _
    $region6: #{tpu_custom_call.1} parent=1 // loop_footer
      %s22 = sadd.s32 1, %s18
    $region7: #{tpu_custom_call.1} parent=1 // loop_footer_branch
      %17 = sbr.rel target = $region3
    $region8: #{tpu_custom_call.1} parent=1 // loop_exit
      _
    %2135 = vsyncpa [#allocation5], 1
    %s2136 = scalar_lea.sflag [#allocation5], 1
    %2137 = vsyncpa %s2136, 1
    %2138 = vsyncpa [#allocation8], 1
    %2139 = vsyncpa [#allocation6], 1
    %s2140 = scalar_lea.sflag [#allocation6], 1
    %2141 = vsyncpa %s2140, 1

</llo_original>
